<compile_context>
chip_gen: v7x
topology: tpu7x:2x2x1
jax: 0.10.0
libtpu: 0.0.40
codegen_flags: <defaults>
</compile_context>

<pallas_src>
import jax
import jax.numpy as jnp
from jax import lax
from jax.experimental import pallas as pl
from jax.experimental.pallas import tpu as pltpu


# ------------------------------ fused kernel -------------------------------- #

def _lenet_kernel(x_ref, g1_ref, b1_ref, sela_ref, selb_ref, selra_ref,
                  selrb_ref, g2_ref, b2_ref, w1p_ref, fc1b_ref, fc2w_ref,
                  fc2b_ref, fc3w_ref, fc3b_ref, o_ref):
    f32 = jnp.float32
    x = x_ref[...]                                              # (28, 28)

    # conv1 (1->6, 5x5, valid) as 5 banded matmuls; a1[oh, co*24 + ow].
    acc1 = jnp.zeros((24, 144), f32)
    for kh in range(5):
        acc1 = acc1 + jnp.dot(x[kh:kh + 24, :], g1_ref[kh],
                              preferred_element_type=f32)
    a1 = jnp.maximum(acc1 + b1_ref[...], 0.0)                   # (24, 144)

    # 2x2 / stride-2 max-pool: element-wise maxima + 0/1 selection matmuls.
    ca = jnp.dot(a1, sela_ref[...], preferred_element_type=f32)   # (24, 72)
    cb = jnp.dot(a1, selb_ref[...], preferred_element_type=f32)   # (24, 72)
    cm = jnp.maximum(ca, cb)
    ra = jnp.dot(selra_ref[...], cm, preferred_element_type=f32)  # (12, 72)
    rb = jnp.dot(selrb_ref[...], cm, preferred_element_type=f32)  # (12, 72)
    pall = jnp.maximum(ra, rb)                                  # pall[ph, ci*12 + pw]

    # conv2 (6->16, 5x5, valid) as 5 banded matmuls; a2[oh, co*8 + ow].
    acc2 = jnp.zeros((8, 128), f32)
    for kh in range(5):
        acc2 = acc2 + jnp.dot(pall[kh:kh + 8, :], g2_ref[kh],
                              preferred_element_type=f32)
    a2 = jnp.maximum(acc2 + b2_ref[...], 0.0)                   # (8, 128)

    # fc1: 1024-wide contraction split into 8 K=128 chunks (the NCHW flatten
    # is folded into the host-side permutation of fc1's weights).
    h = jnp.zeros((1, 120), f32)
    for oh in range(8):
        h = h + jnp.dot(a2[oh:oh + 1, :], w1p_ref[oh],
                        preferred_element_type=f32)
    h = jnp.maximum(h + fc1b_ref[...], 0.0)                     # (1, 120)
    h = jnp.maximum(jnp.dot(h, fc2w_ref[...], preferred_element_type=f32)
                    + fc2b_ref[...], 0.0)                       # (1, 84)
    o_ref[...] = (jnp.dot(h, fc3w_ref[...], preferred_element_type=f32)
                  + fc3b_ref[...])                              # (1, num_classes)


# -------------------- host-side one-time weight repacking ------------------- #

def pack_params(p):
    """Repack torch-layout params into kernel operands (done once, off the hot path)."""
    f32 = jnp.float32

    # conv1 -> banded weights g1[kh, w, co*24 + ow] = w1[co, 0, kh, w - ow].
    w1 = p["conv1_w"].astype(f32)[:, 0]                          # (6, 5, 5)
    wi = jnp.arange(28)[:, None]
    ji = jnp.arange(24)[None, :]
    kw = wi - ji
    valid = ((kw >= 0) & (kw < 5)).astype(f32)                   # (28, 24)
    g1 = w1[:, :, jnp.clip(kw, 0, 4)] * valid[None, None]        # (6, 5, 28, 24)
    g1 = jnp.transpose(g1, (1, 2, 0, 3)).reshape(5, 28, 6 * 24)  # (5, 28, 144)
    b1row = jnp.repeat(p["conv1_b"].astype(f32), 24)[None, :]    # (1, 144)

    # 2x2 max-pool 0/1 selectors.
    m = jnp.arange(72)
    col_even = 24 * (m // 12) + 2 * (m % 12)
    cols = jnp.arange(144)[:, None]
    sela = (cols == col_even[None, :]).astype(f32)               # (144, 72)
    selb = (cols == (col_even + 1)[None, :]).astype(f32)         # (144, 72)
    r = jnp.arange(12)[:, None]
    rows = jnp.arange(24)[None, :]
    selra = (rows == 2 * r).astype(f32)                          # (12, 24)
    selrb = (rows == 2 * r + 1).astype(f32)                      # (12, 24)

    # conv2 -> banded weights g2[kh, ci*12 + w, co*8 + ow] = w2[co, ci, kh, w - ow].
    w2 = p["conv2_w"].astype(f32)                                # (16, 6, 5, 5)
    wi2 = jnp.arange(12)[:, None]
    ji2 = jnp.arange(8)[None, :]
    kw2 = wi2 - ji2
    valid2 = ((kw2 >= 0) & (kw2 < 5)).astype(f32)                # (12, 8)
    g2 = w2[:, :, :, jnp.clip(kw2, 0, 4)] * valid2[None, None, None]
    g2 = jnp.transpose(g2, (2, 1, 3, 0, 4)).reshape(5, 6 * 12, 16 * 8)  # (5, 72, 128)
    b2row = jnp.repeat(p["conv2_b"].astype(f32), 8)[None, :]     # (1, 128)

    # fc1 weights permuted so torch's NCHW flatten (c*64 + oh*8 + ow) matches
    # the kernel's (oh, co*8 + ow) activation layout.
    w1p = p["fc1_w"].astype(f32).reshape(120, 16, 8, 8)
    w1p = jnp.transpose(w1p, (2, 1, 3, 0)).reshape(8, 128, 120)  # (8, 128, 120)

    return dict(
        g1=g1, b1row=b1row, sela=sela, selb=selb, selra=selra, selrb=selrb,
        g2=g2, b2row=b2row, w1p=w1p,
        fc1_b=p["fc1_b"].astype(f32)[None, :],
        fc2_w=p["fc2_w"].astype(f32).T, fc2_b=p["fc2_b"].astype(f32)[None, :],
        fc3_w=p["fc3_w"].astype(f32).T, fc3_b=p["fc3_b"].astype(f32)[None, :],
    )


# --------------------------------- forward ---------------------------------- #

def target_net_forward(x, fp):
    """x: (N, 1, 28, 28) float32, fp: pack_params(...) output -> logits (N, num_classes)."""
    N = x.shape[0]
    nc = fp["fc3_b"].shape[-1]
    x3 = x.reshape(N, 28, 28).astype(jnp.float32)

    const2 = lambda n: (0, 0)
    const3 = lambda n: (0, 0, 0)
    grid_spec = pltpu.PrefetchScalarGridSpec(
        num_scalar_prefetch=0,
        grid=(N,),
        in_specs=[
            pl.BlockSpec((None, 28, 28), lambda n: (n, 0, 0)),   # image tile
            pl.BlockSpec((5, 28, 144), const3),                  # g1 (conv1 banded)
            pl.BlockSpec((1, 144), const2),                      # conv1 bias row
            pl.BlockSpec((144, 72), const2),                     # pool col selector (even)
            pl.BlockSpec((144, 72), const2),                     # pool col selector (odd)
            pl.BlockSpec((12, 24), const2),                      # pool row selector (even)
            pl.BlockSpec((12, 24), const2),                      # pool row selector (odd)
            pl.BlockSpec((5, 72, 128), const3),                  # g2 (conv2 banded)
            pl.BlockSpec((1, 128), const2),                      # conv2 bias row
            pl.BlockSpec((8, 128, 120), const3),                 # fc1 weights (permuted)
            pl.BlockSpec((1, 120), const2),                      # fc1 bias
            pl.BlockSpec((120, 84), const2),                     # fc2 weights
            pl.BlockSpec((1, 84), const2),                       # fc2 bias
            pl.BlockSpec((84, nc), const2),                      # fc3 weights
            pl.BlockSpec((1, nc), const2),                       # fc3 bias
        ],
        out_specs=pl.BlockSpec((None, 1, nc), lambda n: (n, 0, 0)),
    )
    out = pl.pallas_call(
        _lenet_kernel,
        out_shape=jax.ShapeDtypeStruct((N, 1, nc), jnp.float32),
        grid_spec=grid_spec,
        compiler_params=pltpu.CompilerParams(
            dimension_semantics=("parallel",)),
    )(x3, fp["g1"], fp["b1row"], fp["sela"], fp["selb"], fp["selra"],
      fp["selrb"], fp["g2"], fp["b2row"], fp["w1p"], fp["fc1_b"],
      fp["fc2_w"], fp["fc2_b"], fp["fc3_w"], fp["fc3_b"])
    return out.reshape(N, nc)


# --------------------------- parameter creation ----------------------------- #

def _uniform(key, shape, bound):
    return jax.random.uniform(key, shape, jnp.float32, minval=-bound, maxval=bound)


def init_params(key, num_classes=10):
    """Deterministic init mirroring torch defaults: U(-1/sqrt(fan_in), +1/sqrt(fan_in))."""
    ks = jax.random.split(key, 10)
    p = {}
    p["conv1_w"] = _uniform(ks[0], (6, 1, 5, 5), 1.0 / (1 * 25) ** 0.5)
    p["conv1_b"] = _uniform(ks[1], (6,), 1.0 / (1 * 25) ** 0.5)
    p["conv2_w"] = _uniform(ks[2], (16, 6, 5, 5), 1.0 / (6 * 25) ** 0.5)
    p["conv2_b"] = _uniform(ks[3], (16,), 1.0 / (6 * 25) ** 0.5)
    p["fc1_w"] = _uniform(ks[4], (120, 16 * 8 * 8), 1.0 / (16 * 8 * 8) ** 0.5)
    p["fc1_b"] = _uniform(ks[5], (120,), 1.0 / (16 * 8 * 8) ** 0.5)
    p["fc2_w"] = _uniform(ks[6], (84, 120), 1.0 / 120 ** 0.5)
    p["fc2_b"] = _uniform(ks[7], (84,), 1.0 / 120 ** 0.5)
    p["fc3_w"] = _uniform(ks[8], (num_classes, 84), 1.0 / 84 ** 0.5)
    p["fc3_b"] = _uniform(ks[9], (num_classes,), 1.0 / 84 ** 0.5)
    return p


# ------------------------------ reference ----------------------------------- #

def reference_forward(x, p):
    dn = ("NCHW", "OIHW", "NCHW")
    h = lax.conv_general_dilated(x, p["conv1_w"], (1, 1), "VALID", dimension_numbers=dn)
    h = jnp.maximum(h + p["conv1_b"][None, :, None, None], 0.0)
    N = h.shape[0]
    h = h.reshape(N, 6, 12, 2, 12, 2).max(axis=(3, 5))
    h = lax.conv_general_dilated(h, p["conv2_w"], (1, 1), "VALID", dimension_numbers=dn)
    h = jnp.maximum(h + p["conv2_b"][None, :, None, None], 0.0)
    h = h.reshape(N, 16 * 8 * 8)
    h = jnp.maximum(h @ p["fc1_w"].T + p["fc1_b"], 0.0)
    h = jnp.maximum(h @ p["fc2_w"].T + p["fc2_b"], 0.0)
    return h @ p["fc3_w"].T + p["fc3_b"]


# --------------------------------- main ------------------------------------- #

if __name__ == "__main__":
    key = jax.random.PRNGKey(0)
    k_x, k_p = jax.random.split(key)
    x = jax.random.normal(k_x, (2, 1, 28, 28), dtype=jnp.float32)
    params = init_params(k_p, num_classes=10)
    packed = pack_params(params)    # one-time host-side weight repack

    out = jax.block_until_ready(jax.jit(target_net_forward)(x, packed))
    assert out.shape == (2, 10) and out.dtype == jnp.float32

    ref = jax.block_until_ready(jax.jit(reference_forward)(x, params))
    assert jnp.allclose(out, ref, atol=1e-4, rtol=1e-4), "Pallas output mismatch vs JAX reference"

    print("KERNEL_OK")
</pallas_src>

<mosaic_0001>
module attributes {stable_mosaic.version = 11 : i64} {
  func.func @_lenet_kernel(%arg0: i32, %arg1: memref<1x28x28xf32, #tpu.memory_space<vmem>>, %arg2: memref<5x28x144xf32, #tpu.memory_space<vmem>>, %arg3: memref<1x144xf32, #tpu.memory_space<vmem>>, %arg4: memref<144x72xf32, #tpu.memory_space<vmem>>, %arg5: memref<144x72xf32, #tpu.memory_space<vmem>>, %arg6: memref<12x24xf32, #tpu.memory_space<vmem>>, %arg7: memref<12x24xf32, #tpu.memory_space<vmem>>, %arg8: memref<5x72x128xf32, #tpu.memory_space<vmem>>, %arg9: memref<1x128xf32, #tpu.memory_space<vmem>>, %arg10: memref<8x128x120xf32, #tpu.memory_space<vmem>>, %arg11: memref<1x120xf32, #tpu.memory_space<vmem>>, %arg12: memref<120x84xf32, #tpu.memory_space<vmem>>, %arg13: memref<1x84xf32, #tpu.memory_space<vmem>>, %arg14: memref<84x10xf32, #tpu.memory_space<vmem>>, %arg15: memref<1x10xf32, #tpu.memory_space<vmem>>, %arg16: memref<1x1x10xf32, #tpu.memory_space<vmem>>) attributes {dimension_semantics = [#tpu.dimension_semantics<parallel>], iteration_bounds = array<i64: 2>, scalar_prefetch = 0 : i64, scratch_operands = 0 : i64, tpu.core_type = #tpu.core_type<tc>, window_params = [{transform_indices = @transform_0, window_bounds = array<i64: 1, 28, 28>}, {pipeline_mode = #tpu.pipeline_mode<synchronous>, transform_indices = @transform_1, window_bounds = array<i64: 5, 28, 144>}, {pipeline_mode = #tpu.pipeline_mode<synchronous>, transform_indices = @transform_2, window_bounds = array<i64: 1, 144>}, {pipeline_mode = #tpu.pipeline_mode<synchronous>, transform_indices = @transform_3, window_bounds = array<i64: 144, 72>}, {pipeline_mode = #tpu.pipeline_mode<synchronous>, transform_indices = @transform_4, window_bounds = array<i64: 144, 72>}, {pipeline_mode = #tpu.pipeline_mode<synchronous>, transform_indices = @transform_5, window_bounds = array<i64: 12, 24>}, {pipeline_mode = #tpu.pipeline_mode<synchronous>, transform_indices = @transform_6, window_bounds = array<i64: 12, 24>}, {pipeline_mode = #tpu.pipeline_mode<synchronous>, transform_indices = @transform_7, window_bounds = array<i64: 5, 72, 128>}, {pipeline_mode = #tpu.pipeline_mode<synchronous>, transform_indices = @transform_8, window_bounds = array<i64: 1, 128>}, {pipeline_mode = #tpu.pipeline_mode<synchronous>, transform_indices = @transform_9, window_bounds = array<i64: 8, 128, 120>}, {pipeline_mode = #tpu.pipeline_mode<synchronous>, transform_indices = @transform_10, window_bounds = array<i64: 1, 120>}, {pipeline_mode = #tpu.pipeline_mode<synchronous>, transform_indices = @transform_11, window_bounds = array<i64: 120, 84>}, {pipeline_mode = #tpu.pipeline_mode<synchronous>, transform_indices = @transform_12, window_bounds = array<i64: 1, 84>}, {pipeline_mode = #tpu.pipeline_mode<synchronous>, transform_indices = @transform_13, window_bounds = array<i64: 84, 10>}, {pipeline_mode = #tpu.pipeline_mode<synchronous>, transform_indices = @transform_14, window_bounds = array<i64: 1, 10>}, {transform_indices = @transform_15, window_bounds = array<i64: 1, 1, 10>}]} {
    %c0 = arith.constant 0 : index
    %c0_0 = arith.constant 0 : index
    %c0_1 = arith.constant 0 : index
    %0 = vector.load %arg1[%c0, %c0_0, %c0_1] : memref<1x28x28xf32, #tpu.memory_space<vmem>>, vector<1x28x28xf32>
    %1 = vector.shape_cast %0 : vector<1x28x28xf32> to vector<28x28xf32>
    %cst = arith.constant 0.000000e+00 : f32
    %2 = vector.broadcast %cst : f32 to vector<24x144xf32>
    %3 = vector.extract_strided_slice %1 {offsets = [0, 0], sizes = [24, 28], strides = [1, 1]} : vector<28x28xf32> to vector<24x28xf32>
    %c0_2 = arith.constant 0 : index
    %c0_3 = arith.constant 0 : index
    %c0_4 = arith.constant 0 : index
    %4 = vector.load %arg2[%c0_2, %c0_3, %c0_4] : memref<5x28x144xf32, #tpu.memory_space<vmem>>, vector<1x28x144xf32>
    %5 = vector.shape_cast %4 : vector<1x28x144xf32> to vector<28x144xf32>
    %cst_5 = arith.constant dense<0.000000e+00> : vector<24x144xf32>
    %6 = tpu.matmul %3, %5, %cst_5 {dimension_numbers = #tpu.dot_dimension_numbers<[1], [0], [0], [1], [0, 0, 1, 1], [], []>} : vector<24x28xf32>, vector<28x144xf32>, vector<24x144xf32> -> vector<24x144xf32>
    %7 = arith.addf %2, %6 : vector<24x144xf32>
    %8 = vector.extract_strided_slice %1 {offsets = [1, 0], sizes = [24, 28], strides = [1, 1]} : vector<28x28xf32> to vector<24x28xf32>
    %c1 = arith.constant 1 : index
    %c0_6 = arith.constant 0 : index
    %c0_7 = arith.constant 0 : index
    %9 = vector.load %arg2[%c1, %c0_6, %c0_7] : memref<5x28x144xf32, #tpu.memory_space<vmem>>, vector<1x28x144xf32>
    %10 = vector.shape_cast %9 : vector<1x28x144xf32> to vector<28x144xf32>
    %cst_8 = arith.constant dense<0.000000e+00> : vector<24x144xf32>
    %11 = tpu.matmul %8, %10, %cst_8 {dimension_numbers = #tpu.dot_dimension_numbers<[1], [0], [0], [1], [0, 0, 1, 1], [], []>} : vector<24x28xf32>, vector<28x144xf32>, vector<24x144xf32> -> vector<24x144xf32>
    %12 = arith.addf %7, %11 : vector<24x144xf32>
    %13 = vector.extract_strided_slice %1 {offsets = [2, 0], sizes = [24, 28], strides = [1, 1]} : vector<28x28xf32> to vector<24x28xf32>
    %c2 = arith.constant 2 : index
    %c0_9 = arith.constant 0 : index
    %c0_10 = arith.constant 0 : index
    %14 = vector.load %arg2[%c2, %c0_9, %c0_10] : memref<5x28x144xf32, #tpu.memory_space<vmem>>, vector<1x28x144xf32>
    %15 = vector.shape_cast %14 : vector<1x28x144xf32> to vector<28x144xf32>
    %cst_11 = arith.constant dense<0.000000e+00> : vector<24x144xf32>
    %16 = tpu.matmul %13, %15, %cst_11 {dimension_numbers = #tpu.dot_dimension_numbers<[1], [0], [0], [1], [0, 0, 1, 1], [], []>} : vector<24x28xf32>, vector<28x144xf32>, vector<24x144xf32> -> vector<24x144xf32>
    %17 = arith.addf %12, %16 : vector<24x144xf32>
    %18 = vector.extract_strided_slice %1 {offsets = [3, 0], sizes = [24, 28], strides = [1, 1]} : vector<28x28xf32> to vector<24x28xf32>
    %c3 = arith.constant 3 : index
    %c0_12 = arith.constant 0 : index
    %c0_13 = arith.constant 0 : index
    %19 = vector.load %arg2[%c3, %c0_12, %c0_13] : memref<5x28x144xf32, #tpu.memory_space<vmem>>, vector<1x28x144xf32>
    %20 = vector.shape_cast %19 : vector<1x28x144xf32> to vector<28x144xf32>
    %cst_14 = arith.constant dense<0.000000e+00> : vector<24x144xf32>
    %21 = tpu.matmul %18, %20, %cst_14 {dimension_numbers = #tpu.dot_dimension_numbers<[1], [0], [0], [1], [0, 0, 1, 1], [], []>} : vector<24x28xf32>, vector<28x144xf32>, vector<24x144xf32> -> vector<24x144xf32>
    %22 = arith.addf %17, %21 : vector<24x144xf32>
    %23 = vector.extract_strided_slice %1 {offsets = [4, 0], sizes = [24, 28], strides = [1, 1]} : vector<28x28xf32> to vector<24x28xf32>
    %c4 = arith.constant 4 : index
    %c0_15 = arith.constant 0 : index
    %c0_16 = arith.constant 0 : index
    %24 = vector.load %arg2[%c4, %c0_15, %c0_16] : memref<5x28x144xf32, #tpu.memory_space<vmem>>, vector<1x28x144xf32>
    %25 = vector.shape_cast %24 : vector<1x28x144xf32> to vector<28x144xf32>
    %cst_17 = arith.constant dense<0.000000e+00> : vector<24x144xf32>
    %26 = tpu.matmul %23, %25, %cst_17 {dimension_numbers = #tpu.dot_dimension_numbers<[1], [0], [0], [1], [0, 0, 1, 1], [], []>} : vector<24x28xf32>, vector<28x144xf32>, vector<24x144xf32> -> vector<24x144xf32>
    %27 = arith.addf %22, %26 : vector<24x144xf32>
    %c0_18 = arith.constant 0 : index
    %c0_19 = arith.constant 0 : index
    %28 = vector.load %arg3[%c0_18, %c0_19] : memref<1x144xf32, #tpu.memory_space<vmem>>, vector<1x144xf32>
    %29 = vector.broadcast %28 : vector<1x144xf32> to vector<24x144xf32>
    %30 = arith.addf %27, %29 : vector<24x144xf32>
    %cst_20 = arith.constant 0.000000e+00 : f32
    %31 = vector.broadcast %cst_20 : f32 to vector<24x144xf32>
    %32 = arith.maximumf %30, %31 : vector<24x144xf32>
    %c0_21 = arith.constant 0 : index
    %c0_22 = arith.constant 0 : index
    %33 = vector.load %arg4[%c0_21, %c0_22] : memref<144x72xf32, #tpu.memory_space<vmem>>, vector<144x72xf32>
    %cst_23 = arith.constant dense<0.000000e+00> : vector<24x72xf32>
    %34 = tpu.matmul %32, %33, %cst_23 {dimension_numbers = #tpu.dot_dimension_numbers<[1], [0], [0], [1], [0, 0, 1, 1], [], []>} : vector<24x144xf32>, vector<144x72xf32>, vector<24x72xf32> -> vector<24x72xf32>
    %c0_24 = arith.constant 0 : index
    %c0_25 = arith.constant 0 : index
    %35 = vector.load %arg5[%c0_24, %c0_25] : memref<144x72xf32, #tpu.memory_space<vmem>>, vector<144x72xf32>
    %cst_26 = arith.constant dense<0.000000e+00> : vector<24x72xf32>
    %36 = tpu.matmul %32, %35, %cst_26 {dimension_numbers = #tpu.dot_dimension_numbers<[1], [0], [0], [1], [0, 0, 1, 1], [], []>} : vector<24x144xf32>, vector<144x72xf32>, vector<24x72xf32> -> vector<24x72xf32>
    %37 = arith.maximumf %34, %36 : vector<24x72xf32>
    %c0_27 = arith.constant 0 : index
    %c0_28 = arith.constant 0 : index
    %38 = vector.load %arg6[%c0_27, %c0_28] : memref<12x24xf32, #tpu.memory_space<vmem>>, vector<12x24xf32>
    %cst_29 = arith.constant dense<0.000000e+00> : vector<12x72xf32>
    %39 = tpu.matmul %38, %37, %cst_29 {dimension_numbers = #tpu.dot_dimension_numbers<[1], [0], [0], [1], [0, 0, 1, 1], [], []>} : vector<12x24xf32>, vector<24x72xf32>, vector<12x72xf32> -> vector<12x72xf32>
    %c0_30 = arith.constant 0 : index
    %c0_31 = arith.constant 0 : index
    %40 = vector.load %arg7[%c0_30, %c0_31] : memref<12x24xf32, #tpu.memory_space<vmem>>, vector<12x24xf32>
    %cst_32 = arith.constant dense<0.000000e+00> : vector<12x72xf32>
    %41 = tpu.matmul %40, %37, %cst_32 {dimension_numbers = #tpu.dot_dimension_numbers<[1], [0], [0], [1], [0, 0, 1, 1], [], []>} : vector<12x24xf32>, vector<24x72xf32>, vector<12x72xf32> -> vector<12x72xf32>
    %42 = arith.maximumf %39, %41 : vector<12x72xf32>
    %cst_33 = arith.constant 0.000000e+00 : f32
    %43 = vector.broadcast %cst_33 : f32 to vector<8x128xf32>
    %44 = vector.extract_strided_slice %42 {offsets = [0, 0], sizes = [8, 72], strides = [1, 1]} : vector<12x72xf32> to vector<8x72xf32>
    %c0_34 = arith.constant 0 : index
    %c0_35 = arith.constant 0 : index
    %c0_36 = arith.constant 0 : index
    %45 = vector.load %arg8[%c0_34, %c0_35, %c0_36] : memref<5x72x128xf32, #tpu.memory_space<vmem>>, vector<1x72x128xf32>
    %46 = vector.shape_cast %45 : vector<1x72x128xf32> to vector<72x128xf32>
    %cst_37 = arith.constant dense<0.000000e+00> : vector<8x128xf32>
    %47 = tpu.matmul %44, %46, %cst_37 {dimension_numbers = #tpu.dot_dimension_numbers<[1], [0], [0], [1], [0, 0, 1, 1], [], []>} : vector<8x72xf32>, vector<72x128xf32>, vector<8x128xf32> -> vector<8x128xf32>
    %48 = arith.addf %43, %47 : vector<8x128xf32>
    %49 = vector.extract_strided_slice %42 {offsets = [1, 0], sizes = [8, 72], strides = [1, 1]} : vector<12x72xf32> to vector<8x72xf32>
    %c1_38 = arith.constant 1 : index
    %c0_39 = arith.constant 0 : index
    %c0_40 = arith.constant 0 : index
    %50 = vector.load %arg8[%c1_38, %c0_39, %c0_40] : memref<5x72x128xf32, #tpu.memory_space<vmem>>, vector<1x72x128xf32>
    %51 = vector.shape_cast %50 : vector<1x72x128xf32> to vector<72x128xf32>
    %cst_41 = arith.constant dense<0.000000e+00> : vector<8x128xf32>
    %52 = tpu.matmul %49, %51, %cst_41 {dimension_numbers = #tpu.dot_dimension_numbers<[1], [0], [0], [1], [0, 0, 1, 1], [], []>} : vector<8x72xf32>, vector<72x128xf32>, vector<8x128xf32> -> vector<8x128xf32>
    %53 = arith.addf %48, %52 : vector<8x128xf32>
    %54 = vector.extract_strided_slice %42 {offsets = [2, 0], sizes = [8, 72], strides = [1, 1]} : vector<12x72xf32> to vector<8x72xf32>
    %c2_42 = arith.constant 2 : index
    %c0_43 = arith.constant 0 : index
    %c0_44 = arith.constant 0 : index
    %55 = vector.load %arg8[%c2_42, %c0_43, %c0_44] : memref<5x72x128xf32, #tpu.memory_space<vmem>>, vector<1x72x128xf32>
    %56 = vector.shape_cast %55 : vector<1x72x128xf32> to vector<72x128xf32>
    %cst_45 = arith.constant dense<0.000000e+00> : vector<8x128xf32>
    %57 = tpu.matmul %54, %56, %cst_45 {dimension_numbers = #tpu.dot_dimension_numbers<[1], [0], [0], [1], [0, 0, 1, 1], [], []>} : vector<8x72xf32>, vector<72x128xf32>, vector<8x128xf32> -> vector<8x128xf32>
    %58 = arith.addf %53, %57 : vector<8x128xf32>
    %59 = vector.extract_strided_slice %42 {offsets = [3, 0], sizes = [8, 72], strides = [1, 1]} : vector<12x72xf32> to vector<8x72xf32>
    %c3_46 = arith.constant 3 : index
    %c0_47 = arith.constant 0 : index
    %c0_48 = arith.constant 0 : index
    %60 = vector.load %arg8[%c3_46, %c0_47, %c0_48] : memref<5x72x128xf32, #tpu.memory_space<vmem>>, vector<1x72x128xf32>
    %61 = vector.shape_cast %60 : vector<1x72x128xf32> to vector<72x128xf32>
    %cst_49 = arith.constant dense<0.000000e+00> : vector<8x128xf32>
    %62 = tpu.matmul %59, %61, %cst_49 {dimension_numbers = #tpu.dot_dimension_numbers<[1], [0], [0], [1], [0, 0, 1, 1], [], []>} : vector<8x72xf32>, vector<72x128xf32>, vector<8x128xf32> -> vector<8x128xf32>
    %63 = arith.addf %58, %62 : vector<8x128xf32>
    %64 = vector.extract_strided_slice %42 {offsets = [4, 0], sizes = [8, 72], strides = [1, 1]} : vector<12x72xf32> to vector<8x72xf32>
    %c4_50 = arith.constant 4 : index
    %c0_51 = arith.constant 0 : index
    %c0_52 = arith.constant 0 : index
    %65 = vector.load %arg8[%c4_50, %c0_51, %c0_52] : memref<5x72x128xf32, #tpu.memory_space<vmem>>, vector<1x72x128xf32>
    %66 = vector.shape_cast %65 : vector<1x72x128xf32> to vector<72x128xf32>
    %cst_53 = arith.constant dense<0.000000e+00> : vector<8x128xf32>
    %67 = tpu.matmul %64, %66, %cst_53 {dimension_numbers = #tpu.dot_dimension_numbers<[1], [0], [0], [1], [0, 0, 1, 1], [], []>} : vector<8x72xf32>, vector<72x128xf32>, vector<8x128xf32> -> vector<8x128xf32>
    %68 = arith.addf %63, %67 : vector<8x128xf32>
    %c0_54 = arith.constant 0 : index
    %c0_55 = arith.constant 0 : index
    %69 = vector.load %arg9[%c0_54, %c0_55] : memref<1x128xf32, #tpu.memory_space<vmem>>, vector<1x128xf32>
    %70 = vector.broadcast %69 : vector<1x128xf32> to vector<8x128xf32>
    %71 = arith.addf %68, %70 : vector<8x128xf32>
    %cst_56 = arith.constant 0.000000e+00 : f32
    %72 = vector.broadcast %cst_56 : f32 to vector<8x128xf32>
    %73 = arith.maximumf %71, %72 : vector<8x128xf32>
    %cst_57 = arith.constant 0.000000e+00 : f32
    %74 = vector.broadcast %cst_57 : f32 to vector<1x120xf32>
    %75 = vector.extract_strided_slice %73 {offsets = [0, 0], sizes = [1, 128], strides = [1, 1]} : vector<8x128xf32> to vector<1x128xf32>
    %c0_58 = arith.constant 0 : index
    %c0_59 = arith.constant 0 : index
    %c0_60 = arith.constant 0 : index
    %76 = vector.load %arg10[%c0_58, %c0_59, %c0_60] : memref<8x128x120xf32, #tpu.memory_space<vmem>>, vector<1x128x120xf32>
    %77 = vector.shape_cast %76 : vector<1x128x120xf32> to vector<128x120xf32>
    %cst_61 = arith.constant dense<0.000000e+00> : vector<1x120xf32>
    %78 = tpu.matmul %75, %77, %cst_61 {dimension_numbers = #tpu.dot_dimension_numbers<[1], [0], [0], [1], [0, 0, 1, 1], [], []>} : vector<1x128xf32>, vector<128x120xf32>, vector<1x120xf32> -> vector<1x120xf32>
    %79 = arith.addf %74, %78 : vector<1x120xf32>
    %80 = vector.extract_strided_slice %73 {offsets = [1, 0], sizes = [1, 128], strides = [1, 1]} : vector<8x128xf32> to vector<1x128xf32>
    %c1_62 = arith.constant 1 : index
    %c0_63 = arith.constant 0 : index
    %c0_64 = arith.constant 0 : index
    %81 = vector.load %arg10[%c1_62, %c0_63, %c0_64] : memref<8x128x120xf32, #tpu.memory_space<vmem>>, vector<1x128x120xf32>
    %82 = vector.shape_cast %81 : vector<1x128x120xf32> to vector<128x120xf32>
    %cst_65 = arith.constant dense<0.000000e+00> : vector<1x120xf32>
    %83 = tpu.matmul %80, %82, %cst_65 {dimension_numbers = #tpu.dot_dimension_numbers<[1], [0], [0], [1], [0, 0, 1, 1], [], []>} : vector<1x128xf32>, vector<128x120xf32>, vector<1x120xf32> -> vector<1x120xf32>
    %84 = arith.addf %79, %83 : vector<1x120xf32>
    %85 = vector.extract_strided_slice %73 {offsets = [2, 0], sizes = [1, 128], strides = [1, 1]} : vector<8x128xf32> to vector<1x128xf32>
    %c2_66 = arith.constant 2 : index
    %c0_67 = arith.constant 0 : index
    %c0_68 = arith.constant 0 : index
    %86 = vector.load %arg10[%c2_66, %c0_67, %c0_68] : memref<8x128x120xf32, #tpu.memory_space<vmem>>, vector<1x128x120xf32>
    %87 = vector.shape_cast %86 : vector<1x128x120xf32> to vector<128x120xf32>
    %cst_69 = arith.constant dense<0.000000e+00> : vector<1x120xf32>
    %88 = tpu.matmul %85, %87, %cst_69 {dimension_numbers = #tpu.dot_dimension_numbers<[1], [0], [0], [1], [0, 0, 1, 1], [], []>} : vector<1x128xf32>, vector<128x120xf32>, vector<1x120xf32> -> vector<1x120xf32>
    %89 = arith.addf %84, %88 : vector<1x120xf32>
    %90 = vector.extract_strided_slice %73 {offsets = [3, 0], sizes = [1, 128], strides = [1, 1]} : vector<8x128xf32> to vector<1x128xf32>
    %c3_70 = arith.constant 3 : index
    %c0_71 = arith.constant 0 : index
    %c0_72 = arith.constant 0 : index
    %91 = vector.load %arg10[%c3_70, %c0_71, %c0_72] : memref<8x128x120xf32, #tpu.memory_space<vmem>>, vector<1x128x120xf32>
    %92 = vector.shape_cast %91 : vector<1x128x120xf32> to vector<128x120xf32>
    %cst_73 = arith.constant dense<0.000000e+00> : vector<1x120xf32>
    %93 = tpu.matmul %90, %92, %cst_73 {dimension_numbers = #tpu.dot_dimension_numbers<[1], [0], [0], [1], [0, 0, 1, 1], [], []>} : vector<1x128xf32>, vector<128x120xf32>, vector<1x120xf32> -> vector<1x120xf32>
    %94 = arith.addf %89, %93 : vector<1x120xf32>
    %95 = vector.extract_strided_slice %73 {offsets = [4, 0], sizes = [1, 128], strides = [1, 1]} : vector<8x128xf32> to vector<1x128xf32>
    %c4_74 = arith.constant 4 : index
    %c0_75 = arith.constant 0 : index
    %c0_76 = arith.constant 0 : index
    %96 = vector.load %arg10[%c4_74, %c0_75, %c0_76] : memref<8x128x120xf32, #tpu.memory_space<vmem>>, vector<1x128x120xf32>
    %97 = vector.shape_cast %96 : vector<1x128x120xf32> to vector<128x120xf32>
    %cst_77 = arith.constant dense<0.000000e+00> : vector<1x120xf32>
    %98 = tpu.matmul %95, %97, %cst_77 {dimension_numbers = #tpu.dot_dimension_numbers<[1], [0], [0], [1], [0, 0, 1, 1], [], []>} : vector<1x128xf32>, vector<128x120xf32>, vector<1x120xf32> -> vector<1x120xf32>
    %99 = arith.addf %94, %98 : vector<1x120xf32>
    %100 = vector.extract_strided_slice %73 {offsets = [5, 0], sizes = [1, 128], strides = [1, 1]} : vector<8x128xf32> to vector<1x128xf32>
    %c5 = arith.constant 5 : index
    %c0_78 = arith.constant 0 : index
    %c0_79 = arith.constant 0 : index
    %101 = vector.load %arg10[%c5, %c0_78, %c0_79] : memref<8x128x120xf32, #tpu.memory_space<vmem>>, vector<1x128x120xf32>
    %102 = vector.shape_cast %101 : vector<1x128x120xf32> to vector<128x120xf32>
    %cst_80 = arith.constant dense<0.000000e+00> : vector<1x120xf32>
    %103 = tpu.matmul %100, %102, %cst_80 {dimension_numbers = #tpu.dot_dimension_numbers<[1], [0], [0], [1], [0, 0, 1, 1], [], []>} : vector<1x128xf32>, vector<128x120xf32>, vector<1x120xf32> -> vector<1x120xf32>
    %104 = arith.addf %99, %103 : vector<1x120xf32>
    %105 = vector.extract_strided_slice %73 {offsets = [6, 0], sizes = [1, 128], strides = [1, 1]} : vector<8x128xf32> to vector<1x128xf32>
    %c6 = arith.constant 6 : index
    %c0_81 = arith.constant 0 : index
    %c0_82 = arith.constant 0 : index
    %106 = vector.load %arg10[%c6, %c0_81, %c0_82] : memref<8x128x120xf32, #tpu.memory_space<vmem>>, vector<1x128x120xf32>
    %107 = vector.shape_cast %106 : vector<1x128x120xf32> to vector<128x120xf32>
    %cst_83 = arith.constant dense<0.000000e+00> : vector<1x120xf32>
    %108 = tpu.matmul %105, %107, %cst_83 {dimension_numbers = #tpu.dot_dimension_numbers<[1], [0], [0], [1], [0, 0, 1, 1], [], []>} : vector<1x128xf32>, vector<128x120xf32>, vector<1x120xf32> -> vector<1x120xf32>
    %109 = arith.addf %104, %108 : vector<1x120xf32>
    %110 = vector.extract_strided_slice %73 {offsets = [7, 0], sizes = [1, 128], strides = [1, 1]} : vector<8x128xf32> to vector<1x128xf32>
    %c7 = arith.constant 7 : index
    %c0_84 = arith.constant 0 : index
    %c0_85 = arith.constant 0 : index
    %111 = vector.load %arg10[%c7, %c0_84, %c0_85] : memref<8x128x120xf32, #tpu.memory_space<vmem>>, vector<1x128x120xf32>
    %112 = vector.shape_cast %111 : vector<1x128x120xf32> to vector<128x120xf32>
    %cst_86 = arith.constant dense<0.000000e+00> : vector<1x120xf32>
    %113 = tpu.matmul %110, %112, %cst_86 {dimension_numbers = #tpu.dot_dimension_numbers<[1], [0], [0], [1], [0, 0, 1, 1], [], []>} : vector<1x128xf32>, vector<128x120xf32>, vector<1x120xf32> -> vector<1x120xf32>
    %114 = arith.addf %109, %113 : vector<1x120xf32>
    %c0_87 = arith.constant 0 : index
    %c0_88 = arith.constant 0 : index
    %115 = vector.load %arg11[%c0_87, %c0_88] : memref<1x120xf32, #tpu.memory_space<vmem>>, vector<1x120xf32>
    %116 = arith.addf %114, %115 : vector<1x120xf32>
    %cst_89 = arith.constant 0.000000e+00 : f32
    %117 = vector.broadcast %cst_89 : f32 to vector<1x120xf32>
    %118 = arith.maximumf %116, %117 : vector<1x120xf32>
    %c0_90 = arith.constant 0 : index
    %c0_91 = arith.constant 0 : index
    %119 = vector.load %arg12[%c0_90, %c0_91] : memref<120x84xf32, #tpu.memory_space<vmem>>, vector<120x84xf32>
    %cst_92 = arith.constant dense<0.000000e+00> : vector<1x84xf32>
    %120 = tpu.matmul %118, %119, %cst_92 {dimension_numbers = #tpu.dot_dimension_numbers<[1], [0], [0], [1], [0, 0, 1, 1], [], []>} : vector<1x120xf32>, vector<120x84xf32>, vector<1x84xf32> -> vector<1x84xf32>
    %c0_93 = arith.constant 0 : index
    %c0_94 = arith.constant 0 : index
    %121 = vector.load %arg13[%c0_93, %c0_94] : memref<1x84xf32, #tpu.memory_space<vmem>>, vector<1x84xf32>
    %122 = arith.addf %120, %121 : vector<1x84xf32>
    %cst_95 = arith.constant 0.000000e+00 : f32
    %123 = vector.broadcast %cst_95 : f32 to vector<1x84xf32>
    %124 = arith.maximumf %122, %123 : vector<1x84xf32>
    %c0_96 = arith.constant 0 : index
    %c0_97 = arith.constant 0 : index
    %125 = vector.load %arg14[%c0_96, %c0_97] : memref<84x10xf32, #tpu.memory_space<vmem>>, vector<84x10xf32>
    %cst_98 = arith.constant dense<0.000000e+00> : vector<1x10xf32>
    %126 = tpu.matmul %124, %125, %cst_98 {dimension_numbers = #tpu.dot_dimension_numbers<[1], [0], [0], [1], [0, 0, 1, 1], [], []>} : vector<1x84xf32>, vector<84x10xf32>, vector<1x10xf32> -> vector<1x10xf32>
    %c0_99 = arith.constant 0 : index
    %c0_100 = arith.constant 0 : index
    %127 = vector.load %arg15[%c0_99, %c0_100] : memref<1x10xf32, #tpu.memory_space<vmem>>, vector<1x10xf32>
    %128 = arith.addf %126, %127 : vector<1x10xf32>
    %c0_101 = arith.constant 0 : index
    %c0_102 = arith.constant 0 : index
    %c0_103 = arith.constant 0 : index
    %129 = vector.load %arg16[%c0_101, %c0_102, %c0_103] : memref<1x1x10xf32, #tpu.memory_space<vmem>>, vector<1x1x10xf32>
    %130 = vector.shape_cast %129 : vector<1x1x10xf32> to vector<1x10xf32>
    %131 = vector.shape_cast %128 : vector<1x10xf32> to vector<1x1x10xf32>
    tpu.vector_store %arg16[%c0_101, %c0_102, %c0_103], %131 {strides = array<i32>} : memref<1x1x10xf32, #tpu.memory_space<vmem>>, vector<1x1x10xf32>,
    return
  }
  func.func @transform_0(%arg0: i32) -> (i32, i32, i32) {
    %c0_i32 = arith.constant 0 : i32
    %c0_i32_0 = arith.constant 0 : i32
    %c0_i32_1 = arith.constant 0 : i32
    return %arg0, %c0_i32, %c0_i32_0 : i32, i32, i32
  }
  func.func @transform_1(%arg0: i32) -> (i32, i32, i32) {
    %c0_i32 = arith.constant 0 : i32
    %c0_i32_0 = arith.constant 0 : i32
    %c0_i32_1 = arith.constant 0 : i32
    %c0_i32_2 = arith.constant 0 : i32
    return %c0_i32, %c0_i32_0, %c0_i32_1 : i32, i32, i32
  }
  func.func @transform_2(%arg0: i32) -> (i32, i32) {
    %c0_i32 = arith.constant 0 : i32
    %c0_i32_0 = arith.constant 0 : i32
    %c0_i32_1 = arith.constant 0 : i32
    return %c0_i32, %c0_i32_0 : i32, i32
  }
  func.func @transform_3(%arg0: i32) -> (i32, i32) {
    %c0_i32 = arith.constant 0 : i32
    %c0_i32_0 = arith.constant 0 : i32
    %c0_i32_1 = arith.constant 0 : i32
    return %c0_i32, %c0_i32_0 : i32, i32
  }
  func.func @transform_4(%arg0: i32) -> (i32, i32) {
    %c0_i32 = arith.constant 0 : i32
    %c0_i32_0 = arith.constant 0 : i32
    %c0_i32_1 = arith.constant 0 : i32
    return %c0_i32, %c0_i32_0 : i32, i32
  }
  func.func @transform_5(%arg0: i32) -> (i32, i32) {
    %c0_i32 = arith.constant 0 : i32
    %c0_i32_0 = arith.constant 0 : i32
    %c0_i32_1 = arith.constant 0 : i32
    return %c0_i32, %c0_i32_0 : i32, i32
  }
  func.func @transform_6(%arg0: i32) -> (i32, i32) {
    %c0_i32 = arith.constant 0 : i32
    %c0_i32_0 = arith.constant 0 : i32
    %c0_i32_1 = arith.constant 0 : i32
    return %c0_i32, %c0_i32_0 : i32, i32
  }
  func.func @transform_7(%arg0: i32) -> (i32, i32, i32) {
    %c0_i32 = arith.constant 0 : i32
    %c0_i32_0 = arith.constant 0 : i32
    %c0_i32_1 = arith.constant 0 : i32
    %c0_i32_2 = arith.constant 0 : i32
    return %c0_i32, %c0_i32_0, %c0_i32_1 : i32, i32, i32
  }
  func.func @transform_8(%arg0: i32) -> (i32, i32) {
    %c0_i32 = arith.constant 0 : i32
    %c0_i32_0 = arith.constant 0 : i32
    %c0_i32_1 = arith.constant 0 : i32
    return %c0_i32, %c0_i32_0 : i32, i32
  }
  func.func @transform_9(%arg0: i32) -> (i32, i32, i32) {
    %c0_i32 = arith.constant 0 : i32
    %c0_i32_0 = arith.constant 0 : i32
    %c0_i32_1 = arith.constant 0 : i32
    %c0_i32_2 = arith.constant 0 : i32
    return %c0_i32, %c0_i32_0, %c0_i32_1 : i32, i32, i32
  }
  func.func @transform_10(%arg0: i32) -> (i32, i32) {
    %c0_i32 = arith.constant 0 : i32
    %c0_i32_0 = arith.constant 0 : i32
    %c0_i32_1 = arith.constant 0 : i32
    return %c0_i32, %c0_i32_0 : i32, i32
  }
  func.func @transform_11(%arg0: i32) -> (i32, i32) {
    %c0_i32 = arith.constant 0 : i32
    %c0_i32_0 = arith.constant 0 : i32
    %c0_i32_1 = arith.constant 0 : i32
    return %c0_i32, %c0_i32_0 : i32, i32
  }
  func.func @transform_12(%arg0: i32) -> (i32, i32) {
    %c0_i32 = arith.constant 0 : i32
    %c0_i32_0 = arith.constant 0 : i32
    %c0_i32_1 = arith.constant 0 : i32
    return %c0_i32, %c0_i32_0 : i32, i32
  }
  func.func @transform_13(%arg0: i32) -> (i32, i32) {
    %c0_i32 = arith.constant 0 : i32
    %c0_i32_0 = arith.constant 0 : i32
    %c0_i32_1 = arith.constant 0 : i32
    return %c0_i32, %c0_i32_0 : i32, i32
  }
  func.func @transform_14(%arg0: i32) -> (i32, i32) {
    %c0_i32 = arith.constant 0 : i32
    %c0_i32_0 = arith.constant 0 : i32
    %c0_i32_1 = arith.constant 0 : i32
    return %c0_i32, %c0_i32_0 : i32, i32
  }
  func.func @transform_15(%arg0: i32) -> (i32, i32, i32) {
    %c0_i32 = arith.constant 0 : i32
    %c0_i32_0 = arith.constant 0 : i32
    %c0_i32_1 = arith.constant 0 : i32
    return %arg0, %c0_i32, %c0_i32_0 : i32, i32, i32
  }
}

</mosaic_0001>

<llo_original>
// kernel: target_net_forward.1
$region0: #{target_net_forward.1}
  #allocation0 [shape = 'u32[]', space=smem, size = 0x4, offset = 0x4, fixed_abs, tag = 'smem constant byte address 0x4 - core index']
  #allocation1 [shape = 'u32[144,128]{1,0:T(1,128)}', space=vmem, size = 0x12000, scoped, tag = 'internal scratch']
  %s0 = inlined_call_operand.vmem [shape: f32[2,28,28], index: 0, kind: input, shape index: {}]
  %s1 = inlined_call_operand.vmem [shape: f32[5,28,144], index: 1, kind: input, shape index: {}]
  %s2 = inlined_call_operand.vmem [shape: f32[1,144], index: 2, kind: input, shape index: {}]
  %s3 = inlined_call_operand.vmem [shape: f32[144,72], index: 3, kind: input, shape index: {}]
  %s4 = inlined_call_operand.vmem [shape: f32[144,72], index: 4, kind: input, shape index: {}]
  %s5 = inlined_call_operand.vmem [shape: f32[12,24], index: 5, kind: input, shape index: {}]
  %s6 = inlined_call_operand.vmem [shape: f32[12,24], index: 6, kind: input, shape index: {}]
  %s7 = inlined_call_operand.vmem [shape: f32[5,72,128], index: 7, kind: input, shape index: {}]
  %s8 = inlined_call_operand.vmem [shape: f32[1,128], index: 8, kind: input, shape index: {}]
  %s9 = inlined_call_operand.vmem [shape: f32[8,128,120], index: 9, kind: input, shape index: {}]
  %s10 = inlined_call_operand.vmem [shape: f32[1,120], index: 10, kind: input, shape index: {}]
  %s11 = inlined_call_operand.vmem [shape: f32[120,84], index: 11, kind: input, shape index: {}]
  %s12 = inlined_call_operand.vmem [shape: f32[1,84], index: 12, kind: input, shape index: {}]
  %s13 = inlined_call_operand.vmem [shape: f32[84,10], index: 13, kind: input, shape index: {}]
  %s14 = inlined_call_operand.vmem [shape: f32[1,10], index: 14, kind: input, shape index: {}]
  %s15 = inlined_call_operand.hbm [shape: f32[2,1,10], index: 15, kind: output, shape index: {}]
  %s16 = sld [smem:[#allocation0]]
  $region93: #{target_net_forward.1} parent=0
    _
  %s18 = ssub.s32 1, %s16
  %s19 = scalar_select 0, %s18, %s16
  $region1: #{target_net_forward.1} parent=0
    #allocation2 [shape = 'u8[1024]{0}', space=vmem, size = 0x400, scoped, tag = 'output window, operand 0']
    #allocation3 [shape = 's32[2]{0}', space=sflag, size = 0x8, scoped, tag = 'scoped memory for target_net_forward.1']
    %20 = vsyncpa [#allocation3], 0
    %s21 = scalar_lea.sflag [#allocation3], 1
    %22 = vsyncpa %s21, 0
    loop: start=0, step=1, limit=4
    $region2: #{target_net_forward.1} parent=1 // loop_pre_header
      _
    $region3: #{target_net_forward.1} parent=1 // loop_header
      %s24 = sphi 0, %s28
      %p25 = scmp.ge.s32.totalorder %s24, 4
      %s34 = sphi 0, %s36
      %s37 = sphi 0, %s34
      %s38 = sphi 0, %s37
      %s54 = sphi 0, %s38
      %s58 = sphi 0, %s58
      %s60 = sphi 0, %s58
      %s61 = sphi 0, %s60
      %s75 = sphi 0, %s61
      %s79 = sphi 0, %s79
      %s81 = sphi 0, %s79
      %s82 = sphi 0, %s81
      %s96 = sphi 0, %s82
      %s100 = sphi 0, %s100
      %s102 = sphi 0, %s100
      %s103 = sphi 0, %s102
      %s117 = sphi 0, %s103
      %s121 = sphi 0, %s121
      %s123 = sphi 0, %s121
      %s124 = sphi 0, %s123
      %s138 = sphi 0, %s124
      %s142 = sphi 0, %s142
      %s144 = sphi 0, %s142
      %s145 = sphi 0, %s144
      %s159 = sphi 0, %s145
      %s163 = sphi 0, %s163
      %s165 = sphi 0, %s163
      %s166 = sphi 0, %s165
      %s180 = sphi 0, %s166
      %s184 = sphi 0, %s184
      %s186 = sphi 0, %s184
      %s187 = sphi 0, %s186
      %s201 = sphi 0, %s187
      %s205 = sphi 0, %s205
      %s207 = sphi 0, %s205
      %s208 = sphi 0, %s207
      %s222 = sphi 0, %s208
      %s226 = sphi 0, %s226
      %s228 = sphi 0, %s226
      %s229 = sphi 0, %s228
      %s243 = sphi 0, %s229
      %s247 = sphi 0, %s247
      %s249 = sphi 0, %s247
      %s250 = sphi 0, %s249
      %s264 = sphi 0, %s250
      %s268 = sphi 0, %s268
      %s270 = sphi 0, %s268
      %s271 = sphi 0, %s270
      %s285 = sphi 0, %s271
      %s289 = sphi 0, %s289
      %s291 = sphi 0, %s289
      %s292 = sphi 0, %s291
      %s306 = sphi 0, %s292
      %s310 = sphi 0, %s310
      %s312 = sphi 0, %s310
      %s313 = sphi 0, %s312
      %s327 = sphi 0, %s313
      %s331 = sphi 0, %s331
      %s333 = sphi 0, %s331
      %s334 = sphi 0, %s333
      %s348 = sphi 0, %s334
      %s354 = sphi 0, %s356
      %s357 = sphi 0, %s354
      %s358 = sphi 0, %s357
      %s374 = sphi 0, %s358
    $region4: #{target_net_forward.1} parent=1 // loop_header_branch
      %27 = sbr.rel (%p25) target = $region8
    $region5: #{target_net_forward.1} parent=1 // loop_body
      %s29 = ssub.s32 %s24, 1
      %s30 = ssub.s32 %s24, 2
      %s31 = sadd.s32 %s24, 1
      %s32 = ssub.s32 %s24, %s31
      %p33 = scmp.eq.s32.totalorder %s32, 0
      %s35 = sadd.s32 %s34, 1
      %s36 = scalar_select %p33, %s34, %s35
      %p39 = pneg %p33
      %p40 = scmp.eq.s32.totalorder %s24, 1
      %p41 = por %p39, %p40
      %p42 = scmp.ne.s32.totalorder %s34, %s37
      %p43 = scmp.eq.s32.totalorder %s24, 0
      %p44 = por %p42, %p43
      %p45 = scmp.ne.s32.totalorder %s34, %s37
      %p46 = scmp.eq.s32.totalorder %s29, 1
      %p47 = por %p45, %p46
      %p48 = scmp.ne.s32.totalorder %s37, %s38
      %p49 = scmp.eq.s32.totalorder %s29, 0
      %p50 = por %p48, %p49
      %p51 = scmp.ne.s32.totalorder %s37, %s38
      %p52 = scmp.eq.s32.totalorder %s30, 1
      %p53 = por %p51, %p52
      %p55 = scmp.ne.s32.totalorder %s38, %s54
      %p56 = scmp.eq.s32.totalorder %s30, 0
      %p57 = por %p55, %p56
      %s59 = sadd.s32 %s58, 1
      %p62 = scmp.eq.s32.totalorder %s24, 1
      %p63 = scmp.ne.s32.totalorder %s58, %s60
      %p64 = scmp.eq.s32.totalorder %s24, 0
      %p65 = por %p63, %p64
      %p66 = scmp.ne.s32.totalorder %s58, %s60
      %p67 = scmp.eq.s32.totalorder %s29, 1
      %p68 = por %p66, %p67
      %p69 = scmp.ne.s32.totalorder %s60, %s61
      %p70 = scmp.eq.s32.totalorder %s29, 0
      %p71 = por %p69, %p70
      %p72 = scmp.ne.s32.totalorder %s60, %s61
      %p73 = scmp.eq.s32.totalorder %s30, 1
      %p74 = por %p72, %p73
      %p76 = scmp.ne.s32.totalorder %s61, %s75
      %p77 = scmp.eq.s32.totalorder %s30, 0
      %p78 = por %p76, %p77
      %s80 = sadd.s32 %s79, 1
      %p83 = scmp.eq.s32.totalorder %s24, 1
      %p84 = scmp.ne.s32.totalorder %s79, %s81
      %p85 = scmp.eq.s32.totalorder %s24, 0
      %p86 = por %p84, %p85
      %p87 = scmp.ne.s32.totalorder %s79, %s81
      %p88 = scmp.eq.s32.totalorder %s29, 1
      %p89 = por %p87, %p88
      %p90 = scmp.ne.s32.totalorder %s81, %s82
      %p91 = scmp.eq.s32.totalorder %s29, 0
      %p92 = por %p90, %p91
      %p93 = scmp.ne.s32.totalorder %s81, %s82
      %p94 = scmp.eq.s32.totalorder %s30, 1
      %p95 = por %p93, %p94
      %p97 = scmp.ne.s32.totalorder %s82, %s96
      %p98 = scmp.eq.s32.totalorder %s30, 0
      %p99 = por %p97, %p98
      %s101 = sadd.s32 %s100, 1
      %p104 = scmp.eq.s32.totalorder %s24, 1
      %p105 = scmp.ne.s32.totalorder %s100, %s102
      %p106 = scmp.eq.s32.totalorder %s24, 0
      %p107 = por %p105, %p106
      %p108 = scmp.ne.s32.totalorder %s100, %s102
      %p109 = scmp.eq.s32.totalorder %s29, 1
      %p110 = por %p108, %p109
      %p111 = scmp.ne.s32.totalorder %s102, %s103
      %p112 = scmp.eq.s32.totalorder %s29, 0
      %p113 = por %p111, %p112
      %p114 = scmp.ne.s32.totalorder %s102, %s103
      %p115 = scmp.eq.s32.totalorder %s30, 1
      %p116 = por %p114, %p115
      %p118 = scmp.ne.s32.totalorder %s103, %s117
      %p119 = scmp.eq.s32.totalorder %s30, 0
      %p120 = por %p118, %p119
      %s122 = sadd.s32 %s121, 1
      %p125 = scmp.eq.s32.totalorder %s24, 1
      %p126 = scmp.ne.s32.totalorder %s121, %s123
      %p127 = scmp.eq.s32.totalorder %s24, 0
      %p128 = por %p126, %p127
      %p129 = scmp.ne.s32.totalorder %s121, %s123
      %p130 = scmp.eq.s32.totalorder %s29, 1
      %p131 = por %p129, %p130
      %p132 = scmp.ne.s32.totalorder %s123, %s124
      %p133 = scmp.eq.s32.totalorder %s29, 0
      %p134 = por %p132, %p133
      %p135 = scmp.ne.s32.totalorder %s123, %s124
      %p136 = scmp.eq.s32.totalorder %s30, 1
      %p137 = por %p135, %p136
      %p139 = scmp.ne.s32.totalorder %s124, %s138
      %p140 = scmp.eq.s32.totalorder %s30, 0
      %p141 = por %p139, %p140
      %s143 = sadd.s32 %s142, 1
      %p146 = scmp.eq.s32.totalorder %s24, 1
      %p147 = scmp.ne.s32.totalorder %s142, %s144
      %p148 = scmp.eq.s32.totalorder %s24, 0
      %p149 = por %p147, %p148
      %p150 = scmp.ne.s32.totalorder %s142, %s144
      %p151 = scmp.eq.s32.totalorder %s29, 1
      %p152 = por %p150, %p151
      %p153 = scmp.ne.s32.totalorder %s144, %s145
      %p154 = scmp.eq.s32.totalorder %s29, 0
      %p155 = por %p153, %p154
      %p156 = scmp.ne.s32.totalorder %s144, %s145
      %p157 = scmp.eq.s32.totalorder %s30, 1
      %p158 = por %p156, %p157
      %p160 = scmp.ne.s32.totalorder %s145, %s159
      %p161 = scmp.eq.s32.totalorder %s30, 0
      %p162 = por %p160, %p161
      %s164 = sadd.s32 %s163, 1
      %p167 = scmp.eq.s32.totalorder %s24, 1
      %p168 = scmp.ne.s32.totalorder %s163, %s165
      %p169 = scmp.eq.s32.totalorder %s24, 0
      %p170 = por %p168, %p169
      %p171 = scmp.ne.s32.totalorder %s163, %s165
      %p172 = scmp.eq.s32.totalorder %s29, 1
      %p173 = por %p171, %p172
      %p174 = scmp.ne.s32.totalorder %s165, %s166
      %p175 = scmp.eq.s32.totalorder %s29, 0
      %p176 = por %p174, %p175
      %p177 = scmp.ne.s32.totalorder %s165, %s166
      %p178 = scmp.eq.s32.totalorder %s30, 1
      %p179 = por %p177, %p178
      %p181 = scmp.ne.s32.totalorder %s166, %s180
      %p182 = scmp.eq.s32.totalorder %s30, 0
      %p183 = por %p181, %p182
      %s185 = sadd.s32 %s184, 1
      %p188 = scmp.eq.s32.totalorder %s24, 1
      %p189 = scmp.ne.s32.totalorder %s184, %s186
      %p190 = scmp.eq.s32.totalorder %s24, 0
      %p191 = por %p189, %p190
      %p192 = scmp.ne.s32.totalorder %s184, %s186
      %p193 = scmp.eq.s32.totalorder %s29, 1
      %p194 = por %p192, %p193
      %p195 = scmp.ne.s32.totalorder %s186, %s187
      %p196 = scmp.eq.s32.totalorder %s29, 0
      %p197 = por %p195, %p196
      %p198 = scmp.ne.s32.totalorder %s186, %s187
      %p199 = scmp.eq.s32.totalorder %s30, 1
      %p200 = por %p198, %p199
      %p202 = scmp.ne.s32.totalorder %s187, %s201
      %p203 = scmp.eq.s32.totalorder %s30, 0
      %p204 = por %p202, %p203
      %s206 = sadd.s32 %s205, 1
      %p209 = scmp.eq.s32.totalorder %s24, 1
      %p210 = scmp.ne.s32.totalorder %s205, %s207
      %p211 = scmp.eq.s32.totalorder %s24, 0
      %p212 = por %p210, %p211
      %p213 = scmp.ne.s32.totalorder %s205, %s207
      %p214 = scmp.eq.s32.totalorder %s29, 1
      %p215 = por %p213, %p214
      %p216 = scmp.ne.s32.totalorder %s207, %s208
      %p217 = scmp.eq.s32.totalorder %s29, 0
      %p218 = por %p216, %p217
      %p219 = scmp.ne.s32.totalorder %s207, %s208
      %p220 = scmp.eq.s32.totalorder %s30, 1
      %p221 = por %p219, %p220
      %p223 = scmp.ne.s32.totalorder %s208, %s222
      %p224 = scmp.eq.s32.totalorder %s30, 0
      %p225 = por %p223, %p224
      %s227 = sadd.s32 %s226, 1
      %p230 = scmp.eq.s32.totalorder %s24, 1
      %p231 = scmp.ne.s32.totalorder %s226, %s228
      %p232 = scmp.eq.s32.totalorder %s24, 0
      %p233 = por %p231, %p232
      %p234 = scmp.ne.s32.totalorder %s226, %s228
      %p235 = scmp.eq.s32.totalorder %s29, 1
      %p236 = por %p234, %p235
      %p237 = scmp.ne.s32.totalorder %s228, %s229
      %p238 = scmp.eq.s32.totalorder %s29, 0
      %p239 = por %p237, %p238
      %p240 = scmp.ne.s32.totalorder %s228, %s229
      %p241 = scmp.eq.s32.totalorder %s30, 1
      %p242 = por %p240, %p241
      %p244 = scmp.ne.s32.totalorder %s229, %s243
      %p245 = scmp.eq.s32.totalorder %s30, 0
      %p246 = por %p244, %p245
      %s248 = sadd.s32 %s247, 1
      %p251 = scmp.eq.s32.totalorder %s24, 1
      %p252 = scmp.ne.s32.totalorder %s247, %s249
      %p253 = scmp.eq.s32.totalorder %s24, 0
      %p254 = por %p252, %p253
      %p255 = scmp.ne.s32.totalorder %s247, %s249
      %p256 = scmp.eq.s32.totalorder %s29, 1
      %p257 = por %p255, %p256
      %p258 = scmp.ne.s32.totalorder %s249, %s250
      %p259 = scmp.eq.s32.totalorder %s29, 0
      %p260 = por %p258, %p259
      %p261 = scmp.ne.s32.totalorder %s249, %s250
      %p262 = scmp.eq.s32.totalorder %s30, 1
      %p263 = por %p261, %p262
      %p265 = scmp.ne.s32.totalorder %s250, %s264
      %p266 = scmp.eq.s32.totalorder %s30, 0
      %p267 = por %p265, %p266
      %s269 = sadd.s32 %s268, 1
      %p272 = scmp.eq.s32.totalorder %s24, 1
      %p273 = scmp.ne.s32.totalorder %s268, %s270
      %p274 = scmp.eq.s32.totalorder %s24, 0
      %p275 = por %p273, %p274
      %p276 = scmp.ne.s32.totalorder %s268, %s270
      %p277 = scmp.eq.s32.totalorder %s29, 1
      %p278 = por %p276, %p277
      %p279 = scmp.ne.s32.totalorder %s270, %s271
      %p280 = scmp.eq.s32.totalorder %s29, 0
      %p281 = por %p279, %p280
      %p282 = scmp.ne.s32.totalorder %s270, %s271
      %p283 = scmp.eq.s32.totalorder %s30, 1
      %p284 = por %p282, %p283
      %p286 = scmp.ne.s32.totalorder %s271, %s285
      %p287 = scmp.eq.s32.totalorder %s30, 0
      %p288 = por %p286, %p287
      %s290 = sadd.s32 %s289, 1
      %p293 = scmp.eq.s32.totalorder %s24, 1
      %p294 = scmp.ne.s32.totalorder %s289, %s291
      %p295 = scmp.eq.s32.totalorder %s24, 0
      %p296 = por %p294, %p295
      %p297 = scmp.ne.s32.totalorder %s289, %s291
      %p298 = scmp.eq.s32.totalorder %s29, 1
      %p299 = por %p297, %p298
      %p300 = scmp.ne.s32.totalorder %s291, %s292
      %p301 = scmp.eq.s32.totalorder %s29, 0
      %p302 = por %p300, %p301
      %p303 = scmp.ne.s32.totalorder %s291, %s292
      %p304 = scmp.eq.s32.totalorder %s30, 1
      %p305 = por %p303, %p304
      %p307 = scmp.ne.s32.totalorder %s292, %s306
      %p308 = scmp.eq.s32.totalorder %s30, 0
      %p309 = por %p307, %p308
      %s311 = sadd.s32 %s310, 1
      %p314 = scmp.eq.s32.totalorder %s24, 1
      %p315 = scmp.ne.s32.totalorder %s310, %s312
      %p316 = scmp.eq.s32.totalorder %s24, 0
      %p317 = por %p315, %p316
      %p318 = scmp.ne.s32.totalorder %s310, %s312
      %p319 = scmp.eq.s32.totalorder %s29, 1
      %p320 = por %p318, %p319
      %p321 = scmp.ne.s32.totalorder %s312, %s313
      %p322 = scmp.eq.s32.totalorder %s29, 0
      %p323 = por %p321, %p322
      %p324 = scmp.ne.s32.totalorder %s312, %s313
      %p325 = scmp.eq.s32.totalorder %s30, 1
      %p326 = por %p324, %p325
      %p328 = scmp.ne.s32.totalorder %s313, %s327
      %p329 = scmp.eq.s32.totalorder %s30, 0
      %p330 = por %p328, %p329
      %s332 = sadd.s32 %s331, 1
      %p335 = scmp.eq.s32.totalorder %s24, 1
      %p336 = scmp.ne.s32.totalorder %s331, %s333
      %p337 = scmp.eq.s32.totalorder %s24, 0
      %p338 = por %p336, %p337
      %p339 = scmp.ne.s32.totalorder %s331, %s333
      %p340 = scmp.eq.s32.totalorder %s29, 1
      %p341 = por %p339, %p340
      %p342 = scmp.ne.s32.totalorder %s333, %s334
      %p343 = scmp.eq.s32.totalorder %s29, 0
      %p344 = por %p342, %p343
      %p345 = scmp.ne.s32.totalorder %s333, %s334
      %p346 = scmp.eq.s32.totalorder %s30, 1
      %p347 = por %p345, %p346
      %p349 = scmp.ne.s32.totalorder %s334, %s348
      %p350 = scmp.eq.s32.totalorder %s30, 0
      %p351 = por %p349, %p350
      %s352 = ssub.s32 %s24, %s31
      %p353 = scmp.eq.s32.totalorder %s352, 0
      %s355 = sadd.s32 %s354, 1
      %s356 = scalar_select %p353, %s354, %s355
      %p359 = pneg %p353
      %p360 = scmp.eq.s32.totalorder %s24, 1
      %p361 = por %p359, %p360
      %p362 = scmp.ne.s32.totalorder %s354, %s357
      %p363 = scmp.eq.s32.totalorder %s24, 0
      %p364 = por %p362, %p363
      %p365 = scmp.ne.s32.totalorder %s354, %s357
      %p366 = scmp.eq.s32.totalorder %s29, 1
      %p367 = por %p365, %p366
      %p368 = scmp.ne.s32.totalorder %s357, %s358
      %p369 = scmp.eq.s32.totalorder %s29, 0
      %p370 = por %p368, %p369
      %p371 = scmp.ne.s32.totalorder %s357, %s358
      %p372 = scmp.eq.s32.totalorder %s30, 1
      %p373 = por %p371, %p372
      %p375 = scmp.ne.s32.totalorder %s358, %s374
      %p376 = scmp.eq.s32.totalorder %s30, 0
      %p377 = por %p375, %p376
      %p378 = scmp.le.s32.totalorder 1, %s24
      %p379 = scmp.lt.s32.totalorder %s24, 3
      %p380 = pnand %p378, %p379
      %p381 = pneg %p380
      // Predicated region
      $region9: #{target_net_forward.1} parent=5 // pred_check
        _
      $region10: #{target_net_forward.1} parent=5 // pred_check_branch
        %383 = sbr.rel (%p380) target = $region12
      $region11: #{target_net_forward.1} parent=5 // pred_region
        %s384 = ssub.s32 %s24, 1
        // Predicated region
        $region13: #{target_net_forward.1} parent=11 // pred_check
          %p385 = pneg %p71
        $region14: #{target_net_forward.1} parent=11 // pred_check_branch
          %387 = sbr.rel (%p385) target = $region16
        $region15: #{target_net_forward.1} parent=11 // pred_region
          _
        $region16: #{target_net_forward.1} parent=11 // pred_fallthru
          _
        // Predicated region
        $region17: #{target_net_forward.1} parent=11 // pred_check
          %p388 = pneg %p92
        $region18: #{target_net_forward.1} parent=11 // pred_check_branch
          %390 = sbr.rel (%p388) target = $region20
        $region19: #{target_net_forward.1} parent=11 // pred_region
          _
        $region20: #{target_net_forward.1} parent=11 // pred_fallthru
          _
        // Predicated region
        $region21: #{target_net_forward.1} parent=11 // pred_check
          %p391 = pneg %p113
        $region22: #{target_net_forward.1} parent=11 // pred_check_branch
          %393 = sbr.rel (%p391) target = $region24
        $region23: #{target_net_forward.1} parent=11 // pred_region
          _
        $region24: #{target_net_forward.1} parent=11 // pred_fallthru
          _
        // Predicated region
        $region25: #{target_net_forward.1} parent=11 // pred_check
          %p394 = pneg %p134
        $region26: #{target_net_forward.1} parent=11 // pred_check_branch
          %396 = sbr.rel (%p394) target = $region28
        $region27: #{target_net_forward.1} parent=11 // pred_region
          _
        $region28: #{target_net_forward.1} parent=11 // pred_fallthru
          _
        // Predicated region
        $region29: #{target_net_forward.1} parent=11 // pred_check
          %p397 = pneg %p155
        $region30: #{target_net_forward.1} parent=11 // pred_check_branch
          %399 = sbr.rel (%p397) target = $region32
        $region31: #{target_net_forward.1} parent=11 // pred_region
          _
        $region32: #{target_net_forward.1} parent=11 // pred_fallthru
          _
        // Predicated region
        $region33: #{target_net_forward.1} parent=11 // pred_check
          %p400 = pneg %p176
        $region34: #{target_net_forward.1} parent=11 // pred_check_branch
          %402 = sbr.rel (%p400) target = $region36
        $region35: #{target_net_forward.1} parent=11 // pred_region
          _
        $region36: #{target_net_forward.1} parent=11 // pred_fallthru
          _
        // Predicated region
        $region37: #{target_net_forward.1} parent=11 // pred_check
          %p403 = pneg %p197
        $region38: #{target_net_forward.1} parent=11 // pred_check_branch
          %405 = sbr.rel (%p403) target = $region40
        $region39: #{target_net_forward.1} parent=11 // pred_region
          _
        $region40: #{target_net_forward.1} parent=11 // pred_fallthru
          _
        // Predicated region
        $region41: #{target_net_forward.1} parent=11 // pred_check
          %p406 = pneg %p218
        $region42: #{target_net_forward.1} parent=11 // pred_check_branch
          %408 = sbr.rel (%p406) target = $region44
        $region43: #{target_net_forward.1} parent=11 // pred_region
          _
        $region44: #{target_net_forward.1} parent=11 // pred_fallthru
          _
        // Predicated region
        $region45: #{target_net_forward.1} parent=11 // pred_check
          %p409 = pneg %p239
        $region46: #{target_net_forward.1} parent=11 // pred_check_branch
          %411 = sbr.rel (%p409) target = $region48
        $region47: #{target_net_forward.1} parent=11 // pred_region
          _
        $region48: #{target_net_forward.1} parent=11 // pred_fallthru
          _
        // Predicated region
        $region49: #{target_net_forward.1} parent=11 // pred_check
          %p412 = pneg %p260
        $region50: #{target_net_forward.1} parent=11 // pred_check_branch
          %414 = sbr.rel (%p412) target = $region52
        $region51: #{target_net_forward.1} parent=11 // pred_region
          _
        $region52: #{target_net_forward.1} parent=11 // pred_fallthru
          _
        // Predicated region
        $region53: #{target_net_forward.1} parent=11 // pred_check
          %p415 = pneg %p281
        $region54: #{target_net_forward.1} parent=11 // pred_check_branch
          %417 = sbr.rel (%p415) target = $region56
        $region55: #{target_net_forward.1} parent=11 // pred_region
          _
        $region56: #{target_net_forward.1} parent=11 // pred_fallthru
          _
        // Predicated region
        $region57: #{target_net_forward.1} parent=11 // pred_check
          %p418 = pneg %p302
        $region58: #{target_net_forward.1} parent=11 // pred_check_branch
          %420 = sbr.rel (%p418) target = $region60
        $region59: #{target_net_forward.1} parent=11 // pred_region
          _
        $region60: #{target_net_forward.1} parent=11 // pred_fallthru
          _
        // Predicated region
        $region61: #{target_net_forward.1} parent=11 // pred_check
          %p421 = pneg %p323
        $region62: #{target_net_forward.1} parent=11 // pred_check_branch
          %423 = sbr.rel (%p421) target = $region64
        $region63: #{target_net_forward.1} parent=11 // pred_region
          _
        $region64: #{target_net_forward.1} parent=11 // pred_fallthru
          _
        // Predicated region
        $region65: #{target_net_forward.1} parent=11 // pred_check
          %p424 = pneg %p344
        $region66: #{target_net_forward.1} parent=11 // pred_check_branch
          %426 = sbr.rel (%p424) target = $region68
        $region67: #{target_net_forward.1} parent=11 // pred_region
          _
        $region68: #{target_net_forward.1} parent=11 // pred_fallthru
          _
      $region12: #{target_net_forward.1} parent=5 // pred_fallthru
        _
      %p427 = scmp.lt.s32.totalorder %s24, 2
      // Predicated region
      $region69: #{target_net_forward.1} parent=5 // pred_check
        %p428 = pneg %p427
      $region70: #{target_net_forward.1} parent=5 // pred_check_branch
        %430 = sbr.rel (%p428) target = $region72
      $region71: #{target_net_forward.1} parent=5 // pred_region
        // Predicated region
        $region73: #{target_net_forward.1} parent=71 // pred_check
          %p431 = pneg %p44
        $region74: #{target_net_forward.1} parent=71 // pred_check_branch
          %433 = sbr.rel (%p431) target = $region76
        $region75: #{target_net_forward.1} parent=71 // pred_region
          %p434 = scmp.lt.s32.totalorder %s24, 1
          %s435 = scalar_select %p434, %s24, 1
          %s436 = smul.addr %s435, 4
          %s437 = smul.addr %s436, 8
          %s438 = scalar_lea.vmem %s0, %s437
        $region76: #{target_net_forward.1} parent=71 // pred_fallthru
          _
      $region72: #{target_net_forward.1} parent=5 // pred_fallthru
        _
      %p439 = scmp.le.s32.totalorder 1, %s24
      %p440 = scmp.lt.s32.totalorder %s24, 3
      %p441 = pnand %p439, %p440
      %p442 = pneg %p441
      // Predicated region
      $region77: #{target_net_forward.1} parent=5 // pred_check
        _
      $region78: #{target_net_forward.1} parent=5 // pred_check_branch
        %444 = sbr.rel (%p441) target = $region80
      $region79: #{target_net_forward.1} parent=5 // pred_region
        %s445 = ssub.s32 %s24, 1
        %p446 = scmp.lt.s32.totalorder %s29, 1
        %s447 = scalar_select %p446, %s29, 1
        %s448 = smul.addr %s447, 4
        %s449 = smul.addr %s448, 8
        %s450 = scalar_lea.vmem %s0, %s449
        %p451 = pneg %p50
        %p452 = pneg %p47
        %p453 = pneg %p71
        %p454 = pneg %p68
        %p455 = pneg %p92
        %p456 = pneg %p89
        %p457 = pneg %p113
        %p458 = pneg %p110
        %p459 = pneg %p134
        %p460 = pneg %p131
        %p461 = pneg %p155
        %p462 = pneg %p152
        %p463 = pneg %p176
        %p464 = pneg %p173
        %p465 = pneg %p197
        %p466 = pneg %p194
        %p467 = pneg %p218
        %p468 = pneg %p215
        %p469 = pneg %p239
        %p470 = pneg %p236
        %p471 = pneg %p260
        %p472 = pneg %p257
        %p473 = pneg %p281
        %p474 = pneg %p278
        %p475 = pneg %p302
        %p476 = pneg %p299
        %p477 = pneg %p323
        %p478 = pneg %p320
        %p479 = pneg %p344
        %p480 = pneg %p341
        %p481 = pneg %p370
        %p482 = pneg %p367
        %s483 = sand.u32 %s357, 1
        %s484 = scalar_lea.sflag [#allocation3], %s483
        %s485 = sand.u32 %s357, 1
        %s486 = scalar_lea.vmem [#allocation2], %s485
        %p487 = scmp.lt.s32.totalorder %s29, 1
        %s488 = scalar_select %p487, %s29, 1
        %s489 = smul.addr %s488, 4
        %s490 = smul.addr %s489, 8
        %s491 = scalar_lea.vmem %s0, %s490
        %v492 = vld [vmem:[%s491] sm:$0xff]
        %v493 = vld [vmem:[%s491 + $0x8] sm:$0xff]
        %v494 = vld [vmem:[%s491 + $0x10] sm:$0xff]
        %v495 = vld [vmem:[%s491 + $0x18] sm:$0xf]
        %v496 = vld [vmem:[%s1] sm:$0xff]
        %v497 = vld [vmem:[%s1 + $0x8] sm:$0xff]
        %v498 = vld [vmem:[%s1 + $0x10] sm:$0xff]
        %v499 = vld [vmem:[%s1 + $0x18] sm:$0xff]
        %v500 = vld [vmem:[%s1 + $0x20] sm:$0xff]
        %v501 = vld [vmem:[%s1 + $0x28] sm:$0xff]
        %v502 = vld [vmem:[%s1 + $0x30] sm:$0xf]
        %v503 = vld [vmem:[%s1 + $0x38] sm:$0xf]
        %s504 = scalar_lea.vmem %s1, 64
        %v505 = vld [vmem:[%s504] sm:$0xff]
        %v506 = vld [vmem:[%s504 + $0x8] sm:$0xff]
        %v507 = vld [vmem:[%s504 + $0x10] sm:$0xff]
        %v508 = vld [vmem:[%s504 + $0x18] sm:$0xff]
        %v509 = vld [vmem:[%s504 + $0x20] sm:$0xff]
        %v510 = vld [vmem:[%s504 + $0x28] sm:$0xff]
        %v511 = vld [vmem:[%s504 + $0x30] sm:$0xf]
        %v512 = vld [vmem:[%s504 + $0x38] sm:$0xf]
        %vm517 = vcmask 1046528
        %v518 = vrot.slane %v492, 1
        %v519 = vrot.slane %v493, 1
        %v520 = vsel %vm517, %v518, %v519
        %v521 = vrot.slane %v494, 1
        %v522 = vsel %vm517, %v519, %v521
        %v523 = vrot.slane %v495, 1
        %v524 = vsel %vm517, %v521, %v523
        %vm525 = vcmask 228352
        %v526 = vsel %vm525, %v520, 0
        %v528 = vsel %vm525, %v522, 0
        %v530 = vsel %vm525, %v524, 0
        %vm532 = vcmask 1043456
        %v534 = vsel %vm532, %v511, 0
        %v537 = vsel %vm532, %v512, 0
        %539 = vmatprep.subr.mxu0 %v506
        %540 = vmatpush1.msra.mxu0 %v505
        %541 = vmatprep.subr.mxu0 %v508
        %542 = vmatpush1.msra.mxu0 %v507
        %543 = vmatprep.subr.mxu0 %v510
        %544 = vmatpush1.msra.mxu0 %v509
        %545 = vmatprep.subr.mxu0 %v537
        %546 = vmatpush1.msra.mxu0 %v534
        %547 = vmatprep.subr.mxu0 0.0
        %548 = vmatpush1.msra.mxu0 0.0
        %549 = vmatprep.subr.mxu0 0.0
        %550 = vmatpush1.msra.mxu0 0.0
        %551 = vmatprep.subr.mxu0 0.0
        %552 = vmatpush1.msra.mxu0 0.0
        %553 = vmatprep.subr.mxu0 0.0
        %554 = vmatpush1.msra.mxu0 0.0
        %555 = vmatprep.subr.mxu0 0.0
        %556 = vmatpush1.msra.mxu0 0.0
        %557 = vmatprep.subr.mxu0 0.0
        %558 = vmatpush1.msra.mxu0 0.0
        %559 = vmatprep.subr.mxu0 0.0
        %560 = vmatpush1.msra.mxu0 0.0
        %561 = vmatprep.subr.mxu0 0.0
        %562 = vmatpush1.msra.mxu0 0.0
        %563 = vmatprep.subr.mxu0 0.0
        %564 = vmatpush1.msra.mxu0 0.0
        %565 = vmatprep.subr.mxu0 0.0
        %566 = vmatpush1.msra.mxu0 0.0
        %567 = vmatprep.subr.mxu0 0.0
        %568 = vmatpush1.msra.mxu0 0.0
        %569 = vmatprep.subr.mxu0 0.0
        %570 = vmatpush1.msra.mxu0 0.0
        %571 = vmatprep.subr.mxu0 0.0
        %572 = vmatpush1.msra.mxu0 0.0
        %573 = vmatprep.subr.mxu0 0.0
        %574 = vmatpush1.msra.mxu0 0.0
        %575 = vmatprep.subr.mxu0 0.0
        %576 = vmatpush1.msra.mxu0 0.0
        %577 = vmatprep.subr.mxu0 0.0
        %578 = vmatpush1.msra.mxu0 0.0
        %579 = vmatprep.subr.mxu0 0.0
        %580 = vmatpush1.msra.mxu0 0.0
        %581 = vmatprep.subr.mxu0 0.0
        %582 = vmatpush1.msra.mxu0 0.0
        %583 = vmatprep.subr.mxu0 0.0
        %584 = vmatpush1.msra.mxu0 0.0
        %585 = vmatprep.subr.mxu0 0.0
        %586 = vmatpush1.msra.mxu0 0.0
        %587 = vmatprep.subr.mxu0 0.0
        %588 = vmatpush1.msra.mxu0 0.0
        %589 = vmatprep.subr.mxu0 0.0
        %590 = vmatpush1.msra.mxu0 0.0
        %591 = vmatprep.subr.mxu0 0.0
        %592 = vmatpush1.msra.mxu0 0.0
        %593 = vmatprep.subr.mxu0 0.0
        %594 = vmatpush1.msra.mxu0 0.0
        %595 = vmatprep.subr.mxu0 0.0
        %596 = vmatpush1.msra.mxu0 0.0
        %597 = vmatprep.subr.mxu0 0.0
        %598 = vmatpush1.msra.mxu0 0.0
        %599 = vmatprep.subr.mxu0 0.0
        %600 = vmatpush1.msra.mxu0 0.0
        %601 = vmatprep.subr.mxu0 0.0
        %602 = vmatpush1.msra.mxu0 0.0
        %603 = vmatprep.mubr.f32.mxu0 0.0
        %604 = vmatmul.mubr.f32.gmra.mrb[0].mxu0 %v526
        %v605 = vpop.f32.mrb[0].mxu0
        %v606 = vadd.f32 0.0, %v605
        %v607 = vpop.f32.mrb[0].mxu0
        %v608 = vadd.f32 0.0, %v607
        %609 = vmatprep.mubr.f32.mxu0 0.0
        %610 = vmatmul.mubr.f32.gmra.mrb[0].mxu0 %v528
        %v611 = vpop.f32.mrb[0].mxu0
        %v612 = vadd.f32 0.0, %v611
        %v613 = vpop.f32.mrb[0].mxu0
        %v614 = vadd.f32 0.0, %v613
        %615 = vmatprep.mubr.f32.mxu0 0.0
        %616 = vmatmul.mubr.f32.gmra.mrb[0].mxu0 %v530
        %v617 = vpop.f32.mrb[0].mxu0
        %v618 = vadd.f32 0.0, %v617
        %v619 = vpop.f32.mrb[0].mxu0
        %v620 = vadd.f32 0.0, %v619
        %621 = vdwg.mxu0
        %v622 = vsel %vm525, %v492, 0
        %v624 = vsel %vm525, %v493, 0
        %v626 = vsel %vm525, %v494, 0
        %v629 = vsel %vm532, %v502, 0
        %v632 = vsel %vm532, %v503, 0
        %634 = vmatprep.subr.mxu0 %v497
        %635 = vmatpush1.msra.mxu0 %v496
        %636 = vmatprep.subr.mxu0 %v499
        %637 = vmatpush1.msra.mxu0 %v498
        %638 = vmatprep.subr.mxu0 %v501
        %639 = vmatpush1.msra.mxu0 %v500
        %640 = vmatprep.subr.mxu0 %v632
        %641 = vmatpush1.msra.mxu0 %v629
        %642 = vmatprep.subr.mxu0 0.0
        %643 = vmatpush1.msra.mxu0 0.0
        %644 = vmatprep.subr.mxu0 0.0
        %645 = vmatpush1.msra.mxu0 0.0
        %646 = vmatprep.subr.mxu0 0.0
        %647 = vmatpush1.msra.mxu0 0.0
        %648 = vmatprep.subr.mxu0 0.0
        %649 = vmatpush1.msra.mxu0 0.0
        %650 = vmatprep.subr.mxu0 0.0
        %651 = vmatpush1.msra.mxu0 0.0
        %652 = vmatprep.subr.mxu0 0.0
        %653 = vmatpush1.msra.mxu0 0.0
        %654 = vmatprep.subr.mxu0 0.0
        %655 = vmatpush1.msra.mxu0 0.0
        %656 = vmatprep.subr.mxu0 0.0
        %657 = vmatpush1.msra.mxu0 0.0
        %658 = vmatprep.subr.mxu0 0.0
        %659 = vmatpush1.msra.mxu0 0.0
        %660 = vmatprep.subr.mxu0 0.0
        %661 = vmatpush1.msra.mxu0 0.0
        %662 = vmatprep.subr.mxu0 0.0
        %663 = vmatpush1.msra.mxu0 0.0
        %664 = vmatprep.subr.mxu0 0.0
        %665 = vmatpush1.msra.mxu0 0.0
        %666 = vmatprep.subr.mxu0 0.0
        %667 = vmatpush1.msra.mxu0 0.0
        %668 = vmatprep.subr.mxu0 0.0
        %669 = vmatpush1.msra.mxu0 0.0
        %670 = vmatprep.subr.mxu0 0.0
        %671 = vmatpush1.msra.mxu0 0.0
        %672 = vmatprep.subr.mxu0 0.0
        %673 = vmatpush1.msra.mxu0 0.0
        %674 = vmatprep.subr.mxu0 0.0
        %675 = vmatpush1.msra.mxu0 0.0
        %676 = vmatprep.subr.mxu0 0.0
        %677 = vmatpush1.msra.mxu0 0.0
        %678 = vmatprep.subr.mxu0 0.0
        %679 = vmatpush1.msra.mxu0 0.0
        %680 = vmatprep.subr.mxu0 0.0
        %681 = vmatpush1.msra.mxu0 0.0
        %682 = vmatprep.subr.mxu0 0.0
        %683 = vmatpush1.msra.mxu0 0.0
        %684 = vmatprep.subr.mxu0 0.0
        %685 = vmatpush1.msra.mxu0 0.0
        %686 = vmatprep.subr.mxu0 0.0
        %687 = vmatpush1.msra.mxu0 0.0
        %688 = vmatprep.subr.mxu0 0.0
        %689 = vmatpush1.msra.mxu0 0.0
        %690 = vmatprep.subr.mxu0 0.0
        %691 = vmatpush1.msra.mxu0 0.0
        %692 = vmatprep.subr.mxu0 0.0
        %693 = vmatpush1.msra.mxu0 0.0
        %694 = vmatprep.subr.mxu0 0.0
        %695 = vmatpush1.msra.mxu0 0.0
        %696 = vmatprep.subr.mxu0 0.0
        %697 = vmatpush1.msra.mxu0 0.0
        %698 = vmatprep.mubr.f32.mxu0 0.0
        %699 = vmatmul.mubr.f32.gmra.mrb[0].mxu0 %v622
        %v700 = vpop.f32.mrb[0].mxu0
        %v701 = vadd.f32 %v606, %v700
        %v702 = vpop.f32.mrb[0].mxu0
        %v703 = vadd.f32 %v608, %v702
        %704 = vmatprep.mubr.f32.mxu0 0.0
        %705 = vmatmul.mubr.f32.gmra.mrb[0].mxu0 %v624
        %v706 = vpop.f32.mrb[0].mxu0
        %v707 = vadd.f32 %v612, %v706
        %v708 = vpop.f32.mrb[0].mxu0
        %v709 = vadd.f32 %v614, %v708
        %710 = vmatprep.mubr.f32.mxu0 0.0
        %711 = vmatmul.mubr.f32.gmra.mrb[0].mxu0 %v626
        %v712 = vpop.f32.mrb[0].mxu0
        %v713 = vadd.f32 %v618, %v712
        %v714 = vpop.f32.mrb[0].mxu0
        %v715 = vadd.f32 %v620, %v714
        %716 = vdwg.mxu0
        %s717 = scalar_lea.vmem %s1, 128
        %v718 = vld [vmem:[%s717] sm:$0xff]
        %v719 = vld [vmem:[%s717 + $0x8] sm:$0xff]
        %v720 = vld [vmem:[%s717 + $0x10] sm:$0xff]
        %v721 = vld [vmem:[%s717 + $0x18] sm:$0xff]
        %v722 = vld [vmem:[%s717 + $0x20] sm:$0xff]
        %v723 = vld [vmem:[%s717 + $0x28] sm:$0xff]
        %v724 = vld [vmem:[%s717 + $0x30] sm:$0xf]
        %v725 = vld [vmem:[%s717 + $0x38] sm:$0xf]
        %vm726 = vcmask 1045504
        %v727 = vrot.slane %v492, 2
        %v728 = vrot.slane %v493, 2
        %v729 = vsel %vm726, %v727, %v728
        %v730 = vrot.slane %v494, 2
        %v731 = vsel %vm726, %v728, %v730
        %v732 = vrot.slane %v495, 2
        %v733 = vsel %vm726, %v730, %v732
        %v734 = vsel %vm525, %v729, 0
        %v736 = vsel %vm525, %v731, 0
        %v738 = vsel %vm525, %v733, 0
        %v741 = vsel %vm532, %v724, 0
        %v744 = vsel %vm532, %v725, 0
        %746 = vmatprep.subr.mxu0 %v719
        %747 = vmatpush1.msra.mxu0 %v718
        %748 = vmatprep.subr.mxu0 %v721
        %749 = vmatpush1.msra.mxu0 %v720
        %750 = vmatprep.subr.mxu0 %v723
        %751 = vmatpush1.msra.mxu0 %v722
        %752 = vmatprep.subr.mxu0 %v744
        %753 = vmatpush1.msra.mxu0 %v741
        %754 = vmatprep.subr.mxu0 0.0
        %755 = vmatpush1.msra.mxu0 0.0
        %756 = vmatprep.subr.mxu0 0.0
        %757 = vmatpush1.msra.mxu0 0.0
        %758 = vmatprep.subr.mxu0 0.0
        %759 = vmatpush1.msra.mxu0 0.0
        %760 = vmatprep.subr.mxu0 0.0
        %761 = vmatpush1.msra.mxu0 0.0
        %762 = vmatprep.subr.mxu0 0.0
        %763 = vmatpush1.msra.mxu0 0.0
        %764 = vmatprep.subr.mxu0 0.0
        %765 = vmatpush1.msra.mxu0 0.0
        %766 = vmatprep.subr.mxu0 0.0
        %767 = vmatpush1.msra.mxu0 0.0
        %768 = vmatprep.subr.mxu0 0.0
        %769 = vmatpush1.msra.mxu0 0.0
        %770 = vmatprep.subr.mxu0 0.0
        %771 = vmatpush1.msra.mxu0 0.0
        %772 = vmatprep.subr.mxu0 0.0
        %773 = vmatpush1.msra.mxu0 0.0
        %774 = vmatprep.subr.mxu0 0.0
        %775 = vmatpush1.msra.mxu0 0.0
        %776 = vmatprep.subr.mxu0 0.0
        %777 = vmatpush1.msra.mxu0 0.0
        %778 = vmatprep.subr.mxu0 0.0
        %779 = vmatpush1.msra.mxu0 0.0
        %780 = vmatprep.subr.mxu0 0.0
        %781 = vmatpush1.msra.mxu0 0.0
        %782 = vmatprep.subr.mxu0 0.0
        %783 = vmatpush1.msra.mxu0 0.0
        %784 = vmatprep.subr.mxu0 0.0
        %785 = vmatpush1.msra.mxu0 0.0
        %786 = vmatprep.subr.mxu0 0.0
        %787 = vmatpush1.msra.mxu0 0.0
        %788 = vmatprep.subr.mxu0 0.0
        %789 = vmatpush1.msra.mxu0 0.0
        %790 = vmatprep.subr.mxu0 0.0
        %791 = vmatpush1.msra.mxu0 0.0
        %792 = vmatprep.subr.mxu0 0.0
        %793 = vmatpush1.msra.mxu0 0.0
        %794 = vmatprep.subr.mxu0 0.0
        %795 = vmatpush1.msra.mxu0 0.0
        %796 = vmatprep.subr.mxu0 0.0
        %797 = vmatpush1.msra.mxu0 0.0
        %798 = vmatprep.subr.mxu0 0.0
        %799 = vmatpush1.msra.mxu0 0.0
        %800 = vmatprep.subr.mxu0 0.0
        %801 = vmatpush1.msra.mxu0 0.0
        %802 = vmatprep.subr.mxu0 0.0
        %803 = vmatpush1.msra.mxu0 0.0
        %804 = vmatprep.subr.mxu0 0.0
        %805 = vmatpush1.msra.mxu0 0.0
        %806 = vmatprep.subr.mxu0 0.0
        %807 = vmatpush1.msra.mxu0 0.0
        %808 = vmatprep.subr.mxu0 0.0
        %809 = vmatpush1.msra.mxu0 0.0
        %810 = vmatprep.mubr.f32.mxu0 0.0
        %811 = vmatmul.mubr.f32.gmra.mrb[0].mxu0 %v734
        %v812 = vpop.f32.mrb[0].mxu0
        %v813 = vadd.f32 0.0, %v812
        %v814 = vpop.f32.mrb[0].mxu0
        %v815 = vadd.f32 0.0, %v814
        %816 = vmatprep.mubr.f32.mxu0 0.0
        %817 = vmatmul.mubr.f32.gmra.mrb[0].mxu0 %v736
        %v818 = vpop.f32.mrb[0].mxu0
        %v819 = vadd.f32 0.0, %v818
        %v820 = vpop.f32.mrb[0].mxu0
        %v821 = vadd.f32 0.0, %v820
        %822 = vmatprep.mubr.f32.mxu0 0.0
        %823 = vmatmul.mubr.f32.gmra.mrb[0].mxu0 %v738
        %v824 = vpop.f32.mrb[0].mxu0
        %v825 = vadd.f32 0.0, %v824
        %v826 = vpop.f32.mrb[0].mxu0
        %v827 = vadd.f32 0.0, %v826
        %828 = vdwg.mxu0
        %v829 = vadd.f32 %v701, %v813
        %v830 = vadd.f32 %v703, %v815
        %v831 = vadd.f32 %v707, %v819
        %v832 = vadd.f32 %v709, %v821
        %v833 = vadd.f32 %v713, %v825
        %v834 = vadd.f32 %v715, %v827
        %s835 = scalar_lea.vmem %s1, 192
        %v836 = vld [vmem:[%s835] sm:$0xff]
        %v837 = vld [vmem:[%s835 + $0x8] sm:$0xff]
        %v838 = vld [vmem:[%s835 + $0x10] sm:$0xff]
        %v839 = vld [vmem:[%s835 + $0x18] sm:$0xff]
        %v840 = vld [vmem:[%s835 + $0x20] sm:$0xff]
        %v841 = vld [vmem:[%s835 + $0x28] sm:$0xff]
        %v842 = vld [vmem:[%s835 + $0x30] sm:$0xf]
        %v843 = vld [vmem:[%s835 + $0x38] sm:$0xf]
        %vm844 = vcmask 1044480
        %v845 = vrot.slane %v492, 3
        %v846 = vrot.slane %v493, 3
        %v847 = vsel %vm844, %v845, %v846
        %v848 = vrot.slane %v494, 3
        %v849 = vsel %vm844, %v846, %v848
        %v850 = vrot.slane %v495, 3
        %v851 = vsel %vm844, %v848, %v850
        %v852 = vsel %vm525, %v847, 0
        %v854 = vsel %vm525, %v849, 0
        %v856 = vsel %vm525, %v851, 0
        %v859 = vsel %vm532, %v842, 0
        %v862 = vsel %vm532, %v843, 0
        %864 = vmatprep.subr.mxu0 %v837
        %865 = vmatpush1.msra.mxu0 %v836
        %866 = vmatprep.subr.mxu0 %v839
        %867 = vmatpush1.msra.mxu0 %v838
        %868 = vmatprep.subr.mxu0 %v841
        %869 = vmatpush1.msra.mxu0 %v840
        %870 = vmatprep.subr.mxu0 %v862
        %871 = vmatpush1.msra.mxu0 %v859
        %872 = vmatprep.subr.mxu0 0.0
        %873 = vmatpush1.msra.mxu0 0.0
        %874 = vmatprep.subr.mxu0 0.0
        %875 = vmatpush1.msra.mxu0 0.0
        %876 = vmatprep.subr.mxu0 0.0
        %877 = vmatpush1.msra.mxu0 0.0
        %878 = vmatprep.subr.mxu0 0.0
        %879 = vmatpush1.msra.mxu0 0.0
        %880 = vmatprep.subr.mxu0 0.0
        %881 = vmatpush1.msra.mxu0 0.0
        %882 = vmatprep.subr.mxu0 0.0
        %883 = vmatpush1.msra.mxu0 0.0
        %884 = vmatprep.subr.mxu0 0.0
        %885 = vmatpush1.msra.mxu0 0.0
        %886 = vmatprep.subr.mxu0 0.0
        %887 = vmatpush1.msra.mxu0 0.0
        %888 = vmatprep.subr.mxu0 0.0
        %889 = vmatpush1.msra.mxu0 0.0
        %890 = vmatprep.subr.mxu0 0.0
        %891 = vmatpush1.msra.mxu0 0.0
        %892 = vmatprep.subr.mxu0 0.0
        %893 = vmatpush1.msra.mxu0 0.0
        %894 = vmatprep.subr.mxu0 0.0
        %895 = vmatpush1.msra.mxu0 0.0
        %896 = vmatprep.subr.mxu0 0.0
        %897 = vmatpush1.msra.mxu0 0.0
        %898 = vmatprep.subr.mxu0 0.0
        %899 = vmatpush1.msra.mxu0 0.0
        %900 = vmatprep.subr.mxu0 0.0
        %901 = vmatpush1.msra.mxu0 0.0
        %902 = vmatprep.subr.mxu0 0.0
        %903 = vmatpush1.msra.mxu0 0.0
        %904 = vmatprep.subr.mxu0 0.0
        %905 = vmatpush1.msra.mxu0 0.0
        %906 = vmatprep.subr.mxu0 0.0
        %907 = vmatpush1.msra.mxu0 0.0
        %908 = vmatprep.subr.mxu0 0.0
        %909 = vmatpush1.msra.mxu0 0.0
        %910 = vmatprep.subr.mxu0 0.0
        %911 = vmatpush1.msra.mxu0 0.0
        %912 = vmatprep.subr.mxu0 0.0
        %913 = vmatpush1.msra.mxu0 0.0
        %914 = vmatprep.subr.mxu0 0.0
        %915 = vmatpush1.msra.mxu0 0.0
        %916 = vmatprep.subr.mxu0 0.0
        %917 = vmatpush1.msra.mxu0 0.0
        %918 = vmatprep.subr.mxu0 0.0
        %919 = vmatpush1.msra.mxu0 0.0
        %920 = vmatprep.subr.mxu0 0.0
        %921 = vmatpush1.msra.mxu0 0.0
        %922 = vmatprep.subr.mxu0 0.0
        %923 = vmatpush1.msra.mxu0 0.0
        %924 = vmatprep.subr.mxu0 0.0
        %925 = vmatpush1.msra.mxu0 0.0
        %926 = vmatprep.subr.mxu0 0.0
        %927 = vmatpush1.msra.mxu0 0.0
        %928 = vmatprep.mubr.f32.mxu0 0.0
        %929 = vmatmul.mubr.f32.gmra.mrb[0].mxu0 %v852
        %v930 = vpop.f32.mrb[0].mxu0
        %v931 = vadd.f32 0.0, %v930
        %v932 = vpop.f32.mrb[0].mxu0
        %v933 = vadd.f32 0.0, %v932
        %934 = vmatprep.mubr.f32.mxu0 0.0
        %935 = vmatmul.mubr.f32.gmra.mrb[0].mxu0 %v854
        %v936 = vpop.f32.mrb[0].mxu0
        %v937 = vadd.f32 0.0, %v936
        %v938 = vpop.f32.mrb[0].mxu0
        %v939 = vadd.f32 0.0, %v938
        %940 = vmatprep.mubr.f32.mxu0 0.0
        %941 = vmatmul.mubr.f32.gmra.mrb[0].mxu0 %v856
        %v942 = vpop.f32.mrb[0].mxu0
        %v943 = vadd.f32 0.0, %v942
        %v944 = vpop.f32.mrb[0].mxu0
        %v945 = vadd.f32 0.0, %v944
        %946 = vdwg.mxu0
        %v947 = vadd.f32 %v829, %v931
        %v948 = vadd.f32 %v830, %v933
        %v949 = vadd.f32 %v831, %v937
        %v950 = vadd.f32 %v832, %v939
        %v951 = vadd.f32 %v833, %v943
        %v952 = vadd.f32 %v834, %v945
        %s953 = scalar_lea.vmem %s1, 256
        %v954 = vld [vmem:[%s953] sm:$0xff]
        %v955 = vld [vmem:[%s953 + $0x8] sm:$0xff]
        %v956 = vld [vmem:[%s953 + $0x10] sm:$0xff]
        %v957 = vld [vmem:[%s953 + $0x18] sm:$0xff]
        %v958 = vld [vmem:[%s953 + $0x20] sm:$0xff]
        %v959 = vld [vmem:[%s953 + $0x28] sm:$0xff]
        %v960 = vld [vmem:[%s953 + $0x30] sm:$0xf]
        %v961 = vld [vmem:[%s953 + $0x38] sm:$0xf]
        %v962 = vrot.slane %v492, 4
        %v963 = vrot.slane %v493, 4
        %v964 = vsel %vm532, %v962, %v963
        %v965 = vrot.slane %v494, 4
        %v966 = vsel %vm532, %v963, %v965
        %v967 = vrot.slane %v495, 4
        %v968 = vsel %vm532, %v965, %v967
        %v969 = vsel %vm525, %v964, 0
        %v971 = vsel %vm525, %v966, 0
        %v973 = vsel %vm525, %v968, 0
        %v976 = vsel %vm532, %v960, 0
        %v979 = vsel %vm532, %v961, 0
        %981 = vmatprep.subr.mxu0 %v955
        %982 = vmatpush1.msra.mxu0 %v954
        %983 = vmatprep.subr.mxu0 %v957
        %984 = vmatpush1.msra.mxu0 %v956
        %985 = vmatprep.subr.mxu0 %v959
        %986 = vmatpush1.msra.mxu0 %v958
        %987 = vmatprep.subr.mxu0 %v979
        %988 = vmatpush1.msra.mxu0 %v976
        %989 = vmatprep.subr.mxu0 0.0
        %990 = vmatpush1.msra.mxu0 0.0
        %991 = vmatprep.subr.mxu0 0.0
        %992 = vmatpush1.msra.mxu0 0.0
        %993 = vmatprep.subr.mxu0 0.0
        %994 = vmatpush1.msra.mxu0 0.0
        %995 = vmatprep.subr.mxu0 0.0
        %996 = vmatpush1.msra.mxu0 0.0
        %997 = vmatprep.subr.mxu0 0.0
        %998 = vmatpush1.msra.mxu0 0.0
        %999 = vmatprep.subr.mxu0 0.0
        %1000 = vmatpush1.msra.mxu0 0.0
        %1001 = vmatprep.subr.mxu0 0.0
        %1002 = vmatpush1.msra.mxu0 0.0
        %1003 = vmatprep.subr.mxu0 0.0
        %1004 = vmatpush1.msra.mxu0 0.0
        %1005 = vmatprep.subr.mxu0 0.0
        %1006 = vmatpush1.msra.mxu0 0.0
        %1007 = vmatprep.subr.mxu0 0.0
        %1008 = vmatpush1.msra.mxu0 0.0
        %1009 = vmatprep.subr.mxu0 0.0
        %1010 = vmatpush1.msra.mxu0 0.0
        %1011 = vmatprep.subr.mxu0 0.0
        %1012 = vmatpush1.msra.mxu0 0.0
        %1013 = vmatprep.subr.mxu0 0.0
        %1014 = vmatpush1.msra.mxu0 0.0
        %1015 = vmatprep.subr.mxu0 0.0
        %1016 = vmatpush1.msra.mxu0 0.0
        %1017 = vmatprep.subr.mxu0 0.0
        %1018 = vmatpush1.msra.mxu0 0.0
        %1019 = vmatprep.subr.mxu0 0.0
        %1020 = vmatpush1.msra.mxu0 0.0
        %1021 = vmatprep.subr.mxu0 0.0
        %1022 = vmatpush1.msra.mxu0 0.0
        %1023 = vmatprep.subr.mxu0 0.0
        %1024 = vmatpush1.msra.mxu0 0.0
        %1025 = vmatprep.subr.mxu0 0.0
        %1026 = vmatpush1.msra.mxu0 0.0
        %1027 = vmatprep.subr.mxu0 0.0
        %1028 = vmatpush1.msra.mxu0 0.0
        %1029 = vmatprep.subr.mxu0 0.0
        %1030 = vmatpush1.msra.mxu0 0.0
        %1031 = vmatprep.subr.mxu0 0.0
        %1032 = vmatpush1.msra.mxu0 0.0
        %1033 = vmatprep.subr.mxu0 0.0
        %1034 = vmatpush1.msra.mxu0 0.0
        %1035 = vmatprep.subr.mxu0 0.0
        %1036 = vmatpush1.msra.mxu0 0.0
        %1037 = vmatprep.subr.mxu0 0.0
        %1038 = vmatpush1.msra.mxu0 0.0
        %1039 = vmatprep.subr.mxu0 0.0
        %1040 = vmatpush1.msra.mxu0 0.0
        %1041 = vmatprep.subr.mxu0 0.0
        %1042 = vmatpush1.msra.mxu0 0.0
        %1043 = vmatprep.subr.mxu0 0.0
        %1044 = vmatpush1.msra.mxu0 0.0
        %1045 = vmatprep.mubr.f32.mxu0 0.0
        %1046 = vmatmul.mubr.f32.gmra.mrb[0].mxu0 %v969
        %v1047 = vpop.f32.mrb[0].mxu0
        %v1048 = vadd.f32 0.0, %v1047
        %v1049 = vpop.f32.mrb[0].mxu0
        %v1050 = vadd.f32 0.0, %v1049
        %1051 = vmatprep.mubr.f32.mxu0 0.0
        %1052 = vmatmul.mubr.f32.gmra.mrb[0].mxu0 %v971
        %v1053 = vpop.f32.mrb[0].mxu0
        %v1054 = vadd.f32 0.0, %v1053
        %v1055 = vpop.f32.mrb[0].mxu0
        %v1056 = vadd.f32 0.0, %v1055
        %1057 = vmatprep.mubr.f32.mxu0 0.0
        %1058 = vmatmul.mubr.f32.gmra.mrb[0].mxu0 %v973
        %v1059 = vpop.f32.mrb[0].mxu0
        %v1060 = vadd.f32 0.0, %v1059
        %v1061 = vpop.f32.mrb[0].mxu0
        %v1062 = vadd.f32 0.0, %v1061
        %1063 = vdwg.mxu0
        %v1064 = vadd.f32 %v947, %v1048
        %v1065 = vadd.f32 %v948, %v1050
        %v1066 = vadd.f32 %v949, %v1054
        %v1067 = vadd.f32 %v950, %v1056
        %v1068 = vadd.f32 %v951, %v1060
        %v1069 = vadd.f32 %v952, %v1062
        %v1070 = vld [vmem:[%s2] sm:$0x3]
        %v1072 = vlaneseq
        %v1073 = vshrl.u32 %v1072, 7
        %v1074 = vsub.s32 0, %v1073
        %v1075 = vrot.slane %v1070, %v1074
        %v1076 = vlaneseq
        %v1077 = vshrl.u32 %v1076, 7
        %v1078 = vsub.s32 1, %v1077
        %v1079 = vrot.slane %v1070, %v1078
        %v1082 = vadd.f32 %v1064, %v1075
        %v1083 = vadd.f32 %v1065, %v1079
        %v1084 = vadd.f32 %v1066, %v1075
        %v1085 = vadd.f32 %v1067, %v1079
        %v1086 = vadd.f32 %v1068, %v1075
        %v1087 = vadd.f32 %v1069, %v1079
        %v1088 = vmax.f32 %v1082, 0.0
        %v1089 = vmax.f32 %v1083, 0.0
        %v1090 = vmax.f32 %v1084, 0.0
        %v1091 = vmax.f32 %v1085, 0.0
        %v1092 = vmax.f32 %v1086, 0.0
        %v1093 = vmax.f32 %v1087, 0.0
        %v1094 = vld [vmem:[%s3] sm:$0xff]
        %v1095 = vld [vmem:[%s3 + $0x8] sm:$0xff]
        %v1096 = vld [vmem:[%s3 + $0x10] sm:$0xff]
        %v1097 = vld [vmem:[%s3 + $0x18] sm:$0xff]
        %v1098 = vld [vmem:[%s3 + $0x20] sm:$0xff]
        %v1099 = vld [vmem:[%s3 + $0x28] sm:$0xff]
        %v1100 = vld [vmem:[%s3 + $0x30] sm:$0xff]
        %v1101 = vld [vmem:[%s3 + $0x38] sm:$0xff]
        %v1102 = vld [vmem:[%s3 + $0x40] sm:$0xff]
        %v1103 = vld [vmem:[%s3 + $0x48] sm:$0xff]
        %v1104 = vld [vmem:[%s3 + $0x50] sm:$0xff]
        %v1105 = vld [vmem:[%s3 + $0x58] sm:$0xff]
        %v1106 = vld [vmem:[%s3 + $0x60] sm:$0xff]
        %v1107 = vld [vmem:[%s3 + $0x68] sm:$0xff]
        %v1108 = vld [vmem:[%s3 + $0x70] sm:$0xff]
        %v1109 = vld [vmem:[%s3 + $0x78] sm:$0xff]
        %v1110 = vld [vmem:[%s3 + $0x80] sm:$0xff]
        %v1111 = vld [vmem:[%s3 + $0x88] sm:$0xff]
        %vm1112 = vcmask 130048
        %v1114 = vsel %vm1112, %v1089, 0
        %v1117 = vsel %vm1112, %v1091, 0
        %v1120 = vsel %vm1112, %v1093, 0
        %1122 = vmatprep.subr.mxu0 0.0
        %1123 = vmatpush1.msra.mxu0 %v1094
        %1124 = vmatprep.subr.mxu0 0.0
        %1125 = vmatpush1.msra.mxu0 %v1095
        %1126 = vmatprep.subr.mxu0 0.0
        %1127 = vmatpush1.msra.mxu0 %v1096
        %1128 = vmatprep.subr.mxu0 0.0
        %1129 = vmatpush1.msra.mxu0 %v1097
        %1130 = vmatprep.subr.mxu0 0.0
        %1131 = vmatpush1.msra.mxu0 %v1098
        %1132 = vmatprep.subr.mxu0 0.0
        %1133 = vmatpush1.msra.mxu0 %v1099
        %1134 = vmatprep.subr.mxu0 0.0
        %1135 = vmatpush1.msra.mxu0 %v1100
        %1136 = vmatprep.subr.mxu0 0.0
        %1137 = vmatpush1.msra.mxu0 %v1101
        %1138 = vmatprep.subr.mxu0 0.0
        %1139 = vmatpush1.msra.mxu0 %v1102
        %1140 = vmatprep.subr.mxu0 0.0
        %1141 = vmatpush1.msra.mxu0 %v1103
        %1142 = vmatprep.subr.mxu0 0.0
        %1143 = vmatpush1.msra.mxu0 %v1104
        %1144 = vmatprep.subr.mxu0 0.0
        %1145 = vmatpush1.msra.mxu0 %v1105
        %1146 = vmatprep.subr.mxu0 0.0
        %1147 = vmatpush1.msra.mxu0 %v1106
        %1148 = vmatprep.subr.mxu0 0.0
        %1149 = vmatpush1.msra.mxu0 %v1107
        %1150 = vmatprep.subr.mxu0 0.0
        %1151 = vmatpush1.msra.mxu0 %v1108
        %1152 = vmatprep.subr.mxu0 0.0
        %1153 = vmatpush1.msra.mxu0 %v1109
        %1154 = vmatprep.subr.mxu0 0.0
        %1155 = vmatpush1.msra.mxu0 %v1110
        %1156 = vmatprep.subr.mxu0 0.0
        %1157 = vmatpush1.msra.mxu0 %v1111
        %1158 = vmatprep.subr.mxu0 0.0
        %1159 = vmatpush1.msra.mxu0 0.0
        %1160 = vmatprep.subr.mxu0 0.0
        %1161 = vmatpush1.msra.mxu0 0.0
        %1162 = vmatprep.subr.mxu0 0.0
        %1163 = vmatpush1.msra.mxu0 0.0
        %1164 = vmatprep.subr.mxu0 0.0
        %1165 = vmatpush1.msra.mxu0 0.0
        %1166 = vmatprep.subr.mxu0 0.0
        %1167 = vmatpush1.msra.mxu0 0.0
        %1168 = vmatprep.subr.mxu0 0.0
        %1169 = vmatpush1.msra.mxu0 0.0
        %1170 = vmatprep.subr.mxu0 0.0
        %1171 = vmatpush1.msra.mxu0 0.0
        %1172 = vmatprep.subr.mxu0 0.0
        %1173 = vmatpush1.msra.mxu0 0.0
        %1174 = vmatprep.subr.mxu0 0.0
        %1175 = vmatpush1.msra.mxu0 0.0
        %1176 = vmatprep.subr.mxu0 0.0
        %1177 = vmatpush1.msra.mxu0 0.0
        %1178 = vmatprep.subr.mxu0 0.0
        %1179 = vmatpush1.msra.mxu0 0.0
        %1180 = vmatprep.subr.mxu0 0.0
        %1181 = vmatpush1.msra.mxu0 0.0
        %1182 = vmatprep.subr.mxu0 0.0
        %1183 = vmatpush1.msra.mxu0 0.0
        %1184 = vmatprep.subr.mxu0 0.0
        %1185 = vmatpush1.msra.mxu0 0.0
        %1186 = vmatprep.mubr.f32.mxu0 %v1114
        %1187 = vmatmul.mubr.f32.gmra.mrb[0].mxu0 %v1088
        %v1188 = vpop.f32.mrb[0].mxu0
        %v1189 = vadd.f32 0.0, %v1188
        %v1190 = vpop.f32.mrb[0].mxu0
        %1191 = vmatprep.mubr.f32.mxu0 %v1117
        %1192 = vmatmul.mubr.f32.gmra.mrb[0].mxu0 %v1090
        %v1193 = vpop.f32.mrb[0].mxu0
        %v1194 = vadd.f32 0.0, %v1193
        %v1195 = vpop.f32.mrb[0].mxu0
        %1196 = vmatprep.mubr.f32.mxu0 %v1120
        %1197 = vmatmul.mubr.f32.gmra.mrb[0].mxu0 %v1092
        %v1198 = vpop.f32.mrb[0].mxu0
        %v1199 = vadd.f32 0.0, %v1198
        %v1200 = vpop.f32.mrb[0].mxu0
        %1201 = vdwg.mxu0
        %v1202 = vld [vmem:[%s4] sm:$0xff]
        %v1203 = vld [vmem:[%s4 + $0x8] sm:$0xff]
        %v1204 = vld [vmem:[%s4 + $0x10] sm:$0xff]
        %v1205 = vld [vmem:[%s4 + $0x18] sm:$0xff]
        %v1206 = vld [vmem:[%s4 + $0x20] sm:$0xff]
        %v1207 = vld [vmem:[%s4 + $0x28] sm:$0xff]
        %v1208 = vld [vmem:[%s4 + $0x30] sm:$0xff]
        %v1209 = vld [vmem:[%s4 + $0x38] sm:$0xff]
        %v1210 = vld [vmem:[%s4 + $0x40] sm:$0xff]
        %v1211 = vld [vmem:[%s4 + $0x48] sm:$0xff]
        %v1212 = vld [vmem:[%s4 + $0x50] sm:$0xff]
        %v1213 = vld [vmem:[%s4 + $0x58] sm:$0xff]
        %v1214 = vld [vmem:[%s4 + $0x60] sm:$0xff]
        %v1215 = vld [vmem:[%s4 + $0x68] sm:$0xff]
        %v1216 = vld [vmem:[%s4 + $0x70] sm:$0xff]
        %v1217 = vld [vmem:[%s4 + $0x78] sm:$0xff]
        %v1218 = vld [vmem:[%s4 + $0x80] sm:$0xff]
        %v1219 = vld [vmem:[%s4 + $0x88] sm:$0xff]
        %1220 = vmatprep.subr.mxu0 0.0
        %1221 = vmatpush1.msra.mxu0 %v1202
        %1222 = vmatprep.subr.mxu0 0.0
        %1223 = vmatpush1.msra.mxu0 %v1203
        %1224 = vmatprep.subr.mxu0 0.0
        %1225 = vmatpush1.msra.mxu0 %v1204
        %1226 = vmatprep.subr.mxu0 0.0
        %1227 = vmatpush1.msra.mxu0 %v1205
        %1228 = vmatprep.subr.mxu0 0.0
        %1229 = vmatpush1.msra.mxu0 %v1206
        %1230 = vmatprep.subr.mxu0 0.0
        %1231 = vmatpush1.msra.mxu0 %v1207
        %1232 = vmatprep.subr.mxu0 0.0
        %1233 = vmatpush1.msra.mxu0 %v1208
        %1234 = vmatprep.subr.mxu0 0.0
        %1235 = vmatpush1.msra.mxu0 %v1209
        %1236 = vmatprep.subr.mxu0 0.0
        %1237 = vmatpush1.msra.mxu0 %v1210
        %1238 = vmatprep.subr.mxu0 0.0
        %1239 = vmatpush1.msra.mxu0 %v1211
        %1240 = vmatprep.subr.mxu0 0.0
        %1241 = vmatpush1.msra.mxu0 %v1212
        %1242 = vmatprep.subr.mxu0 0.0
        %1243 = vmatpush1.msra.mxu0 %v1213
        %1244 = vmatprep.subr.mxu0 0.0
        %1245 = vmatpush1.msra.mxu0 %v1214
        %1246 = vmatprep.subr.mxu0 0.0
        %1247 = vmatpush1.msra.mxu0 %v1215
        %1248 = vmatprep.subr.mxu0 0.0
        %1249 = vmatpush1.msra.mxu0 %v1216
        %1250 = vmatprep.subr.mxu0 0.0
        %1251 = vmatpush1.msra.mxu0 %v1217
        %1252 = vmatprep.subr.mxu0 0.0
        %1253 = vmatpush1.msra.mxu0 %v1218
        %1254 = vmatprep.subr.mxu0 0.0
        %1255 = vmatpush1.msra.mxu0 %v1219
        %1256 = vmatprep.subr.mxu0 0.0
        %1257 = vmatpush1.msra.mxu0 0.0
        %1258 = vmatprep.subr.mxu0 0.0
        %1259 = vmatpush1.msra.mxu0 0.0
        %1260 = vmatprep.subr.mxu0 0.0
        %1261 = vmatpush1.msra.mxu0 0.0
        %1262 = vmatprep.subr.mxu0 0.0
        %1263 = vmatpush1.msra.mxu0 0.0
        %1264 = vmatprep.subr.mxu0 0.0
        %1265 = vmatpush1.msra.mxu0 0.0
        %1266 = vmatprep.subr.mxu0 0.0
        %1267 = vmatpush1.msra.mxu0 0.0
        %1268 = vmatprep.subr.mxu0 0.0
        %1269 = vmatpush1.msra.mxu0 0.0
        %1270 = vmatprep.subr.mxu0 0.0
        %1271 = vmatpush1.msra.mxu0 0.0
        %1272 = vmatprep.subr.mxu0 0.0
        %1273 = vmatpush1.msra.mxu0 0.0
        %1274 = vmatprep.subr.mxu0 0.0
        %1275 = vmatpush1.msra.mxu0 0.0
        %1276 = vmatprep.subr.mxu0 0.0
        %1277 = vmatpush1.msra.mxu0 0.0
        %1278 = vmatprep.subr.mxu0 0.0
        %1279 = vmatpush1.msra.mxu0 0.0
        %1280 = vmatprep.subr.mxu0 0.0
        %1281 = vmatpush1.msra.mxu0 0.0
        %1282 = vmatprep.subr.mxu0 0.0
        %1283 = vmatpush1.msra.mxu0 0.0
        %1284 = vmatprep.mubr.f32.mxu0 %v1114
        %1285 = vmatmul.mubr.f32.gmra.mrb[0].mxu0 %v1088
        %v1286 = vpop.f32.mrb[0].mxu0
        %v1287 = vadd.f32 0.0, %v1286
        %v1288 = vpop.f32.mrb[0].mxu0
        %1289 = vmatprep.mubr.f32.mxu0 %v1117
        %1290 = vmatmul.mubr.f32.gmra.mrb[0].mxu0 %v1090
        %v1291 = vpop.f32.mrb[0].mxu0
        %v1292 = vadd.f32 0.0, %v1291
        %v1293 = vpop.f32.mrb[0].mxu0
        %1294 = vmatprep.mubr.f32.mxu0 %v1120
        %1295 = vmatmul.mubr.f32.gmra.mrb[0].mxu0 %v1092
        %v1296 = vpop.f32.mrb[0].mxu0
        %v1297 = vadd.f32 0.0, %v1296
        %v1298 = vpop.f32.mrb[0].mxu0
        %1299 = vdwg.mxu0
        %v1300 = vmax.f32 %v1189, %v1287
        %v1301 = vmax.f32 %v1194, %v1292
        %v1302 = vmax.f32 %v1199, %v1297
        %v1303 = vld [vmem:[%s5] sm:$0xff]
        %v1304 = vld [vmem:[%s5 + $0x8] sm:$0xf]
        %vm1305 = vcmask 195584
        %v1307 = vsel %vm1305, %v1303, 0
        %v1310 = vsel %vm1305, %v1304, 0
        %1312 = vmatprep.subr.mxu0 0.0
        %1313 = vmatpush1.msra.mxu0 %v1300
        %1314 = vmatprep.subr.mxu0 0.0
        %1315 = vmatpush1.msra.mxu0 %v1301
        %1316 = vmatprep.subr.mxu0 0.0
        %1317 = vmatpush1.msra.mxu0 %v1302
        %1318 = vmatprep.subr.mxu0 0.0
        %1319 = vmatpush1.msra.mxu0 0.0
        %1320 = vmatprep.subr.mxu0 0.0
        %1321 = vmatpush1.msra.mxu0 0.0
        %1322 = vmatprep.subr.mxu0 0.0
        %1323 = vmatpush1.msra.mxu0 0.0
        %1324 = vmatprep.subr.mxu0 0.0
        %1325 = vmatpush1.msra.mxu0 0.0
        %1326 = vmatprep.subr.mxu0 0.0
        %1327 = vmatpush1.msra.mxu0 0.0
        %1328 = vmatprep.subr.mxu0 0.0
        %1329 = vmatpush1.msra.mxu0 0.0
        %1330 = vmatprep.subr.mxu0 0.0
        %1331 = vmatpush1.msra.mxu0 0.0
        %1332 = vmatprep.subr.mxu0 0.0
        %1333 = vmatpush1.msra.mxu0 0.0
        %1334 = vmatprep.subr.mxu0 0.0
        %1335 = vmatpush1.msra.mxu0 0.0
        %1336 = vmatprep.subr.mxu0 0.0
        %1337 = vmatpush1.msra.mxu0 0.0
        %1338 = vmatprep.subr.mxu0 0.0
        %1339 = vmatpush1.msra.mxu0 0.0
        %1340 = vmatprep.subr.mxu0 0.0
        %1341 = vmatpush1.msra.mxu0 0.0
        %1342 = vmatprep.subr.mxu0 0.0
        %1343 = vmatpush1.msra.mxu0 0.0
        %1344 = vmatprep.subr.mxu0 0.0
        %1345 = vmatpush1.msra.mxu0 0.0
        %1346 = vmatprep.subr.mxu0 0.0
        %1347 = vmatpush1.msra.mxu0 0.0
        %1348 = vmatprep.subr.mxu0 0.0
        %1349 = vmatpush1.msra.mxu0 0.0
        %1350 = vmatprep.subr.mxu0 0.0
        %1351 = vmatpush1.msra.mxu0 0.0
        %1352 = vmatprep.subr.mxu0 0.0
        %1353 = vmatpush1.msra.mxu0 0.0
        %1354 = vmatprep.subr.mxu0 0.0
        %1355 = vmatpush1.msra.mxu0 0.0
        %1356 = vmatprep.subr.mxu0 0.0
        %1357 = vmatpush1.msra.mxu0 0.0
        %1358 = vmatprep.subr.mxu0 0.0
        %1359 = vmatpush1.msra.mxu0 0.0
        %1360 = vmatprep.subr.mxu0 0.0
        %1361 = vmatpush1.msra.mxu0 0.0
        %1362 = vmatprep.subr.mxu0 0.0
        %1363 = vmatpush1.msra.mxu0 0.0
        %1364 = vmatprep.subr.mxu0 0.0
        %1365 = vmatpush1.msra.mxu0 0.0
        %1366 = vmatprep.subr.mxu0 0.0
        %1367 = vmatpush1.msra.mxu0 0.0
        %1368 = vmatprep.subr.mxu0 0.0
        %1369 = vmatpush1.msra.mxu0 0.0
        %1370 = vmatprep.subr.mxu0 0.0
        %1371 = vmatpush1.msra.mxu0 0.0
        %1372 = vmatprep.subr.mxu0 0.0
        %1373 = vmatpush1.msra.mxu0 0.0
        %1374 = vmatprep.subr.mxu0 0.0
        %1375 = vmatpush1.msra.mxu0 0.0
        %1376 = vmatprep.mubr.f32.mxu0 0.0
        %1377 = vmatmul.mubr.f32.gmra.mrb[0].mxu0 %v1307
        %v1378 = vpop.f32.mrb[0].mxu0
        %v1379 = vadd.f32 0.0, %v1378
        %v1380 = vpop.f32.mrb[0].mxu0
        %1381 = vmatprep.mubr.f32.mxu0 0.0
        %1382 = vmatmul.mubr.f32.gmra.mrb[0].mxu0 %v1310
        %v1383 = vpop.f32.mrb[0].mxu0
        %v1384 = vadd.f32 0.0, %v1383
        %v1385 = vpop.f32.mrb[0].mxu0
        %1386 = vdwg.mxu0
        %v1387 = vld [vmem:[%s6] sm:$0xff]
        %v1388 = vld [vmem:[%s6 + $0x8] sm:$0xf]
        %v1390 = vsel %vm1305, %v1387, 0
        %v1393 = vsel %vm1305, %v1388, 0
        %1395 = vmatprep.subr.mxu0 0.0
        %1396 = vmatpush1.msra.mxu0 %v1300
        %1397 = vmatprep.subr.mxu0 0.0
        %1398 = vmatpush1.msra.mxu0 %v1301
        %1399 = vmatprep.subr.mxu0 0.0
        %1400 = vmatpush1.msra.mxu0 %v1302
        %1401 = vmatprep.subr.mxu0 0.0
        %1402 = vmatpush1.msra.mxu0 0.0
        %1403 = vmatprep.subr.mxu0 0.0
        %1404 = vmatpush1.msra.mxu0 0.0
        %1405 = vmatprep.subr.mxu0 0.0
        %1406 = vmatpush1.msra.mxu0 0.0
        %1407 = vmatprep.subr.mxu0 0.0
        %1408 = vmatpush1.msra.mxu0 0.0
        %1409 = vmatprep.subr.mxu0 0.0
        %1410 = vmatpush1.msra.mxu0 0.0
        %1411 = vmatprep.subr.mxu0 0.0
        %1412 = vmatpush1.msra.mxu0 0.0
        %1413 = vmatprep.subr.mxu0 0.0
        %1414 = vmatpush1.msra.mxu0 0.0
        %1415 = vmatprep.subr.mxu0 0.0
        %1416 = vmatpush1.msra.mxu0 0.0
        %1417 = vmatprep.subr.mxu0 0.0
        %1418 = vmatpush1.msra.mxu0 0.0
        %1419 = vmatprep.subr.mxu0 0.0
        %1420 = vmatpush1.msra.mxu0 0.0
        %1421 = vmatprep.subr.mxu0 0.0
        %1422 = vmatpush1.msra.mxu0 0.0
        %1423 = vmatprep.subr.mxu0 0.0
        %1424 = vmatpush1.msra.mxu0 0.0
        %1425 = vmatprep.subr.mxu0 0.0
        %1426 = vmatpush1.msra.mxu0 0.0
        %1427 = vmatprep.subr.mxu0 0.0
        %1428 = vmatpush1.msra.mxu0 0.0
        %1429 = vmatprep.subr.mxu0 0.0
        %1430 = vmatpush1.msra.mxu0 0.0
        %1431 = vmatprep.subr.mxu0 0.0
        %1432 = vmatpush1.msra.mxu0 0.0
        %1433 = vmatprep.subr.mxu0 0.0
        %1434 = vmatpush1.msra.mxu0 0.0
        %1435 = vmatprep.subr.mxu0 0.0
        %1436 = vmatpush1.msra.mxu0 0.0
        %1437 = vmatprep.subr.mxu0 0.0
        %1438 = vmatpush1.msra.mxu0 0.0
        %1439 = vmatprep.subr.mxu0 0.0
        %1440 = vmatpush1.msra.mxu0 0.0
        %1441 = vmatprep.subr.mxu0 0.0
        %1442 = vmatpush1.msra.mxu0 0.0
        %1443 = vmatprep.subr.mxu0 0.0
        %1444 = vmatpush1.msra.mxu0 0.0
        %1445 = vmatprep.subr.mxu0 0.0
        %1446 = vmatpush1.msra.mxu0 0.0
        %1447 = vmatprep.subr.mxu0 0.0
        %1448 = vmatpush1.msra.mxu0 0.0
        %1449 = vmatprep.subr.mxu0 0.0
        %1450 = vmatpush1.msra.mxu0 0.0
        %1451 = vmatprep.subr.mxu0 0.0
        %1452 = vmatpush1.msra.mxu0 0.0
        %1453 = vmatprep.subr.mxu0 0.0
        %1454 = vmatpush1.msra.mxu0 0.0
        %1455 = vmatprep.subr.mxu0 0.0
        %1456 = vmatpush1.msra.mxu0 0.0
        %1457 = vmatprep.subr.mxu0 0.0
        %1458 = vmatpush1.msra.mxu0 0.0
        %1459 = vmatprep.mubr.f32.mxu0 0.0
        %1460 = vmatmul.mubr.f32.gmra.mrb[0].mxu0 %v1390
        %v1461 = vpop.f32.mrb[0].mxu0
        %v1462 = vadd.f32 0.0, %v1461
        %v1463 = vpop.f32.mrb[0].mxu0
        %1464 = vmatprep.mubr.f32.mxu0 0.0
        %1465 = vmatmul.mubr.f32.gmra.mrb[0].mxu0 %v1393
        %v1466 = vpop.f32.mrb[0].mxu0
        %v1467 = vadd.f32 0.0, %v1466
        %v1468 = vpop.f32.mrb[0].mxu0
        %1469 = vdwg.mxu0
        %v1470 = vmax.f32 %v1379, %v1462
        %v1471 = vmax.f32 %v1384, %v1467
        %v1472 = vld [vmem:[%s7] sm:$0xff]
        %v1473 = vld [vmem:[%s7 + $0x8] sm:$0xff]
        %v1474 = vld [vmem:[%s7 + $0x10] sm:$0xff]
        %v1475 = vld [vmem:[%s7 + $0x18] sm:$0xff]
        %v1476 = vld [vmem:[%s7 + $0x20] sm:$0xff]
        %v1477 = vld [vmem:[%s7 + $0x28] sm:$0xff]
        %v1478 = vld [vmem:[%s7 + $0x30] sm:$0xff]
        %v1479 = vld [vmem:[%s7 + $0x38] sm:$0xff]
        %v1480 = vld [vmem:[%s7 + $0x40] sm:$0xff]
        %s1481 = scalar_lea.vmem %s7, 72
        %v1482 = vld [vmem:[%s1481] sm:$0xff]
        %v1483 = vld [vmem:[%s1481 + $0x8] sm:$0xff]
        %v1484 = vld [vmem:[%s1481 + $0x10] sm:$0xff]
        %v1485 = vld [vmem:[%s1481 + $0x18] sm:$0xff]
        %v1486 = vld [vmem:[%s1481 + $0x20] sm:$0xff]
        %v1487 = vld [vmem:[%s1481 + $0x28] sm:$0xff]
        %v1488 = vld [vmem:[%s1481 + $0x30] sm:$0xff]
        %v1489 = vld [vmem:[%s1481 + $0x38] sm:$0xff]
        %v1490 = vld [vmem:[%s1481 + $0x40] sm:$0xff]
        %v1493 = vrot.slane %v1470, 1
        %v1494 = vrot.slane %v1471, 1
        %v1495 = vsel %vm517, %v1493, %v1494
        %vm1496 = vcmask 588800
        %v1497 = vsel %vm1496, %v1495, 0
        %1499 = vmatprep.subr.mxu0 0.0
        %1500 = vmatpush1.msra.mxu0 %v1482
        %1501 = vmatprep.subr.mxu0 0.0
        %1502 = vmatpush1.msra.mxu0 %v1483
        %1503 = vmatprep.subr.mxu0 0.0
        %1504 = vmatpush1.msra.mxu0 %v1484
        %1505 = vmatprep.subr.mxu0 0.0
        %1506 = vmatpush1.msra.mxu0 %v1485
        %1507 = vmatprep.subr.mxu0 0.0
        %1508 = vmatpush1.msra.mxu0 %v1486
        %1509 = vmatprep.subr.mxu0 0.0
        %1510 = vmatpush1.msra.mxu0 %v1487
        %1511 = vmatprep.subr.mxu0 0.0
        %1512 = vmatpush1.msra.mxu0 %v1488
        %1513 = vmatprep.subr.mxu0 0.0
        %1514 = vmatpush1.msra.mxu0 %v1489
        %1515 = vmatprep.subr.mxu0 0.0
        %1516 = vmatpush1.msra.mxu0 %v1490
        %1517 = vmatprep.subr.mxu0 0.0
        %1518 = vmatpush1.msra.mxu0 0.0
        %1519 = vmatprep.subr.mxu0 0.0
        %1520 = vmatpush1.msra.mxu0 0.0
        %1521 = vmatprep.subr.mxu0 0.0
        %1522 = vmatpush1.msra.mxu0 0.0
        %1523 = vmatprep.subr.mxu0 0.0
        %1524 = vmatpush1.msra.mxu0 0.0
        %1525 = vmatprep.subr.mxu0 0.0
        %1526 = vmatpush1.msra.mxu0 0.0
        %1527 = vmatprep.subr.mxu0 0.0
        %1528 = vmatpush1.msra.mxu0 0.0
        %1529 = vmatprep.subr.mxu0 0.0
        %1530 = vmatpush1.msra.mxu0 0.0
        %1531 = vmatprep.subr.mxu0 0.0
        %1532 = vmatpush1.msra.mxu0 0.0
        %1533 = vmatprep.subr.mxu0 0.0
        %1534 = vmatpush1.msra.mxu0 0.0
        %1535 = vmatprep.subr.mxu0 0.0
        %1536 = vmatpush1.msra.mxu0 0.0
        %1537 = vmatprep.subr.mxu0 0.0
        %1538 = vmatpush1.msra.mxu0 0.0
        %1539 = vmatprep.subr.mxu0 0.0
        %1540 = vmatpush1.msra.mxu0 0.0
        %1541 = vmatprep.subr.mxu0 0.0
        %1542 = vmatpush1.msra.mxu0 0.0
        %1543 = vmatprep.subr.mxu0 0.0
        %1544 = vmatpush1.msra.mxu0 0.0
        %1545 = vmatprep.subr.mxu0 0.0
        %1546 = vmatpush1.msra.mxu0 0.0
        %1547 = vmatprep.subr.mxu0 0.0
        %1548 = vmatpush1.msra.mxu0 0.0
        %1549 = vmatprep.subr.mxu0 0.0
        %1550 = vmatpush1.msra.mxu0 0.0
        %1551 = vmatprep.subr.mxu0 0.0
        %1552 = vmatpush1.msra.mxu0 0.0
        %1553 = vmatprep.subr.mxu0 0.0
        %1554 = vmatpush1.msra.mxu0 0.0
        %1555 = vmatprep.subr.mxu0 0.0
        %1556 = vmatpush1.msra.mxu0 0.0
        %1557 = vmatprep.subr.mxu0 0.0
        %1558 = vmatpush1.msra.mxu0 0.0
        %1559 = vmatprep.subr.mxu0 0.0
        %1560 = vmatpush1.msra.mxu0 0.0
        %1561 = vmatprep.subr.mxu0 0.0
        %1562 = vmatpush1.msra.mxu0 0.0
        %1563 = vmatprep.mubr.f32.mxu0 0.0
        %1564 = vmatmul.mubr.f32.gmra.mrb[0].mxu0 %v1497
        %v1565 = vpop.f32.mrb[0].mxu0
        %v1566 = vadd.f32 0.0, %v1565
        %v1567 = vpop.f32.mrb[0].mxu0
        %1568 = vdwg.mxu0
        %v1569 = vsel %vm1496, %v1470, 0
        %1571 = vmatprep.subr.mxu0 0.0
        %1572 = vmatpush1.msra.mxu0 %v1472
        %1573 = vmatprep.subr.mxu0 0.0
        %1574 = vmatpush1.msra.mxu0 %v1473
        %1575 = vmatprep.subr.mxu0 0.0
        %1576 = vmatpush1.msra.mxu0 %v1474
        %1577 = vmatprep.subr.mxu0 0.0
        %1578 = vmatpush1.msra.mxu0 %v1475
        %1579 = vmatprep.subr.mxu0 0.0
        %1580 = vmatpush1.msra.mxu0 %v1476
        %1581 = vmatprep.subr.mxu0 0.0
        %1582 = vmatpush1.msra.mxu0 %v1477
        %1583 = vmatprep.subr.mxu0 0.0
        %1584 = vmatpush1.msra.mxu0 %v1478
        %1585 = vmatprep.subr.mxu0 0.0
        %1586 = vmatpush1.msra.mxu0 %v1479
        %1587 = vmatprep.subr.mxu0 0.0
        %1588 = vmatpush1.msra.mxu0 %v1480
        %1589 = vmatprep.subr.mxu0 0.0
        %1590 = vmatpush1.msra.mxu0 0.0
        %1591 = vmatprep.subr.mxu0 0.0
        %1592 = vmatpush1.msra.mxu0 0.0
        %1593 = vmatprep.subr.mxu0 0.0
        %1594 = vmatpush1.msra.mxu0 0.0
        %1595 = vmatprep.subr.mxu0 0.0
        %1596 = vmatpush1.msra.mxu0 0.0
        %1597 = vmatprep.subr.mxu0 0.0
        %1598 = vmatpush1.msra.mxu0 0.0
        %1599 = vmatprep.subr.mxu0 0.0
        %1600 = vmatpush1.msra.mxu0 0.0
        %1601 = vmatprep.subr.mxu0 0.0
        %1602 = vmatpush1.msra.mxu0 0.0
        %1603 = vmatprep.subr.mxu0 0.0
        %1604 = vmatpush1.msra.mxu0 0.0
        %1605 = vmatprep.subr.mxu0 0.0
        %1606 = vmatpush1.msra.mxu0 0.0
        %1607 = vmatprep.subr.mxu0 0.0
        %1608 = vmatpush1.msra.mxu0 0.0
        %1609 = vmatprep.subr.mxu0 0.0
        %1610 = vmatpush1.msra.mxu0 0.0
        %1611 = vmatprep.subr.mxu0 0.0
        %1612 = vmatpush1.msra.mxu0 0.0
        %1613 = vmatprep.subr.mxu0 0.0
        %1614 = vmatpush1.msra.mxu0 0.0
        %1615 = vmatprep.subr.mxu0 0.0
        %1616 = vmatpush1.msra.mxu0 0.0
        %1617 = vmatprep.subr.mxu0 0.0
        %1618 = vmatpush1.msra.mxu0 0.0
        %1619 = vmatprep.subr.mxu0 0.0
        %1620 = vmatpush1.msra.mxu0 0.0
        %1621 = vmatprep.subr.mxu0 0.0
        %1622 = vmatpush1.msra.mxu0 0.0
        %1623 = vmatprep.subr.mxu0 0.0
        %1624 = vmatpush1.msra.mxu0 0.0
        %1625 = vmatprep.subr.mxu0 0.0
        %1626 = vmatpush1.msra.mxu0 0.0
        %1627 = vmatprep.subr.mxu0 0.0
        %1628 = vmatpush1.msra.mxu0 0.0
        %1629 = vmatprep.subr.mxu0 0.0
        %1630 = vmatpush1.msra.mxu0 0.0
        %1631 = vmatprep.subr.mxu0 0.0
        %1632 = vmatpush1.msra.mxu0 0.0
        %1633 = vmatprep.subr.mxu0 0.0
        %1634 = vmatpush1.msra.mxu0 0.0
        %1635 = vmatprep.mubr.f32.mxu0 0.0
        %1636 = vmatmul.mubr.f32.gmra.mrb[0].mxu0 %v1569
        %v1637 = vpop.f32.mrb[0].mxu0
        %v1638 = vadd.f32 %v1566, %v1637
        %v1639 = vpop.f32.mrb[0].mxu0
        %1640 = vdwg.mxu0
        %s1641 = scalar_lea.vmem %s7, 144
        %v1642 = vld [vmem:[%s1641] sm:$0xff]
        %v1643 = vld [vmem:[%s1641 + $0x8] sm:$0xff]
        %v1644 = vld [vmem:[%s1641 + $0x10] sm:$0xff]
        %v1645 = vld [vmem:[%s1641 + $0x18] sm:$0xff]
        %v1646 = vld [vmem:[%s1641 + $0x20] sm:$0xff]
        %v1647 = vld [vmem:[%s1641 + $0x28] sm:$0xff]
        %v1648 = vld [vmem:[%s1641 + $0x30] sm:$0xff]
        %v1649 = vld [vmem:[%s1641 + $0x38] sm:$0xff]
        %v1650 = vld [vmem:[%s1641 + $0x40] sm:$0xff]
        %v1651 = vrot.slane %v1470, 2
        %v1652 = vrot.slane %v1471, 2
        %v1653 = vsel %vm726, %v1651, %v1652
        %v1654 = vsel %vm1496, %v1653, 0
        %1656 = vmatprep.subr.mxu0 0.0
        %1657 = vmatpush1.msra.mxu0 %v1642
        %1658 = vmatprep.subr.mxu0 0.0
        %1659 = vmatpush1.msra.mxu0 %v1643
        %1660 = vmatprep.subr.mxu0 0.0
        %1661 = vmatpush1.msra.mxu0 %v1644
        %1662 = vmatprep.subr.mxu0 0.0
        %1663 = vmatpush1.msra.mxu0 %v1645
        %1664 = vmatprep.subr.mxu0 0.0
        %1665 = vmatpush1.msra.mxu0 %v1646
        %1666 = vmatprep.subr.mxu0 0.0
        %1667 = vmatpush1.msra.mxu0 %v1647
        %1668 = vmatprep.subr.mxu0 0.0
        %1669 = vmatpush1.msra.mxu0 %v1648
        %1670 = vmatprep.subr.mxu0 0.0
        %1671 = vmatpush1.msra.mxu0 %v1649
        %1672 = vmatprep.subr.mxu0 0.0
        %1673 = vmatpush1.msra.mxu0 %v1650
        %1674 = vmatprep.subr.mxu0 0.0
        %1675 = vmatpush1.msra.mxu0 0.0
        %1676 = vmatprep.subr.mxu0 0.0
        %1677 = vmatpush1.msra.mxu0 0.0
        %1678 = vmatprep.subr.mxu0 0.0
        %1679 = vmatpush1.msra.mxu0 0.0
        %1680 = vmatprep.subr.mxu0 0.0
        %1681 = vmatpush1.msra.mxu0 0.0
        %1682 = vmatprep.subr.mxu0 0.0
        %1683 = vmatpush1.msra.mxu0 0.0
        %1684 = vmatprep.subr.mxu0 0.0
        %1685 = vmatpush1.msra.mxu0 0.0
        %1686 = vmatprep.subr.mxu0 0.0
        %1687 = vmatpush1.msra.mxu0 0.0
        %1688 = vmatprep.subr.mxu0 0.0
        %1689 = vmatpush1.msra.mxu0 0.0
        %1690 = vmatprep.subr.mxu0 0.0
        %1691 = vmatpush1.msra.mxu0 0.0
        %1692 = vmatprep.subr.mxu0 0.0
        %1693 = vmatpush1.msra.mxu0 0.0
        %1694 = vmatprep.subr.mxu0 0.0
        %1695 = vmatpush1.msra.mxu0 0.0
        %1696 = vmatprep.subr.mxu0 0.0
        %1697 = vmatpush1.msra.mxu0 0.0
        %1698 = vmatprep.subr.mxu0 0.0
        %1699 = vmatpush1.msra.mxu0 0.0
        %1700 = vmatprep.subr.mxu0 0.0
        %1701 = vmatpush1.msra.mxu0 0.0
        %1702 = vmatprep.subr.mxu0 0.0
        %1703 = vmatpush1.msra.mxu0 0.0
        %1704 = vmatprep.subr.mxu0 0.0
        %1705 = vmatpush1.msra.mxu0 0.0
        %1706 = vmatprep.subr.mxu0 0.0
        %1707 = vmatpush1.msra.mxu0 0.0
        %1708 = vmatprep.subr.mxu0 0.0
        %1709 = vmatpush1.msra.mxu0 0.0
        %1710 = vmatprep.subr.mxu0 0.0
        %1711 = vmatpush1.msra.mxu0 0.0
        %1712 = vmatprep.subr.mxu0 0.0
        %1713 = vmatpush1.msra.mxu0 0.0
        %1714 = vmatprep.subr.mxu0 0.0
        %1715 = vmatpush1.msra.mxu0 0.0
        %1716 = vmatprep.subr.mxu0 0.0
        %1717 = vmatpush1.msra.mxu0 0.0
        %1718 = vmatprep.subr.mxu0 0.0
        %1719 = vmatpush1.msra.mxu0 0.0
        %1720 = vmatprep.mubr.f32.mxu0 0.0
        %1721 = vmatmul.mubr.f32.gmra.mrb[0].mxu0 %v1654
        %v1722 = vpop.f32.mrb[0].mxu0
        %v1723 = vadd.f32 0.0, %v1722
        %v1724 = vpop.f32.mrb[0].mxu0
        %1725 = vdwg.mxu0
        %v1726 = vadd.f32 %v1638, %v1723
        %s1727 = scalar_lea.vmem %s7, 216
        %v1728 = vld [vmem:[%s1727] sm:$0xff]
        %v1729 = vld [vmem:[%s1727 + $0x8] sm:$0xff]
        %v1730 = vld [vmem:[%s1727 + $0x10] sm:$0xff]
        %v1731 = vld [vmem:[%s1727 + $0x18] sm:$0xff]
        %v1732 = vld [vmem:[%s1727 + $0x20] sm:$0xff]
        %v1733 = vld [vmem:[%s1727 + $0x28] sm:$0xff]
        %v1734 = vld [vmem:[%s1727 + $0x30] sm:$0xff]
        %v1735 = vld [vmem:[%s1727 + $0x38] sm:$0xff]
        %v1736 = vld [vmem:[%s1727 + $0x40] sm:$0xff]
        %v1737 = vrot.slane %v1470, 3
        %v1738 = vrot.slane %v1471, 3
        %v1739 = vsel %vm844, %v1737, %v1738
        %v1740 = vsel %vm1496, %v1739, 0
        %1742 = vmatprep.subr.mxu0 0.0
        %1743 = vmatpush1.msra.mxu0 %v1728
        %1744 = vmatprep.subr.mxu0 0.0
        %1745 = vmatpush1.msra.mxu0 %v1729
        %1746 = vmatprep.subr.mxu0 0.0
        %1747 = vmatpush1.msra.mxu0 %v1730
        %1748 = vmatprep.subr.mxu0 0.0
        %1749 = vmatpush1.msra.mxu0 %v1731
        %1750 = vmatprep.subr.mxu0 0.0
        %1751 = vmatpush1.msra.mxu0 %v1732
        %1752 = vmatprep.subr.mxu0 0.0
        %1753 = vmatpush1.msra.mxu0 %v1733
        %1754 = vmatprep.subr.mxu0 0.0
        %1755 = vmatpush1.msra.mxu0 %v1734
        %1756 = vmatprep.subr.mxu0 0.0
        %1757 = vmatpush1.msra.mxu0 %v1735
        %1758 = vmatprep.subr.mxu0 0.0
        %1759 = vmatpush1.msra.mxu0 %v1736
        %1760 = vmatprep.subr.mxu0 0.0
        %1761 = vmatpush1.msra.mxu0 0.0
        %1762 = vmatprep.subr.mxu0 0.0
        %1763 = vmatpush1.msra.mxu0 0.0
        %1764 = vmatprep.subr.mxu0 0.0
        %1765 = vmatpush1.msra.mxu0 0.0
        %1766 = vmatprep.subr.mxu0 0.0
        %1767 = vmatpush1.msra.mxu0 0.0
        %1768 = vmatprep.subr.mxu0 0.0
        %1769 = vmatpush1.msra.mxu0 0.0
        %1770 = vmatprep.subr.mxu0 0.0
        %1771 = vmatpush1.msra.mxu0 0.0
        %1772 = vmatprep.subr.mxu0 0.0
        %1773 = vmatpush1.msra.mxu0 0.0
        %1774 = vmatprep.subr.mxu0 0.0
        %1775 = vmatpush1.msra.mxu0 0.0
        %1776 = vmatprep.subr.mxu0 0.0
        %1777 = vmatpush1.msra.mxu0 0.0
        %1778 = vmatprep.subr.mxu0 0.0
        %1779 = vmatpush1.msra.mxu0 0.0
        %1780 = vmatprep.subr.mxu0 0.0
        %1781 = vmatpush1.msra.mxu0 0.0
        %1782 = vmatprep.subr.mxu0 0.0
        %1783 = vmatpush1.msra.mxu0 0.0
        %1784 = vmatprep.subr.mxu0 0.0
        %1785 = vmatpush1.msra.mxu0 0.0
        %1786 = vmatprep.subr.mxu0 0.0
        %1787 = vmatpush1.msra.mxu0 0.0
        %1788 = vmatprep.subr.mxu0 0.0
        %1789 = vmatpush1.msra.mxu0 0.0
        %1790 = vmatprep.subr.mxu0 0.0
        %1791 = vmatpush1.msra.mxu0 0.0
        %1792 = vmatprep.subr.mxu0 0.0
        %1793 = vmatpush1.msra.mxu0 0.0
        %1794 = vmatprep.subr.mxu0 0.0
        %1795 = vmatpush1.msra.mxu0 0.0
        %1796 = vmatprep.subr.mxu0 0.0
        %1797 = vmatpush1.msra.mxu0 0.0
        %1798 = vmatprep.subr.mxu0 0.0
        %1799 = vmatpush1.msra.mxu0 0.0
        %1800 = vmatprep.subr.mxu0 0.0
        %1801 = vmatpush1.msra.mxu0 0.0
        %1802 = vmatprep.subr.mxu0 0.0
        %1803 = vmatpush1.msra.mxu0 0.0
        %1804 = vmatprep.subr.mxu0 0.0
        %1805 = vmatpush1.msra.mxu0 0.0
        %1806 = vmatprep.mubr.f32.mxu0 0.0
        %1807 = vmatmul.mubr.f32.gmra.mrb[0].mxu0 %v1740
        %v1808 = vpop.f32.mrb[0].mxu0
        %v1809 = vadd.f32 0.0, %v1808
        %v1810 = vpop.f32.mrb[0].mxu0
        %1811 = vdwg.mxu0
        %v1812 = vadd.f32 %v1726, %v1809
        %s1813 = scalar_lea.vmem %s7, 288
        %v1814 = vld [vmem:[%s1813] sm:$0xff]
        %v1815 = vld [vmem:[%s1813 + $0x8] sm:$0xff]
        %v1816 = vld [vmem:[%s1813 + $0x10] sm:$0xff]
        %v1817 = vld [vmem:[%s1813 + $0x18] sm:$0xff]
        %v1818 = vld [vmem:[%s1813 + $0x20] sm:$0xff]
        %v1819 = vld [vmem:[%s1813 + $0x28] sm:$0xff]
        %v1820 = vld [vmem:[%s1813 + $0x30] sm:$0xff]
        %v1821 = vld [vmem:[%s1813 + $0x38] sm:$0xff]
        %v1822 = vld [vmem:[%s1813 + $0x40] sm:$0xff]
        %v1823 = vrot.slane %v1470, 4
        %v1824 = vrot.slane %v1471, 4
        %v1825 = vsel %vm532, %v1823, %v1824
        %v1826 = vsel %vm1496, %v1825, 0
        %1828 = vmatprep.subr.mxu0 0.0
        %1829 = vmatpush1.msra.mxu0 %v1814
        %1830 = vmatprep.subr.mxu0 0.0
        %1831 = vmatpush1.msra.mxu0 %v1815
        %1832 = vmatprep.subr.mxu0 0.0
        %1833 = vmatpush1.msra.mxu0 %v1816
        %1834 = vmatprep.subr.mxu0 0.0
        %1835 = vmatpush1.msra.mxu0 %v1817
        %1836 = vmatprep.subr.mxu0 0.0
        %1837 = vmatpush1.msra.mxu0 %v1818
        %1838 = vmatprep.subr.mxu0 0.0
        %1839 = vmatpush1.msra.mxu0 %v1819
        %1840 = vmatprep.subr.mxu0 0.0
        %1841 = vmatpush1.msra.mxu0 %v1820
        %1842 = vmatprep.subr.mxu0 0.0
        %1843 = vmatpush1.msra.mxu0 %v1821
        %1844 = vmatprep.subr.mxu0 0.0
        %1845 = vmatpush1.msra.mxu0 %v1822
        %1846 = vmatprep.subr.mxu0 0.0
        %1847 = vmatpush1.msra.mxu0 0.0
        %1848 = vmatprep.subr.mxu0 0.0
        %1849 = vmatpush1.msra.mxu0 0.0
        %1850 = vmatprep.subr.mxu0 0.0
        %1851 = vmatpush1.msra.mxu0 0.0
        %1852 = vmatprep.subr.mxu0 0.0
        %1853 = vmatpush1.msra.mxu0 0.0
        %1854 = vmatprep.subr.mxu0 0.0
        %1855 = vmatpush1.msra.mxu0 0.0
        %1856 = vmatprep.subr.mxu0 0.0
        %1857 = vmatpush1.msra.mxu0 0.0
        %1858 = vmatprep.subr.mxu0 0.0
        %1859 = vmatpush1.msra.mxu0 0.0
        %1860 = vmatprep.subr.mxu0 0.0
        %1861 = vmatpush1.msra.mxu0 0.0
        %1862 = vmatprep.subr.mxu0 0.0
        %1863 = vmatpush1.msra.mxu0 0.0
        %1864 = vmatprep.subr.mxu0 0.0
        %1865 = vmatpush1.msra.mxu0 0.0
        %1866 = vmatprep.subr.mxu0 0.0
        %1867 = vmatpush1.msra.mxu0 0.0
        %1868 = vmatprep.subr.mxu0 0.0
        %1869 = vmatpush1.msra.mxu0 0.0
        %1870 = vmatprep.subr.mxu0 0.0
        %1871 = vmatpush1.msra.mxu0 0.0
        %1872 = vmatprep.subr.mxu0 0.0
        %1873 = vmatpush1.msra.mxu0 0.0
        %1874 = vmatprep.subr.mxu0 0.0
        %1875 = vmatpush1.msra.mxu0 0.0
        %1876 = vmatprep.subr.mxu0 0.0
        %1877 = vmatpush1.msra.mxu0 0.0
        %1878 = vmatprep.subr.mxu0 0.0
        %1879 = vmatpush1.msra.mxu0 0.0
        %1880 = vmatprep.subr.mxu0 0.0
        %1881 = vmatpush1.msra.mxu0 0.0
        %1882 = vmatprep.subr.mxu0 0.0
        %1883 = vmatpush1.msra.mxu0 0.0
        %1884 = vmatprep.subr.mxu0 0.0
        %1885 = vmatpush1.msra.mxu0 0.0
        %1886 = vmatprep.subr.mxu0 0.0
        %1887 = vmatpush1.msra.mxu0 0.0
        %1888 = vmatprep.subr.mxu0 0.0
        %1889 = vmatpush1.msra.mxu0 0.0
        %1890 = vmatprep.subr.mxu0 0.0
        %1891 = vmatpush1.msra.mxu0 0.0
        %1892 = vmatprep.mubr.f32.mxu0 0.0
        %1893 = vmatmul.mubr.f32.gmra.mrb[0].mxu0 %v1826
        %v1894 = vpop.f32.mrb[0].mxu0
        %v1895 = vadd.f32 0.0, %v1894
        %v1896 = vpop.f32.mrb[0].mxu0
        %1897 = vdwg.mxu0
        %v1898 = vadd.f32 %v1812, %v1895
        %v1899 = vld [vmem:[%s8] sm:$0x1]
        %v1901 = vlaneseq
        %v1902 = vshrl.u32 %v1901, 7
        %v1903 = vsub.s32 0, %v1902
        %v1904 = vrot.slane %v1899, %v1903
        %v1906 = vadd.f32 %v1898, %v1904
        %v1907 = vmax.f32 %v1906, 0.0
        %v1908 = vld [vmem:[%s9] sm:$0xff]
        %v1909 = vld [vmem:[%s9 + $0x8] sm:$0xff]
        %v1910 = vld [vmem:[%s9 + $0x10] sm:$0xff]
        %v1911 = vld [vmem:[%s9 + $0x18] sm:$0xff]
        %v1912 = vld [vmem:[%s9 + $0x20] sm:$0xff]
        %v1913 = vld [vmem:[%s9 + $0x28] sm:$0xff]
        %v1914 = vld [vmem:[%s9 + $0x30] sm:$0xff]
        %v1915 = vld [vmem:[%s9 + $0x38] sm:$0xff]
        %v1916 = vld [vmem:[%s9 + $0x40] sm:$0xff]
        %v1917 = vld [vmem:[%s9 + $0x48] sm:$0xff]
        %v1918 = vld [vmem:[%s9 + $0x50] sm:$0xff]
        %v1919 = vld [vmem:[%s9 + $0x58] sm:$0xff]
        %v1920 = vld [vmem:[%s9 + $0x60] sm:$0xff]
        %v1921 = vld [vmem:[%s9 + $0x68] sm:$0xff]
        %v1922 = vld [vmem:[%s9 + $0x70] sm:$0xff]
        %v1923 = vld [vmem:[%s9 + $0x78] sm:$0xff]
        %s1924 = scalar_lea.vmem %s9, 128
        %v1925 = vld [vmem:[%s1924] sm:$0xff]
        %v1926 = vld [vmem:[%s1924 + $0x8] sm:$0xff]
        %v1927 = vld [vmem:[%s1924 + $0x10] sm:$0xff]
        %v1928 = vld [vmem:[%s1924 + $0x18] sm:$0xff]
        %v1929 = vld [vmem:[%s1924 + $0x20] sm:$0xff]
        %v1930 = vld [vmem:[%s1924 + $0x28] sm:$0xff]
        %v1931 = vld [vmem:[%s1924 + $0x30] sm:$0xff]
        %v1932 = vld [vmem:[%s1924 + $0x38] sm:$0xff]
        %v1933 = vld [vmem:[%s1924 + $0x40] sm:$0xff]
        %v1934 = vld [vmem:[%s1924 + $0x48] sm:$0xff]
        %v1935 = vld [vmem:[%s1924 + $0x50] sm:$0xff]
        %v1936 = vld [vmem:[%s1924 + $0x58] sm:$0xff]
        %v1937 = vld [vmem:[%s1924 + $0x60] sm:$0xff]
        %v1938 = vld [vmem:[%s1924 + $0x68] sm:$0xff]
        %v1939 = vld [vmem:[%s1924 + $0x70] sm:$0xff]
        %v1940 = vld [vmem:[%s1924 + $0x78] sm:$0xff]
        %v1942 = vrot.slane %v1907, 1
        %1944 = vmatprep.subr.mxu0 0.0
        %1945 = vmatpush1.msra.mxu0 %v1925
        %1946 = vmatprep.subr.mxu0 0.0
        %1947 = vmatpush1.msra.mxu0 %v1926
        %1948 = vmatprep.subr.mxu0 0.0
        %1949 = vmatpush1.msra.mxu0 %v1927
        %1950 = vmatprep.subr.mxu0 0.0
        %1951 = vmatpush1.msra.mxu0 %v1928
        %1952 = vmatprep.subr.mxu0 0.0
        %1953 = vmatpush1.msra.mxu0 %v1929
        %1954 = vmatprep.subr.mxu0 0.0
        %1955 = vmatpush1.msra.mxu0 %v1930
        %1956 = vmatprep.subr.mxu0 0.0
        %1957 = vmatpush1.msra.mxu0 %v1931
        %1958 = vmatprep.subr.mxu0 0.0
        %1959 = vmatpush1.msra.mxu0 %v1932
        %1960 = vmatprep.subr.mxu0 0.0
        %1961 = vmatpush1.msra.mxu0 %v1933
        %1962 = vmatprep.subr.mxu0 0.0
        %1963 = vmatpush1.msra.mxu0 %v1934
        %1964 = vmatprep.subr.mxu0 0.0
        %1965 = vmatpush1.msra.mxu0 %v1935
        %1966 = vmatprep.subr.mxu0 0.0
        %1967 = vmatpush1.msra.mxu0 %v1936
        %1968 = vmatprep.subr.mxu0 0.0
        %1969 = vmatpush1.msra.mxu0 %v1937
        %1970 = vmatprep.subr.mxu0 0.0
        %1971 = vmatpush1.msra.mxu0 %v1938
        %1972 = vmatprep.subr.mxu0 0.0
        %1973 = vmatpush1.msra.mxu0 %v1939
        %1974 = vmatprep.subr.mxu0 0.0
        %1975 = vmatpush1.msra.mxu0 %v1940
        %1976 = vmatprep.subr.mxu0 0.0
        %1977 = vmatpush1.msra.mxu0 0.0
        %1978 = vmatprep.subr.mxu0 0.0
        %1979 = vmatpush1.msra.mxu0 0.0
        %1980 = vmatprep.subr.mxu0 0.0
        %1981 = vmatpush1.msra.mxu0 0.0
        %1982 = vmatprep.subr.mxu0 0.0
        %1983 = vmatpush1.msra.mxu0 0.0
        %1984 = vmatprep.subr.mxu0 0.0
        %1985 = vmatpush1.msra.mxu0 0.0
        %1986 = vmatprep.subr.mxu0 0.0
        %1987 = vmatpush1.msra.mxu0 0.0
        %1988 = vmatprep.subr.mxu0 0.0
        %1989 = vmatpush1.msra.mxu0 0.0
        %1990 = vmatprep.subr.mxu0 0.0
        %1991 = vmatpush1.msra.mxu0 0.0
        %1992 = vmatprep.subr.mxu0 0.0
        %1993 = vmatpush1.msra.mxu0 0.0
        %1994 = vmatprep.subr.mxu0 0.0
        %1995 = vmatpush1.msra.mxu0 0.0
        %1996 = vmatprep.subr.mxu0 0.0
        %1997 = vmatpush1.msra.mxu0 0.0
        %1998 = vmatprep.subr.mxu0 0.0
        %1999 = vmatpush1.msra.mxu0 0.0
        %2000 = vmatprep.subr.mxu0 0.0
        %2001 = vmatpush1.msra.mxu0 0.0
        %2002 = vmatprep.subr.mxu0 0.0
        %2003 = vmatpush1.msra.mxu0 0.0
        %2004 = vmatprep.subr.mxu0 0.0
        %2005 = vmatpush1.msra.mxu0 0.0
        %2006 = vmatprep.subr.mxu0 0.0
        %2007 = vmatpush1.msra.mxu0 0.0
        %2008 = vmatprep.mubr.f32.mxu0 0.0
        %2009 = vmatmul.mubr.f32.gmra.mrb[0].mxu0 %v1942
        %v2010 = vpop.f32.mrb[0].mxu0
        %v2011 = vadd.f32 0.0, %v2010
        %v2012 = vpop.f32.mrb[0].mxu0
        %2013 = vdwg.mxu0
        %2014 = vmatprep.subr.mxu0 0.0
        %2015 = vmatpush1.msra.mxu0 %v1908
        %2016 = vmatprep.subr.mxu0 0.0
        %2017 = vmatpush1.msra.mxu0 %v1909
        %2018 = vmatprep.subr.mxu0 0.0
        %2019 = vmatpush1.msra.mxu0 %v1910
        %2020 = vmatprep.subr.mxu0 0.0
        %2021 = vmatpush1.msra.mxu0 %v1911
        %2022 = vmatprep.subr.mxu0 0.0
        %2023 = vmatpush1.msra.mxu0 %v1912
        %2024 = vmatprep.subr.mxu0 0.0
        %2025 = vmatpush1.msra.mxu0 %v1913
        %2026 = vmatprep.subr.mxu0 0.0
        %2027 = vmatpush1.msra.mxu0 %v1914
        %2028 = vmatprep.subr.mxu0 0.0
        %2029 = vmatpush1.msra.mxu0 %v1915
        %2030 = vmatprep.subr.mxu0 0.0
        %2031 = vmatpush1.msra.mxu0 %v1916
        %2032 = vmatprep.subr.mxu0 0.0
        %2033 = vmatpush1.msra.mxu0 %v1917
        %2034 = vmatprep.subr.mxu0 0.0
        %2035 = vmatpush1.msra.mxu0 %v1918
        %2036 = vmatprep.subr.mxu0 0.0
        %2037 = vmatpush1.msra.mxu0 %v1919
        %2038 = vmatprep.subr.mxu0 0.0
        %2039 = vmatpush1.msra.mxu0 %v1920
        %2040 = vmatprep.subr.mxu0 0.0
        %2041 = vmatpush1.msra.mxu0 %v1921
        %2042 = vmatprep.subr.mxu0 0.0
        %2043 = vmatpush1.msra.mxu0 %v1922
        %2044 = vmatprep.subr.mxu0 0.0
        %2045 = vmatpush1.msra.mxu0 %v1923
        %2046 = vmatprep.subr.mxu0 0.0
        %2047 = vmatpush1.msra.mxu0 0.0
        %2048 = vmatprep.subr.mxu0 0.0
        %2049 = vmatpush1.msra.mxu0 0.0
        %2050 = vmatprep.subr.mxu0 0.0
        %2051 = vmatpush1.msra.mxu0 0.0
        %2052 = vmatprep.subr.mxu0 0.0
        %2053 = vmatpush1.msra.mxu0 0.0
        %2054 = vmatprep.subr.mxu0 0.0
        %2055 = vmatpush1.msra.mxu0 0.0
        %2056 = vmatprep.subr.mxu0 0.0
        %2057 = vmatpush1.msra.mxu0 0.0
        %2058 = vmatprep.subr.mxu0 0.0
        %2059 = vmatpush1.msra.mxu0 0.0
        %2060 = vmatprep.subr.mxu0 0.0
        %2061 = vmatpush1.msra.mxu0 0.0
        %2062 = vmatprep.subr.mxu0 0.0
        %2063 = vmatpush1.msra.mxu0 0.0
        %2064 = vmatprep.subr.mxu0 0.0
        %2065 = vmatpush1.msra.mxu0 0.0
        %2066 = vmatprep.subr.mxu0 0.0
        %2067 = vmatpush1.msra.mxu0 0.0
        %2068 = vmatprep.subr.mxu0 0.0
        %2069 = vmatpush1.msra.mxu0 0.0
        %2070 = vmatprep.subr.mxu0 0.0
        %2071 = vmatpush1.msra.mxu0 0.0
        %2072 = vmatprep.subr.mxu0 0.0
        %2073 = vmatpush1.msra.mxu0 0.0
        %2074 = vmatprep.subr.mxu0 0.0
        %2075 = vmatpush1.msra.mxu0 0.0
        %2076 = vmatprep.subr.mxu0 0.0
        %2077 = vmatpush1.msra.mxu0 0.0
        %2078 = vmatprep.mubr.f32.mxu0 0.0
        %2079 = vmatmul.mubr.f32.gmra.mrb[0].mxu0 %v1907
        %v2080 = vpop.f32.mrb[0].mxu0
        %v2081 = vadd.f32 %v2011, %v2080
        %v2082 = vpop.f32.mrb[0].mxu0
        %2083 = vdwg.mxu0
        %s2084 = scalar_lea.vmem %s9, 256
        %v2085 = vld [vmem:[%s2084] sm:$0xff]
        %v2086 = vld [vmem:[%s2084 + $0x8] sm:$0xff]
        %v2087 = vld [vmem:[%s2084 + $0x10] sm:$0xff]
        %v2088 = vld [vmem:[%s2084 + $0x18] sm:$0xff]
        %v2089 = vld [vmem:[%s2084 + $0x20] sm:$0xff]
        %v2090 = vld [vmem:[%s2084 + $0x28] sm:$0xff]
        %v2091 = vld [vmem:[%s2084 + $0x30] sm:$0xff]
        %v2092 = vld [vmem:[%s2084 + $0x38] sm:$0xff]
        %v2093 = vld [vmem:[%s2084 + $0x40] sm:$0xff]
        %v2094 = vld [vmem:[%s2084 + $0x48] sm:$0xff]
        %v2095 = vld [vmem:[%s2084 + $0x50] sm:$0xff]
        %v2096 = vld [vmem:[%s2084 + $0x58] sm:$0xff]
        %v2097 = vld [vmem:[%s2084 + $0x60] sm:$0xff]
        %v2098 = vld [vmem:[%s2084 + $0x68] sm:$0xff]
        %v2099 = vld [vmem:[%s2084 + $0x70] sm:$0xff]
        %v2100 = vld [vmem:[%s2084 + $0x78] sm:$0xff]
        %v2101 = vrot.slane %v1907, 2
        %2103 = vmatprep.subr.mxu0 0.0
        %2104 = vmatpush1.msra.mxu0 %v2085
        %2105 = vmatprep.subr.mxu0 0.0
        %2106 = vmatpush1.msra.mxu0 %v2086
        %2107 = vmatprep.subr.mxu0 0.0
        %2108 = vmatpush1.msra.mxu0 %v2087
        %2109 = vmatprep.subr.mxu0 0.0
        %2110 = vmatpush1.msra.mxu0 %v2088
        %2111 = vmatprep.subr.mxu0 0.0
        %2112 = vmatpush1.msra.mxu0 %v2089
        %2113 = vmatprep.subr.mxu0 0.0
        %2114 = vmatpush1.msra.mxu0 %v2090
        %2115 = vmatprep.subr.mxu0 0.0
        %2116 = vmatpush1.msra.mxu0 %v2091
        %2117 = vmatprep.subr.mxu0 0.0
        %2118 = vmatpush1.msra.mxu0 %v2092
        %2119 = vmatprep.subr.mxu0 0.0
        %2120 = vmatpush1.msra.mxu0 %v2093
        %2121 = vmatprep.subr.mxu0 0.0
        %2122 = vmatpush1.msra.mxu0 %v2094
        %2123 = vmatprep.subr.mxu0 0.0
        %2124 = vmatpush1.msra.mxu0 %v2095
        %2125 = vmatprep.subr.mxu0 0.0
        %2126 = vmatpush1.msra.mxu0 %v2096
        %2127 = vmatprep.subr.mxu0 0.0
        %2128 = vmatpush1.msra.mxu0 %v2097
        %2129 = vmatprep.subr.mxu0 0.0
        %2130 = vmatpush1.msra.mxu0 %v2098
        %2131 = vmatprep.subr.mxu0 0.0
        %2132 = vmatpush1.msra.mxu0 %v2099
        %2133 = vmatprep.subr.mxu0 0.0
        %2134 = vmatpush1.msra.mxu0 %v2100
        %2135 = vmatprep.subr.mxu0 0.0
        %2136 = vmatpush1.msra.mxu0 0.0
        %2137 = vmatprep.subr.mxu0 0.0
        %2138 = vmatpush1.msra.mxu0 0.0
        %2139 = vmatprep.subr.mxu0 0.0
        %2140 = vmatpush1.msra.mxu0 0.0
        %2141 = vmatprep.subr.mxu0 0.0
        %2142 = vmatpush1.msra.mxu0 0.0
        %2143 = vmatprep.subr.mxu0 0.0
        %2144 = vmatpush1.msra.mxu0 0.0
        %2145 = vmatprep.subr.mxu0 0.0
        %2146 = vmatpush1.msra.mxu0 0.0
        %2147 = vmatprep.subr.mxu0 0.0
        %2148 = vmatpush1.msra.mxu0 0.0
        %2149 = vmatprep.subr.mxu0 0.0
        %2150 = vmatpush1.msra.mxu0 0.0
        %2151 = vmatprep.subr.mxu0 0.0
        %2152 = vmatpush1.msra.mxu0 0.0
        %2153 = vmatprep.subr.mxu0 0.0
        %2154 = vmatpush1.msra.mxu0 0.0
        %2155 = vmatprep.subr.mxu0 0.0
        %2156 = vmatpush1.msra.mxu0 0.0
        %2157 = vmatprep.subr.mxu0 0.0
        %2158 = vmatpush1.msra.mxu0 0.0
        %2159 = vmatprep.subr.mxu0 0.0
        %2160 = vmatpush1.msra.mxu0 0.0
        %2161 = vmatprep.subr.mxu0 0.0
        %2162 = vmatpush1.msra.mxu0 0.0
        %2163 = vmatprep.subr.mxu0 0.0
        %2164 = vmatpush1.msra.mxu0 0.0
        %2165 = vmatprep.subr.mxu0 0.0
        %2166 = vmatpush1.msra.mxu0 0.0
        %2167 = vmatprep.mubr.f32.mxu0 0.0
        %2168 = vmatmul.mubr.f32.gmra.mrb[0].mxu0 %v2101
        %v2169 = vpop.f32.mrb[0].mxu0
        %v2170 = vadd.f32 0.0, %v2169
        %v2171 = vpop.f32.mrb[0].mxu0
        %2172 = vdwg.mxu0
        %v2173 = vadd.f32 %v2081, %v2170
        %s2174 = scalar_lea.vmem %s9, 384
        %v2175 = vld [vmem:[%s2174] sm:$0xff]
        %v2176 = vld [vmem:[%s2174 + $0x8] sm:$0xff]
        %v2177 = vld [vmem:[%s2174 + $0x10] sm:$0xff]
        %v2178 = vld [vmem:[%s2174 + $0x18] sm:$0xff]
        %v2179 = vld [vmem:[%s2174 + $0x20] sm:$0xff]
        %v2180 = vld [vmem:[%s2174 + $0x28] sm:$0xff]
        %v2181 = vld [vmem:[%s2174 + $0x30] sm:$0xff]
        %v2182 = vld [vmem:[%s2174 + $0x38] sm:$0xff]
        %v2183 = vld [vmem:[%s2174 + $0x40] sm:$0xff]
        %v2184 = vld [vmem:[%s2174 + $0x48] sm:$0xff]
        %v2185 = vld [vmem:[%s2174 + $0x50] sm:$0xff]
        %v2186 = vld [vmem:[%s2174 + $0x58] sm:$0xff]
        %v2187 = vld [vmem:[%s2174 + $0x60] sm:$0xff]
        %v2188 = vld [vmem:[%s2174 + $0x68] sm:$0xff]
        %v2189 = vld [vmem:[%s2174 + $0x70] sm:$0xff]
        %v2190 = vld [vmem:[%s2174 + $0x78] sm:$0xff]
        %v2191 = vrot.slane %v1907, 3
        %2193 = vmatprep.subr.mxu0 0.0
        %2194 = vmatpush1.msra.mxu0 %v2175
        %2195 = vmatprep.subr.mxu0 0.0
        %2196 = vmatpush1.msra.mxu0 %v2176
        %2197 = vmatprep.subr.mxu0 0.0
        %2198 = vmatpush1.msra.mxu0 %v2177
        %2199 = vmatprep.subr.mxu0 0.0
        %2200 = vmatpush1.msra.mxu0 %v2178
        %2201 = vmatprep.subr.mxu0 0.0
        %2202 = vmatpush1.msra.mxu0 %v2179
        %2203 = vmatprep.subr.mxu0 0.0
        %2204 = vmatpush1.msra.mxu0 %v2180
        %2205 = vmatprep.subr.mxu0 0.0
        %2206 = vmatpush1.msra.mxu0 %v2181
        %2207 = vmatprep.subr.mxu0 0.0
        %2208 = vmatpush1.msra.mxu0 %v2182
        %2209 = vmatprep.subr.mxu0 0.0
        %2210 = vmatpush1.msra.mxu0 %v2183
        %2211 = vmatprep.subr.mxu0 0.0
        %2212 = vmatpush1.msra.mxu0 %v2184
        %2213 = vmatprep.subr.mxu0 0.0
        %2214 = vmatpush1.msra.mxu0 %v2185
        %2215 = vmatprep.subr.mxu0 0.0
        %2216 = vmatpush1.msra.mxu0 %v2186
        %2217 = vmatprep.subr.mxu0 0.0
        %2218 = vmatpush1.msra.mxu0 %v2187
        %2219 = vmatprep.subr.mxu0 0.0
        %2220 = vmatpush1.msra.mxu0 %v2188
        %2221 = vmatprep.subr.mxu0 0.0
        %2222 = vmatpush1.msra.mxu0 %v2189
        %2223 = vmatprep.subr.mxu0 0.0
        %2224 = vmatpush1.msra.mxu0 %v2190
        %2225 = vmatprep.subr.mxu0 0.0
        %2226 = vmatpush1.msra.mxu0 0.0
        %2227 = vmatprep.subr.mxu0 0.0
        %2228 = vmatpush1.msra.mxu0 0.0
        %2229 = vmatprep.subr.mxu0 0.0
        %2230 = vmatpush1.msra.mxu0 0.0
        %2231 = vmatprep.subr.mxu0 0.0
        %2232 = vmatpush1.msra.mxu0 0.0
        %2233 = vmatprep.subr.mxu0 0.0
        %2234 = vmatpush1.msra.mxu0 0.0
        %2235 = vmatprep.subr.mxu0 0.0
        %2236 = vmatpush1.msra.mxu0 0.0
        %2237 = vmatprep.subr.mxu0 0.0
        %2238 = vmatpush1.msra.mxu0 0.0
        %2239 = vmatprep.subr.mxu0 0.0
        %2240 = vmatpush1.msra.mxu0 0.0
        %2241 = vmatprep.subr.mxu0 0.0
        %2242 = vmatpush1.msra.mxu0 0.0
        %2243 = vmatprep.subr.mxu0 0.0
        %2244 = vmatpush1.msra.mxu0 0.0
        %2245 = vmatprep.subr.mxu0 0.0
        %2246 = vmatpush1.msra.mxu0 0.0
        %2247 = vmatprep.subr.mxu0 0.0
        %2248 = vmatpush1.msra.mxu0 0.0
        %2249 = vmatprep.subr.mxu0 0.0
        %2250 = vmatpush1.msra.mxu0 0.0
        %2251 = vmatprep.subr.mxu0 0.0
        %2252 = vmatpush1.msra.mxu0 0.0
        %2253 = vmatprep.subr.mxu0 0.0
        %2254 = vmatpush1.msra.mxu0 0.0
        %2255 = vmatprep.subr.mxu0 0.0
        %2256 = vmatpush1.msra.mxu0 0.0
        %2257 = vmatprep.mubr.f32.mxu0 0.0
        %2258 = vmatmul.mubr.f32.gmra.mrb[0].mxu0 %v2191
        %v2259 = vpop.f32.mrb[0].mxu0
        %v2260 = vadd.f32 0.0, %v2259
        %v2261 = vpop.f32.mrb[0].mxu0
        %2262 = vdwg.mxu0
        %v2263 = vadd.f32 %v2173, %v2260
        %s2264 = scalar_lea.vmem %s9, 512
        %v2265 = vld [vmem:[%s2264] sm:$0xff]
        %v2266 = vld [vmem:[%s2264 + $0x8] sm:$0xff]
        %v2267 = vld [vmem:[%s2264 + $0x10] sm:$0xff]
        %v2268 = vld [vmem:[%s2264 + $0x18] sm:$0xff]
        %v2269 = vld [vmem:[%s2264 + $0x20] sm:$0xff]
        %v2270 = vld [vmem:[%s2264 + $0x28] sm:$0xff]
        %v2271 = vld [vmem:[%s2264 + $0x30] sm:$0xff]
        %v2272 = vld [vmem:[%s2264 + $0x38] sm:$0xff]
        %v2273 = vld [vmem:[%s2264 + $0x40] sm:$0xff]
        %v2274 = vld [vmem:[%s2264 + $0x48] sm:$0xff]
        %v2275 = vld [vmem:[%s2264 + $0x50] sm:$0xff]
        %v2276 = vld [vmem:[%s2264 + $0x58] sm:$0xff]
        %v2277 = vld [vmem:[%s2264 + $0x60] sm:$0xff]
        %v2278 = vld [vmem:[%s2264 + $0x68] sm:$0xff]
        %v2279 = vld [vmem:[%s2264 + $0x70] sm:$0xff]
        %v2280 = vld [vmem:[%s2264 + $0x78] sm:$0xff]
        %v2281 = vrot.slane %v1907, 4
        %2283 = vmatprep.subr.mxu0 0.0
        %2284 = vmatpush1.msra.mxu0 %v2265
        %2285 = vmatprep.subr.mxu0 0.0
        %2286 = vmatpush1.msra.mxu0 %v2266
        %2287 = vmatprep.subr.mxu0 0.0
        %2288 = vmatpush1.msra.mxu0 %v2267
        %2289 = vmatprep.subr.mxu0 0.0
        %2290 = vmatpush1.msra.mxu0 %v2268
        %2291 = vmatprep.subr.mxu0 0.0
        %2292 = vmatpush1.msra.mxu0 %v2269
        %2293 = vmatprep.subr.mxu0 0.0
        %2294 = vmatpush1.msra.mxu0 %v2270
        %2295 = vmatprep.subr.mxu0 0.0
        %2296 = vmatpush1.msra.mxu0 %v2271
        %2297 = vmatprep.subr.mxu0 0.0
        %2298 = vmatpush1.msra.mxu0 %v2272
        %2299 = vmatprep.subr.mxu0 0.0
        %2300 = vmatpush1.msra.mxu0 %v2273
        %2301 = vmatprep.subr.mxu0 0.0
        %2302 = vmatpush1.msra.mxu0 %v2274
        %2303 = vmatprep.subr.mxu0 0.0
        %2304 = vmatpush1.msra.mxu0 %v2275
        %2305 = vmatprep.subr.mxu0 0.0
        %2306 = vmatpush1.msra.mxu0 %v2276
        %2307 = vmatprep.subr.mxu0 0.0
        %2308 = vmatpush1.msra.mxu0 %v2277
        %2309 = vmatprep.subr.mxu0 0.0
        %2310 = vmatpush1.msra.mxu0 %v2278
        %2311 = vmatprep.subr.mxu0 0.0
        %2312 = vmatpush1.msra.mxu0 %v2279
        %2313 = vmatprep.subr.mxu0 0.0
        %2314 = vmatpush1.msra.mxu0 %v2280
        %2315 = vmatprep.subr.mxu0 0.0
        %2316 = vmatpush1.msra.mxu0 0.0
        %2317 = vmatprep.subr.mxu0 0.0
        %2318 = vmatpush1.msra.mxu0 0.0
        %2319 = vmatprep.subr.mxu0 0.0
        %2320 = vmatpush1.msra.mxu0 0.0
        %2321 = vmatprep.subr.mxu0 0.0
        %2322 = vmatpush1.msra.mxu0 0.0
        %2323 = vmatprep.subr.mxu0 0.0
        %2324 = vmatpush1.msra.mxu0 0.0
        %2325 = vmatprep.subr.mxu0 0.0
        %2326 = vmatpush1.msra.mxu0 0.0
        %2327 = vmatprep.subr.mxu0 0.0
        %2328 = vmatpush1.msra.mxu0 0.0
        %2329 = vmatprep.subr.mxu0 0.0
        %2330 = vmatpush1.msra.mxu0 0.0
        %2331 = vmatprep.subr.mxu0 0.0
        %2332 = vmatpush1.msra.mxu0 0.0
        %2333 = vmatprep.subr.mxu0 0.0
        %2334 = vmatpush1.msra.mxu0 0.0
        %2335 = vmatprep.subr.mxu0 0.0
        %2336 = vmatpush1.msra.mxu0 0.0
        %2337 = vmatprep.subr.mxu0 0.0
        %2338 = vmatpush1.msra.mxu0 0.0
        %2339 = vmatprep.subr.mxu0 0.0
        %2340 = vmatpush1.msra.mxu0 0.0
        %2341 = vmatprep.subr.mxu0 0.0
        %2342 = vmatpush1.msra.mxu0 0.0
        %2343 = vmatprep.subr.mxu0 0.0
        %2344 = vmatpush1.msra.mxu0 0.0
        %2345 = vmatprep.subr.mxu0 0.0
        %2346 = vmatpush1.msra.mxu0 0.0
        %2347 = vmatprep.mubr.f32.mxu0 0.0
        %2348 = vmatmul.mubr.f32.gmra.mrb[0].mxu0 %v2281
        %v2349 = vpop.f32.mrb[0].mxu0
        %v2350 = vadd.f32 0.0, %v2349
        %v2351 = vpop.f32.mrb[0].mxu0
        %2352 = vdwg.mxu0
        %v2353 = vadd.f32 %v2263, %v2350
        %s2354 = scalar_lea.vmem %s9, 640
        %v2355 = vld [vmem:[%s2354] sm:$0xff]
        %v2356 = vld [vmem:[%s2354 + $0x8] sm:$0xff]
        %v2357 = vld [vmem:[%s2354 + $0x10] sm:$0xff]
        %v2358 = vld [vmem:[%s2354 + $0x18] sm:$0xff]
        %v2359 = vld [vmem:[%s2354 + $0x20] sm:$0xff]
        %v2360 = vld [vmem:[%s2354 + $0x28] sm:$0xff]
        %v2361 = vld [vmem:[%s2354 + $0x30] sm:$0xff]
        %v2362 = vld [vmem:[%s2354 + $0x38] sm:$0xff]
        %v2363 = vld [vmem:[%s2354 + $0x40] sm:$0xff]
        %v2364 = vld [vmem:[%s2354 + $0x48] sm:$0xff]
        %v2365 = vld [vmem:[%s2354 + $0x50] sm:$0xff]
        %v2366 = vld [vmem:[%s2354 + $0x58] sm:$0xff]
        %v2367 = vld [vmem:[%s2354 + $0x60] sm:$0xff]
        %v2368 = vld [vmem:[%s2354 + $0x68] sm:$0xff]
        %v2369 = vld [vmem:[%s2354 + $0x70] sm:$0xff]
        %v2370 = vld [vmem:[%s2354 + $0x78] sm:$0xff]
        %v2371 = vrot.slane %v1907, 5
        %2373 = vmatprep.subr.mxu0 0.0
        %2374 = vmatpush1.msra.mxu0 %v2355
        %2375 = vmatprep.subr.mxu0 0.0
        %2376 = vmatpush1.msra.mxu0 %v2356
        %2377 = vmatprep.subr.mxu0 0.0
        %2378 = vmatpush1.msra.mxu0 %v2357
        %2379 = vmatprep.subr.mxu0 0.0
        %2380 = vmatpush1.msra.mxu0 %v2358
        %2381 = vmatprep.subr.mxu0 0.0
        %2382 = vmatpush1.msra.mxu0 %v2359
        %2383 = vmatprep.subr.mxu0 0.0
        %2384 = vmatpush1.msra.mxu0 %v2360
        %2385 = vmatprep.subr.mxu0 0.0
        %2386 = vmatpush1.msra.mxu0 %v2361
        %2387 = vmatprep.subr.mxu0 0.0
        %2388 = vmatpush1.msra.mxu0 %v2362
        %2389 = vmatprep.subr.mxu0 0.0
        %2390 = vmatpush1.msra.mxu0 %v2363
        %2391 = vmatprep.subr.mxu0 0.0
        %2392 = vmatpush1.msra.mxu0 %v2364
        %2393 = vmatprep.subr.mxu0 0.0
        %2394 = vmatpush1.msra.mxu0 %v2365
        %2395 = vmatprep.subr.mxu0 0.0
        %2396 = vmatpush1.msra.mxu0 %v2366
        %2397 = vmatprep.subr.mxu0 0.0
        %2398 = vmatpush1.msra.mxu0 %v2367
        %2399 = vmatprep.subr.mxu0 0.0
        %2400 = vmatpush1.msra.mxu0 %v2368
        %2401 = vmatprep.subr.mxu0 0.0
        %2402 = vmatpush1.msra.mxu0 %v2369
        %2403 = vmatprep.subr.mxu0 0.0
        %2404 = vmatpush1.msra.mxu0 %v2370
        %2405 = vmatprep.subr.mxu0 0.0
        %2406 = vmatpush1.msra.mxu0 0.0
        %2407 = vmatprep.subr.mxu0 0.0
        %2408 = vmatpush1.msra.mxu0 0.0
        %2409 = vmatprep.subr.mxu0 0.0
        %2410 = vmatpush1.msra.mxu0 0.0
        %2411 = vmatprep.subr.mxu0 0.0
        %2412 = vmatpush1.msra.mxu0 0.0
        %2413 = vmatprep.subr.mxu0 0.0
        %2414 = vmatpush1.msra.mxu0 0.0
        %2415 = vmatprep.subr.mxu0 0.0
        %2416 = vmatpush1.msra.mxu0 0.0
        %2417 = vmatprep.subr.mxu0 0.0
        %2418 = vmatpush1.msra.mxu0 0.0
        %2419 = vmatprep.subr.mxu0 0.0
        %2420 = vmatpush1.msra.mxu0 0.0
        %2421 = vmatprep.subr.mxu0 0.0
        %2422 = vmatpush1.msra.mxu0 0.0
        %2423 = vmatprep.subr.mxu0 0.0
        %2424 = vmatpush1.msra.mxu0 0.0
        %2425 = vmatprep.subr.mxu0 0.0
        %2426 = vmatpush1.msra.mxu0 0.0
        %2427 = vmatprep.subr.mxu0 0.0
        %2428 = vmatpush1.msra.mxu0 0.0
        %2429 = vmatprep.subr.mxu0 0.0
        %2430 = vmatpush1.msra.mxu0 0.0
        %2431 = vmatprep.subr.mxu0 0.0
        %2432 = vmatpush1.msra.mxu0 0.0
        %2433 = vmatprep.subr.mxu0 0.0
        %2434 = vmatpush1.msra.mxu0 0.0
        %2435 = vmatprep.subr.mxu0 0.0
        %2436 = vmatpush1.msra.mxu0 0.0
        %2437 = vmatprep.mubr.f32.mxu0 0.0
        %2438 = vmatmul.mubr.f32.gmra.mrb[0].mxu0 %v2371
        %v2439 = vpop.f32.mrb[0].mxu0
        %v2440 = vadd.f32 0.0, %v2439
        %v2441 = vpop.f32.mrb[0].mxu0
        %2442 = vdwg.mxu0
        %v2443 = vadd.f32 %v2353, %v2440
        %s2444 = scalar_lea.vmem %s9, 768
        %v2445 = vld [vmem:[%s2444] sm:$0xff]
        %v2446 = vld [vmem:[%s2444 + $0x8] sm:$0xff]
        %v2447 = vld [vmem:[%s2444 + $0x10] sm:$0xff]
        %v2448 = vld [vmem:[%s2444 + $0x18] sm:$0xff]
        %v2449 = vld [vmem:[%s2444 + $0x20] sm:$0xff]
        %v2450 = vld [vmem:[%s2444 + $0x28] sm:$0xff]
        %v2451 = vld [vmem:[%s2444 + $0x30] sm:$0xff]
        %v2452 = vld [vmem:[%s2444 + $0x38] sm:$0xff]
        %v2453 = vld [vmem:[%s2444 + $0x40] sm:$0xff]
        %v2454 = vld [vmem:[%s2444 + $0x48] sm:$0xff]
        %v2455 = vld [vmem:[%s2444 + $0x50] sm:$0xff]
        %v2456 = vld [vmem:[%s2444 + $0x58] sm:$0xff]
        %v2457 = vld [vmem:[%s2444 + $0x60] sm:$0xff]
        %v2458 = vld [vmem:[%s2444 + $0x68] sm:$0xff]
        %v2459 = vld [vmem:[%s2444 + $0x70] sm:$0xff]
        %v2460 = vld [vmem:[%s2444 + $0x78] sm:$0xff]
        %v2461 = vrot.slane %v1907, 6
        %2463 = vmatprep.subr.mxu0 0.0
        %2464 = vmatpush1.msra.mxu0 %v2445
        %2465 = vmatprep.subr.mxu0 0.0
        %2466 = vmatpush1.msra.mxu0 %v2446
        %2467 = vmatprep.subr.mxu0 0.0
        %2468 = vmatpush1.msra.mxu0 %v2447
        %2469 = vmatprep.subr.mxu0 0.0
        %2470 = vmatpush1.msra.mxu0 %v2448
        %2471 = vmatprep.subr.mxu0 0.0
        %2472 = vmatpush1.msra.mxu0 %v2449
        %2473 = vmatprep.subr.mxu0 0.0
        %2474 = vmatpush1.msra.mxu0 %v2450
        %2475 = vmatprep.subr.mxu0 0.0
        %2476 = vmatpush1.msra.mxu0 %v2451
        %2477 = vmatprep.subr.mxu0 0.0
        %2478 = vmatpush1.msra.mxu0 %v2452
        %2479 = vmatprep.subr.mxu0 0.0
        %2480 = vmatpush1.msra.mxu0 %v2453
        %2481 = vmatprep.subr.mxu0 0.0
        %2482 = vmatpush1.msra.mxu0 %v2454
        %2483 = vmatprep.subr.mxu0 0.0
        %2484 = vmatpush1.msra.mxu0 %v2455
        %2485 = vmatprep.subr.mxu0 0.0
        %2486 = vmatpush1.msra.mxu0 %v2456
        %2487 = vmatprep.subr.mxu0 0.0
        %2488 = vmatpush1.msra.mxu0 %v2457
        %2489 = vmatprep.subr.mxu0 0.0
        %2490 = vmatpush1.msra.mxu0 %v2458
        %2491 = vmatprep.subr.mxu0 0.0
        %2492 = vmatpush1.msra.mxu0 %v2459
        %2493 = vmatprep.subr.mxu0 0.0
        %2494 = vmatpush1.msra.mxu0 %v2460
        %2495 = vmatprep.subr.mxu0 0.0
        %2496 = vmatpush1.msra.mxu0 0.0
        %2497 = vmatprep.subr.mxu0 0.0
        %2498 = vmatpush1.msra.mxu0 0.0
        %2499 = vmatprep.subr.mxu0 0.0
        %2500 = vmatpush1.msra.mxu0 0.0
        %2501 = vmatprep.subr.mxu0 0.0
        %2502 = vmatpush1.msra.mxu0 0.0
        %2503 = vmatprep.subr.mxu0 0.0
        %2504 = vmatpush1.msra.mxu0 0.0
        %2505 = vmatprep.subr.mxu0 0.0
        %2506 = vmatpush1.msra.mxu0 0.0
        %2507 = vmatprep.subr.mxu0 0.0
        %2508 = vmatpush1.msra.mxu0 0.0
        %2509 = vmatprep.subr.mxu0 0.0
        %2510 = vmatpush1.msra.mxu0 0.0
        %2511 = vmatprep.subr.mxu0 0.0
        %2512 = vmatpush1.msra.mxu0 0.0
        %2513 = vmatprep.subr.mxu0 0.0
        %2514 = vmatpush1.msra.mxu0 0.0
        %2515 = vmatprep.subr.mxu0 0.0
        %2516 = vmatpush1.msra.mxu0 0.0
        %2517 = vmatprep.subr.mxu0 0.0
        %2518 = vmatpush1.msra.mxu0 0.0
        %2519 = vmatprep.subr.mxu0 0.0
        %2520 = vmatpush1.msra.mxu0 0.0
        %2521 = vmatprep.subr.mxu0 0.0
        %2522 = vmatpush1.msra.mxu0 0.0
        %2523 = vmatprep.subr.mxu0 0.0
        %2524 = vmatpush1.msra.mxu0 0.0
        %2525 = vmatprep.subr.mxu0 0.0
        %2526 = vmatpush1.msra.mxu0 0.0
        %2527 = vmatprep.mubr.f32.mxu0 0.0
        %2528 = vmatmul.mubr.f32.gmra.mrb[0].mxu0 %v2461
        %v2529 = vpop.f32.mrb[0].mxu0
        %v2530 = vadd.f32 0.0, %v2529
        %v2531 = vpop.f32.mrb[0].mxu0
        %2532 = vdwg.mxu0
        %v2533 = vadd.f32 %v2443, %v2530
        %s2534 = scalar_lea.vmem %s9, 896
        %v2535 = vld [vmem:[%s2534] sm:$0xff]
        %v2536 = vld [vmem:[%s2534 + $0x8] sm:$0xff]
        %v2537 = vld [vmem:[%s2534 + $0x10] sm:$0xff]
        %v2538 = vld [vmem:[%s2534 + $0x18] sm:$0xff]
        %v2539 = vld [vmem:[%s2534 + $0x20] sm:$0xff]
        %v2540 = vld [vmem:[%s2534 + $0x28] sm:$0xff]
        %v2541 = vld [vmem:[%s2534 + $0x30] sm:$0xff]
        %v2542 = vld [vmem:[%s2534 + $0x38] sm:$0xff]
        %v2543 = vld [vmem:[%s2534 + $0x40] sm:$0xff]
        %v2544 = vld [vmem:[%s2534 + $0x48] sm:$0xff]
        %v2545 = vld [vmem:[%s2534 + $0x50] sm:$0xff]
        %v2546 = vld [vmem:[%s2534 + $0x58] sm:$0xff]
        %v2547 = vld [vmem:[%s2534 + $0x60] sm:$0xff]
        %v2548 = vld [vmem:[%s2534 + $0x68] sm:$0xff]
        %v2549 = vld [vmem:[%s2534 + $0x70] sm:$0xff]
        %v2550 = vld [vmem:[%s2534 + $0x78] sm:$0xff]
        %v2551 = vrot.slane %v1907, 7
        %2553 = vmatprep.subr.mxu0 0.0
        %2554 = vmatpush1.msra.mxu0 %v2535
        %2555 = vmatprep.subr.mxu0 0.0
        %2556 = vmatpush1.msra.mxu0 %v2536
        %2557 = vmatprep.subr.mxu0 0.0
        %2558 = vmatpush1.msra.mxu0 %v2537
        %2559 = vmatprep.subr.mxu0 0.0
        %2560 = vmatpush1.msra.mxu0 %v2538
        %2561 = vmatprep.subr.mxu0 0.0
        %2562 = vmatpush1.msra.mxu0 %v2539
        %2563 = vmatprep.subr.mxu0 0.0
        %2564 = vmatpush1.msra.mxu0 %v2540
        %2565 = vmatprep.subr.mxu0 0.0
        %2566 = vmatpush1.msra.mxu0 %v2541
        %2567 = vmatprep.subr.mxu0 0.0
        %2568 = vmatpush1.msra.mxu0 %v2542
        %2569 = vmatprep.subr.mxu0 0.0
        %2570 = vmatpush1.msra.mxu0 %v2543
        %2571 = vmatprep.subr.mxu0 0.0
        %2572 = vmatpush1.msra.mxu0 %v2544
        %2573 = vmatprep.subr.mxu0 0.0
        %2574 = vmatpush1.msra.mxu0 %v2545
        %2575 = vmatprep.subr.mxu0 0.0
        %2576 = vmatpush1.msra.mxu0 %v2546
        %2577 = vmatprep.subr.mxu0 0.0
        %2578 = vmatpush1.msra.mxu0 %v2547
        %2579 = vmatprep.subr.mxu0 0.0
        %2580 = vmatpush1.msra.mxu0 %v2548
        %2581 = vmatprep.subr.mxu0 0.0
        %2582 = vmatpush1.msra.mxu0 %v2549
        %2583 = vmatprep.subr.mxu0 0.0
        %2584 = vmatpush1.msra.mxu0 %v2550
        %2585 = vmatprep.subr.mxu0 0.0
        %2586 = vmatpush1.msra.mxu0 0.0
        %2587 = vmatprep.subr.mxu0 0.0
        %2588 = vmatpush1.msra.mxu0 0.0
        %2589 = vmatprep.subr.mxu0 0.0
        %2590 = vmatpush1.msra.mxu0 0.0
        %2591 = vmatprep.subr.mxu0 0.0
        %2592 = vmatpush1.msra.mxu0 0.0
        %2593 = vmatprep.subr.mxu0 0.0
        %2594 = vmatpush1.msra.mxu0 0.0
        %2595 = vmatprep.subr.mxu0 0.0
        %2596 = vmatpush1.msra.mxu0 0.0
        %2597 = vmatprep.subr.mxu0 0.0
        %2598 = vmatpush1.msra.mxu0 0.0
        %2599 = vmatprep.subr.mxu0 0.0
        %2600 = vmatpush1.msra.mxu0 0.0
        %2601 = vmatprep.subr.mxu0 0.0
        %2602 = vmatpush1.msra.mxu0 0.0
        %2603 = vmatprep.subr.mxu0 0.0
        %2604 = vmatpush1.msra.mxu0 0.0
        %2605 = vmatprep.subr.mxu0 0.0
        %2606 = vmatpush1.msra.mxu0 0.0
        %2607 = vmatprep.subr.mxu0 0.0
        %2608 = vmatpush1.msra.mxu0 0.0
        %2609 = vmatprep.subr.mxu0 0.0
        %2610 = vmatpush1.msra.mxu0 0.0
        %2611 = vmatprep.subr.mxu0 0.0
        %2612 = vmatpush1.msra.mxu0 0.0
        %2613 = vmatprep.subr.mxu0 0.0
        %2614 = vmatpush1.msra.mxu0 0.0
        %2615 = vmatprep.subr.mxu0 0.0
        %2616 = vmatpush1.msra.mxu0 0.0
        %2617 = vmatprep.mubr.f32.mxu0 0.0
        %2618 = vmatmul.mubr.f32.gmra.mrb[0].mxu0 %v2551
        %v2619 = vpop.f32.mrb[0].mxu0
        %v2620 = vadd.f32 0.0, %v2619
        %v2621 = vpop.f32.mrb[0].mxu0
        %2622 = vdwg.mxu0
        %v2623 = vadd.f32 %v2533, %v2620
        %v2624 = vld [vmem:[%s10] sm:$0x1]
        %v2625 = vadd.f32 %v2623, %v2624
        %v2626 = vmax.f32 %v2625, 0.0
        %v2627 = vld [vmem:[%s11] sm:$0xff]
        %v2628 = vld [vmem:[%s11 + $0x8] sm:$0xff]
        %v2629 = vld [vmem:[%s11 + $0x10] sm:$0xff]
        %v2630 = vld [vmem:[%s11 + $0x18] sm:$0xff]
        %v2631 = vld [vmem:[%s11 + $0x20] sm:$0xff]
        %v2632 = vld [vmem:[%s11 + $0x28] sm:$0xff]
        %v2633 = vld [vmem:[%s11 + $0x30] sm:$0xff]
        %v2634 = vld [vmem:[%s11 + $0x38] sm:$0xff]
        %v2635 = vld [vmem:[%s11 + $0x40] sm:$0xff]
        %v2636 = vld [vmem:[%s11 + $0x48] sm:$0xff]
        %v2637 = vld [vmem:[%s11 + $0x50] sm:$0xff]
        %v2638 = vld [vmem:[%s11 + $0x58] sm:$0xff]
        %v2639 = vld [vmem:[%s11 + $0x60] sm:$0xff]
        %v2640 = vld [vmem:[%s11 + $0x68] sm:$0xff]
        %v2641 = vld [vmem:[%s11 + $0x70] sm:$0xff]
        %v2642 = vld [vmem:[%s12] sm:$0x1]
        %vm2643 = vcmask 982016
        %v2645 = vsel %vm2643, %v2626, 0
        %2647 = vmatprep.subr.mxu0 0.0
        %2648 = vmatpush1.msra.mxu0 %v2627
        %2649 = vmatprep.subr.mxu0 0.0
        %2650 = vmatpush1.msra.mxu0 %v2628
        %2651 = vmatprep.subr.mxu0 0.0
        %2652 = vmatpush1.msra.mxu0 %v2629
        %2653 = vmatprep.subr.mxu0 0.0
        %2654 = vmatpush1.msra.mxu0 %v2630
        %2655 = vmatprep.subr.mxu0 0.0
        %2656 = vmatpush1.msra.mxu0 %v2631
        %2657 = vmatprep.subr.mxu0 0.0
        %2658 = vmatpush1.msra.mxu0 %v2632
        %2659 = vmatprep.subr.mxu0 0.0
        %2660 = vmatpush1.msra.mxu0 %v2633
        %2661 = vmatprep.subr.mxu0 0.0
        %2662 = vmatpush1.msra.mxu0 %v2634
        %2663 = vmatprep.subr.mxu0 0.0
        %2664 = vmatpush1.msra.mxu0 %v2635
        %2665 = vmatprep.subr.mxu0 0.0
        %2666 = vmatpush1.msra.mxu0 %v2636
        %2667 = vmatprep.subr.mxu0 0.0
        %2668 = vmatpush1.msra.mxu0 %v2637
        %2669 = vmatprep.subr.mxu0 0.0
        %2670 = vmatpush1.msra.mxu0 %v2638
        %2671 = vmatprep.subr.mxu0 0.0
        %2672 = vmatpush1.msra.mxu0 %v2639
        %2673 = vmatprep.subr.mxu0 0.0
        %2674 = vmatpush1.msra.mxu0 %v2640
        %2675 = vmatprep.subr.mxu0 0.0
        %2676 = vmatpush1.msra.mxu0 %v2641
        %2677 = vmatprep.subr.mxu0 0.0
        %2678 = vmatpush1.msra.mxu0 0.0
        %2679 = vmatprep.subr.mxu0 0.0
        %2680 = vmatpush1.msra.mxu0 0.0
        %2681 = vmatprep.subr.mxu0 0.0
        %2682 = vmatpush1.msra.mxu0 0.0
        %2683 = vmatprep.subr.mxu0 0.0
        %2684 = vmatpush1.msra.mxu0 0.0
        %2685 = vmatprep.subr.mxu0 0.0
        %2686 = vmatpush1.msra.mxu0 0.0
        %2687 = vmatprep.subr.mxu0 0.0
        %2688 = vmatpush1.msra.mxu0 0.0
        %2689 = vmatprep.subr.mxu0 0.0
        %2690 = vmatpush1.msra.mxu0 0.0
        %2691 = vmatprep.subr.mxu0 0.0
        %2692 = vmatpush1.msra.mxu0 0.0
        %2693 = vmatprep.subr.mxu0 0.0
        %2694 = vmatpush1.msra.mxu0 0.0
        %2695 = vmatprep.subr.mxu0 0.0
        %2696 = vmatpush1.msra.mxu0 0.0
        %2697 = vmatprep.subr.mxu0 0.0
        %2698 = vmatpush1.msra.mxu0 0.0
        %2699 = vmatprep.subr.mxu0 0.0
        %2700 = vmatpush1.msra.mxu0 0.0
        %2701 = vmatprep.subr.mxu0 0.0
        %2702 = vmatpush1.msra.mxu0 0.0
        %2703 = vmatprep.subr.mxu0 0.0
        %2704 = vmatpush1.msra.mxu0 0.0
        %2705 = vmatprep.subr.mxu0 0.0
        %2706 = vmatpush1.msra.mxu0 0.0
        %2707 = vmatprep.subr.mxu0 0.0
        %2708 = vmatpush1.msra.mxu0 0.0
        %2709 = vmatprep.subr.mxu0 0.0
        %2710 = vmatpush1.msra.mxu0 0.0
        %2711 = vmatprep.mubr.f32.mxu0 0.0
        %2712 = vmatmul.mubr.f32.gmra.mrb[0].mxu0 %v2645
        %v2713 = vpop.f32.mrb[0].mxu0
        %v2714 = vadd.f32 %v2642, %v2713
        %v2715 = vpop.f32.mrb[0].mxu0
        %2716 = vdwg.mxu0
        %v2717 = vmax.f32 %v2714, 0.0
        %v2718 = vld [vmem:[%s13] sm:$0xff]
        %v2719 = vld [vmem:[%s13 + $0x8] sm:$0xff]
        %v2720 = vld [vmem:[%s13 + $0x10] sm:$0xff]
        %v2721 = vld [vmem:[%s13 + $0x18] sm:$0xff]
        %v2722 = vld [vmem:[%s13 + $0x20] sm:$0xff]
        %v2723 = vld [vmem:[%s13 + $0x28] sm:$0xff]
        %v2724 = vld [vmem:[%s13 + $0x30] sm:$0xff]
        %v2725 = vld [vmem:[%s13 + $0x38] sm:$0xff]
        %v2726 = vld [vmem:[%s13 + $0x40] sm:$0xff]
        %v2727 = vld [vmem:[%s13 + $0x48] sm:$0xff]
        %v2728 = vld [vmem:[%s13 + $0x50] sm:$0xf]
        %v2729 = vld [vmem:[%s14] sm:$0x1]
        %vm2730 = vcmask 687104
        %v2732 = vsel %vm2730, %v2717, 0
        %v2735 = vsel %vm532, %v2728, 0
        %2737 = vmatprep.subr.mxu0 0.0
        %2738 = vmatpush1.msra.mxu0 %v2718
        %2739 = vmatprep.subr.mxu0 0.0
        %2740 = vmatpush1.msra.mxu0 %v2719
        %2741 = vmatprep.subr.mxu0 0.0
        %2742 = vmatpush1.msra.mxu0 %v2720
        %2743 = vmatprep.subr.mxu0 0.0
        %2744 = vmatpush1.msra.mxu0 %v2721
        %2745 = vmatprep.subr.mxu0 0.0
        %2746 = vmatpush1.msra.mxu0 %v2722
        %2747 = vmatprep.subr.mxu0 0.0
        %2748 = vmatpush1.msra.mxu0 %v2723
        %2749 = vmatprep.subr.mxu0 0.0
        %2750 = vmatpush1.msra.mxu0 %v2724
        %2751 = vmatprep.subr.mxu0 0.0
        %2752 = vmatpush1.msra.mxu0 %v2725
        %2753 = vmatprep.subr.mxu0 0.0
        %2754 = vmatpush1.msra.mxu0 %v2726
        %2755 = vmatprep.subr.mxu0 0.0
        %2756 = vmatpush1.msra.mxu0 %v2727
        %2757 = vmatprep.subr.mxu0 0.0
        %2758 = vmatpush1.msra.mxu0 %v2735
        %2759 = vmatprep.subr.mxu0 0.0
        %2760 = vmatpush1.msra.mxu0 0.0
        %2761 = vmatprep.subr.mxu0 0.0
        %2762 = vmatpush1.msra.mxu0 0.0
        %2763 = vmatprep.subr.mxu0 0.0
        %2764 = vmatpush1.msra.mxu0 0.0
        %2765 = vmatprep.subr.mxu0 0.0
        %2766 = vmatpush1.msra.mxu0 0.0
        %2767 = vmatprep.subr.mxu0 0.0
        %2768 = vmatpush1.msra.mxu0 0.0
        %2769 = vmatprep.subr.mxu0 0.0
        %2770 = vmatpush1.msra.mxu0 0.0
        %2771 = vmatprep.subr.mxu0 0.0
        %2772 = vmatpush1.msra.mxu0 0.0
        %2773 = vmatprep.subr.mxu0 0.0
        %2774 = vmatpush1.msra.mxu0 0.0
        %2775 = vmatprep.subr.mxu0 0.0
        %2776 = vmatpush1.msra.mxu0 0.0
        %2777 = vmatprep.subr.mxu0 0.0
        %2778 = vmatpush1.msra.mxu0 0.0
        %2779 = vmatprep.subr.mxu0 0.0
        %2780 = vmatpush1.msra.mxu0 0.0
        %2781 = vmatprep.subr.mxu0 0.0
        %2782 = vmatpush1.msra.mxu0 0.0
        %2783 = vmatprep.subr.mxu0 0.0
        %2784 = vmatpush1.msra.mxu0 0.0
        %2785 = vmatprep.subr.mxu0 0.0
        %2786 = vmatpush1.msra.mxu0 0.0
        %2787 = vmatprep.subr.mxu0 0.0
        %2788 = vmatpush1.msra.mxu0 0.0
        %2789 = vmatprep.subr.mxu0 0.0
        %2790 = vmatpush1.msra.mxu0 0.0
        %2791 = vmatprep.subr.mxu0 0.0
        %2792 = vmatpush1.msra.mxu0 0.0
        %2793 = vmatprep.subr.mxu0 0.0
        %2794 = vmatpush1.msra.mxu0 0.0
        %2795 = vmatprep.subr.mxu0 0.0
        %2796 = vmatpush1.msra.mxu0 0.0
        %2797 = vmatprep.subr.mxu0 0.0
        %2798 = vmatpush1.msra.mxu0 0.0
        %2799 = vmatprep.subr.mxu0 0.0
        %2800 = vmatpush1.msra.mxu0 0.0
        %2801 = vmatprep.mubr.f32.mxu0 0.0
        %2802 = vmatmul.mubr.f32.gmra.mrb[0].mxu0 %v2732
        %v2803 = vpop.f32.mrb[0].mxu0
        %v2804 = vadd.f32 %v2729, %v2803
        %v2805 = vpop.f32.mrb[0].mxu0
        %2806 = vdwg.mxu0
        %vm2807 = vcmask 73728
        %2808 = vst.msk [vmem:[%s486] sm:$0x1] %vm2807, %v2804
        %s2809 = sand.u32 %s357, 1
        %s2810 = scalar_lea.sflag [#allocation3], %s2809
        %s2811 = sand.u32 %s357, 1
        %s2812 = scalar_lea.vmem [#allocation2], %s2811
        // Predicated region
        $region81: #{target_net_forward.1} parent=79 // pred_check
          %p2813 = pneg %p367
        $region82: #{target_net_forward.1} parent=79 // pred_check_branch
          %2815 = sbr.rel (%p2813) target = $region84
        $region83: #{target_net_forward.1} parent=79 // pred_region
          %s2817 = ssub.s32 16, 16
          %2818 = vsyncadd %s2810, %s2817
          %s2819 = smul.addr %s29, 16
          %s2820 = scalar_lea.hbm %s15, %s2819
          %s2822 = sshll.u32 %s2812, 4
          %s2823 = int_to_ptr.vmem [resolvable:$true] %s2822
          %2825 = dma.vmem_to_hbm [thread:$0]  %s2823, 16, %s2820, %s2810
        $region84: #{target_net_forward.1} parent=79 // pred_fallthru
          _
      $region80: #{target_net_forward.1} parent=5 // pred_fallthru
        _
      %p2826 = scmp.le.s32.totalorder 2, %s24
      // Predicated region
      $region85: #{target_net_forward.1} parent=5 // pred_check
        %p2827 = pneg %p2826
      $region86: #{target_net_forward.1} parent=5 // pred_check_branch
        %2829 = sbr.rel (%p2827) target = $region88
      $region87: #{target_net_forward.1} parent=5 // pred_region
        %s2830 = ssub.s32 %s24, 2
        // Predicated region
        $region89: #{target_net_forward.1} parent=87 // pred_check
          %p2831 = pneg %p373
        $region90: #{target_net_forward.1} parent=87 // pred_check_branch
          %2833 = sbr.rel (%p2831) target = $region92
        $region91: #{target_net_forward.1} parent=87 // pred_region
          %s2834 = sand.u32 %s358, 1
          %s2835 = scalar_lea.sflag [#allocation3], %s2834
          %s2836 = sand.u32 %s358, 1
          %s2837 = scalar_lea.vmem [#allocation2], %s2836
          %2838 = dma.done %s2835, 16
        $region92: #{target_net_forward.1} parent=87 // pred_fallthru
          _
      $region88: #{target_net_forward.1} parent=5 // pred_fallthru
        _
    $region6: #{target_net_forward.1} parent=1 // loop_footer
      %s28 = sadd.s32 1, %s24
    $region7: #{target_net_forward.1} parent=1 // loop_footer_branch
      %23 = sbr.rel target = $region3
    $region8: #{target_net_forward.1} parent=1 // loop_exit
      _
    %2839 = vsyncpa [#allocation3], 1
    %s2840 = scalar_lea.sflag [#allocation3], 1
    %2841 = vsyncpa %s2840, 1

</llo_original>
